<compile_context>
chip_gen: v7x
topology: tpu7x:2x2x1
jax: 0.10.0
libtpu: 0.0.40
codegen_flags: <defaults>
</compile_context>

<pallas_src>
import functools

import jax
import jax.numpy as jnp
from jax.experimental import pallas as pl
from jax.experimental.pallas import tpu as pltpu


def _cbam_kernel(x_ref, fcw_ref, fcb_ref, mask_ref, saw_ref, out_ref, *, H, W, ksize, bt):
    # x_ref   : (bt, C, HW)   batch block; channels on sublanes, flat spatial on lanes
    # fcw_ref : (C, C)        1x1-conv weight, (C_out, C_in) as in PyTorch
    # fcb_ref : (C, 1)        1x1-conv bias (sublane-aligned)
    # mask_ref: (k*k, HW)     per-tap validity mask (1.0 inside image, 0.0 outside)
    # saw_ref : (2, k*k)      SMEM; row 0 -> weights for the mean map, row 1 -> max map
    # out_ref : (bt, C, HW)
    HW = H * W
    pad = (ksize - 1) // 2

    x = x_ref[...].astype(jnp.float32)                                  # (bt, C, HW)

    # ---------------- channel attention (one MXU matvec for the whole block) ----------------
    pooled_cols = [jnp.mean(x[b], axis=-1, keepdims=True) for b in range(bt)]   # bt x (C, 1)
    pooled = jnp.concatenate(pooled_cols, axis=1)                        # (C, bt)
    z = jnp.dot(fcw_ref[...].astype(jnp.float32), pooled,
                preferred_element_type=jnp.float32)                      # (C, bt)
    z = z + fcb_ref[...].astype(jnp.float32)                             # + (C, 1) broadcast
    ch_scale = jax.nn.sigmoid(z)                                         # (C, bt), on sublanes

    # Channel-attended slabs and stacked spatial maps (avg rows then max rows).
    ys = [x[b] * ch_scale[:, b:b + 1] for b in range(bt)]                # bt x (C, HW)
    maps = ([jnp.mean(yb, axis=0, keepdims=True) for yb in ys]
            + [jnp.max(yb, axis=0, keepdims=True) for yb in ys])
    stacked = jnp.concatenate(maps, axis=0)                              # (2*bt, HW)

    # ---------------- spatial attention: k x k conv via lane rolls + masks ----------------
    acc = jnp.zeros((bt, HW), jnp.float32)
    for ky in range(ksize):
        dy = ky - pad
        for kx in range(ksize):
            dx = kx - pad
            s = dy * W + dx                                              # flat tap offset
            idx = ky * ksize + kx
            # shifted[l] == stacked[(l + s) % HW]; wrapped / out-of-image taps are
            # killed by the precomputed per-tap mask.
            shifted = stacked if s == 0 else pltpu.roll(stacked, (-s) % HW, 1)
            wa = saw_ref[0, idx]                                         # scalar (SMEM)
            wm = saw_ref[1, idx]                                         # scalar (SMEM)
            term = wa * shifted[:bt] + wm * shifted[bt:]                 # (bt, HW)
            acc = acc + term * mask_ref[idx:idx + 1, :]
    sp_scale = jax.nn.sigmoid(acc)                                       # (bt, HW)

    for b in range(bt):
        out_ref[b] = (ys[b] * sp_scale[b:b + 1]).astype(out_ref.dtype)   # lane-dense store


def _pick_batch_block(B, C, HW):
    """Largest divisor of B (<= 8) whose f32 working slab stays small; prefer >=2
    grid steps (v7x dual TC) unless that drops spatial sublane occupancy below 8."""
    budget = 2 * 2 ** 20                       # bytes for one (Bt, C, HW) f32 slab
    cands = [bt for bt in range(1, min(B, 8) + 1)
             if B % bt == 0 and bt * C * HW * 4 <= budget]
    if not cands:
        return 1
    bt = max(cands)
    if B // bt < 2:
        multi = [c for c in cands if B // c >= 2 and 2 * c >= 8]
        if multi:
            bt = max(multi)
    return bt


def cbam(x, fc_weight, fc_bias, sa_weight):
    """CBAM forward.

    x: (B, C, H, W); fc_weight: (C, C) [1x1 conv weight, (out, in)]; fc_bias: (C,);
    sa_weight: (1, 2, k, k) or (2, k, k) [kxk conv weight, no bias].
    Returns (B, C, H, W), same dtype as x.
    """
    B, C, H, W = x.shape
    HW = H * W
    if sa_weight.ndim == 4:
        sa_weight = sa_weight[0]                                         # (2, k, k)
    ksize = sa_weight.shape[-1]
    pad = (ksize - 1) // 2

    bt = _pick_batch_block(B, C, HW)
    nb = B // bt

    # Wrapper-side layout plumbing (cheap / contiguous).
    x2 = x.reshape(B, C, HW)
    fcw = fc_weight.astype(jnp.float32)                                  # (C_out, C_in)
    fcb = fc_bias.reshape(C, 1).astype(jnp.float32)
    saw = sa_weight.reshape(2, ksize * ksize).astype(jnp.float32)

    # Per-tap validity masks (grid-invariant, DMA'd once and resident).
    hh = jnp.arange(H)
    ww = jnp.arange(W)
    rows = []
    for ky in range(ksize):
        dy = ky - pad
        row_ok = (hh + dy >= 0) & (hh + dy < H)                          # (H,)
        for kx in range(ksize):
            dx = kx - pad
            col_ok = (ww + dx >= 0) & (ww + dx < W)                      # (W,)
            rows.append((row_ok[:, None] & col_ok[None, :]).reshape(HW))
    tap_mask = jnp.stack(rows).astype(jnp.float32)                       # (k*k, HW)

    kernel = functools.partial(_cbam_kernel, H=H, W=W, ksize=ksize, bt=bt)

    itemsize = jnp.dtype(x.dtype).itemsize
    block_f32 = bt * C * HW * 4
    vmem_limit = int(min(48 * 2 ** 20,
                         max(16 * 2 ** 20,
                             10 * block_f32 + 2 * tap_mask.size * 4 + 2 * 2 ** 20)))
    cost = pl.CostEstimate(
        flops=int(B * (2 * C * C + 6 * C * HW + 4 * ksize * ksize * HW)),
        transcendentals=int(B * (C + HW)),
        bytes_accessed=int(2 * B * C * HW * itemsize))

    out2 = pl.pallas_call(
        kernel,
        out_shape=jax.ShapeDtypeStruct((B, C, HW), x.dtype),
        grid_spec=pltpu.PrefetchScalarGridSpec(
            num_scalar_prefetch=0,
            grid=(nb,),
            in_specs=[
                pl.BlockSpec((bt, C, HW), lambda i: (i, 0, 0)),           # x, lane-dense
                pl.BlockSpec((C, C), lambda i: (0, 0)),                   # fc weight (out, in)
                pl.BlockSpec((C, 1), lambda i: (0, 0)),                   # fc bias (sublanes)
                pl.BlockSpec((ksize * ksize, HW), lambda i: (0, 0)),      # per-tap masks
                pl.BlockSpec(memory_space=pltpu.MemorySpace.SMEM),        # tap weights (scalars)
            ],
            out_specs=pl.BlockSpec((bt, C, HW), lambda i: (i, 0, 0)),
        ),
        compiler_params=pltpu.CompilerParams(
            dimension_semantics=("parallel",),
            vmem_limit_bytes=vmem_limit),
        cost_estimate=cost,
    )(x2, fcw, fcb, tap_mask, saw)

    return out2.reshape(B, C, H, W)


if __name__ == "__main__":
    B, C, H, W = 2, 4, 16, 16
    ksize = 7

    key = jax.random.PRNGKey(0)
    k_x, k_w, k_b, k_s = jax.random.split(key, 4)

    x = jax.random.normal(k_x, (B, C, H, W), dtype=jnp.float32)
    # Conv2d(C, C, 1) init scale ~ 1/sqrt(C); Conv2d(2, 1, k) ~ 1/sqrt(2*k*k)
    fc_w = jax.random.uniform(k_w, (C, C), jnp.float32, -0.5, 0.5)
    fc_b = jax.random.uniform(k_b, (C,), jnp.float32, -0.5, 0.5)
    sb = 1.0 / (2 * ksize * ksize) ** 0.5
    sa_w = jax.random.uniform(k_s, (1, 2, ksize, ksize), jnp.float32, -sb, sb)

    out = cbam(x, fc_w, fc_b, sa_w)
    out = jax.block_until_ready(out)

    # Pure-JAX reference (matches the PyTorch module).
    pooled = jnp.mean(x, axis=(2, 3), keepdims=True)                     # (B,C,1,1)
    z = jnp.einsum('oi,bi->bo', fc_w, pooled[:, :, 0, 0]) + fc_b         # (B,C)
    ca = x * jax.nn.sigmoid(z)[:, :, None, None]                         # channel attention
    sp_in = jnp.concatenate([jnp.mean(ca, axis=1, keepdims=True),
                             jnp.max(ca, axis=1, keepdims=True)], axis=1)
    p = (ksize - 1) // 2
    conv = jax.lax.conv_general_dilated(
        sp_in, sa_w, window_strides=(1, 1), padding=((p, p), (p, p)),
        dimension_numbers=('NCHW', 'OIHW', 'NCHW'))                      # (B,1,H,W)
    ref = ca * jax.nn.sigmoid(conv)                                      # spatial attention

    assert out.shape == (B, C, H, W)
    assert jnp.allclose(out, ref, atol=1e-4, rtol=1e-4), "mismatch vs reference"

    print("KERNEL_OK")
</pallas_src>

<mosaic_0001>
module attributes {stable_mosaic.version = 11 : i64} {
  func.func @_cbam_kernel(%arg0: i32, %arg1: memref<2x4x256xf32, #tpu.memory_space<vmem>>, %arg2: memref<4x4xf32, #tpu.memory_space<vmem>>, %arg3: memref<4x1xf32, #tpu.memory_space<vmem>>, %arg4: memref<49x256xf32, #tpu.memory_space<vmem>>, %arg5: memref<2x49xf32, #tpu.memory_space<smem>>, %arg6: memref<2x4x256xf32, #tpu.memory_space<vmem>>) attributes {dimension_semantics = [#tpu.dimension_semantics<parallel>], iteration_bounds = array<i64: 1>, scalar_prefetch = 0 : i64, scratch_operands = 0 : i64, tpu.core_type = #tpu.core_type<tc>, window_params = [{transform_indices = @transform_0, window_bounds = array<i64: 2, 4, 256>}, {pipeline_mode = #tpu.pipeline_mode<synchronous>, transform_indices = @transform_1, window_bounds = array<i64: 4, 4>}, {pipeline_mode = #tpu.pipeline_mode<synchronous>, transform_indices = @transform_2, window_bounds = array<i64: 4, 1>}, {pipeline_mode = #tpu.pipeline_mode<synchronous>, transform_indices = @transform_3, window_bounds = array<i64: 49, 256>}, {transform_indices = @transform_4, window_bounds = array<i64: 2, 49>}, {transform_indices = @transform_5, window_bounds = array<i64: 2, 4, 256>}]} {
    %c0 = arith.constant 0 : index
    %c0_0 = arith.constant 0 : index
    %c0_1 = arith.constant 0 : index
    %0 = vector.load %arg1[%c0, %c0_0, %c0_1] : memref<2x4x256xf32, #tpu.memory_space<vmem>>, vector<2x4x256xf32>
    %1 = vector.extract_strided_slice %0 {offsets = [0, 0, 0], sizes = [1, 4, 256], strides = [1, 1, 1]} : vector<2x4x256xf32> to vector<1x4x256xf32>
    %2 = vector.shape_cast %1 : vector<1x4x256xf32> to vector<4x256xf32>
    %cst = arith.constant dense<0.000000e+00> : vector<4xf32>
    %3 = vector.multi_reduction <add>, %2, %cst [1] : vector<4x256xf32> to vector<4xf32>
    %4 = vector.shape_cast %3 : vector<4xf32> to vector<4x1xf32>
    %cst_2 = arith.constant 2.560000e+02 : f32
    %5 = vector.broadcast %cst_2 : f32 to vector<4x1xf32>
    %6 = arith.divf %4, %5 : vector<4x1xf32>
    %7 = vector.extract_strided_slice %0 {offsets = [1, 0, 0], sizes = [1, 4, 256], strides = [1, 1, 1]} : vector<2x4x256xf32> to vector<1x4x256xf32>
    %8 = vector.shape_cast %7 : vector<1x4x256xf32> to vector<4x256xf32>
    %cst_3 = arith.constant dense<0.000000e+00> : vector<4xf32>
    %9 = vector.multi_reduction <add>, %8, %cst_3 [1] : vector<4x256xf32> to vector<4xf32>
    %10 = vector.shape_cast %9 : vector<4xf32> to vector<4x1xf32>
    %cst_4 = arith.constant 2.560000e+02 : f32
    %11 = vector.broadcast %cst_4 : f32 to vector<4x1xf32>
    %12 = arith.divf %10, %11 : vector<4x1xf32>
    %13 = tpu.concatenate %6, %12 in 1 : vector<4x1xf32>, vector<4x1xf32> -> vector<4x2xf32>
    %c0_5 = arith.constant 0 : index
    %c0_6 = arith.constant 0 : index
    %14 = vector.load %arg2[%c0_5, %c0_6] : memref<4x4xf32, #tpu.memory_space<vmem>>, vector<4x4xf32>
    %cst_7 = arith.constant dense<0.000000e+00> : vector<4x2xf32>
    %15 = tpu.matmul %14, %13, %cst_7 {dimension_numbers = #tpu.dot_dimension_numbers<[1], [0], [0], [1], [0, 0, 1, 1], [], []>} : vector<4x4xf32>, vector<4x2xf32>, vector<4x2xf32> -> vector<4x2xf32>
    %c0_8 = arith.constant 0 : index
    %c0_9 = arith.constant 0 : index
    %16 = vector.load %arg3[%c0_8, %c0_9] : memref<4x1xf32, #tpu.memory_space<vmem>>, vector<4x1xf32>
    %17 = vector.broadcast %16 : vector<4x1xf32> to vector<4x2xf32>
    %18 = arith.addf %15, %17 : vector<4x2xf32>
    %19 = arith.negf %18 : vector<4x2xf32>
    %20 = math.exp %19 : vector<4x2xf32>
    %cst_10 = arith.constant 1.000000e+00 : f32
    %21 = vector.broadcast %cst_10 : f32 to vector<4x2xf32>
    %22 = arith.addf %21, %20 : vector<4x2xf32>
    %23 = arith.divf %21, %22 : vector<4x2xf32>
    %24 = vector.extract_strided_slice %0 {offsets = [0, 0, 0], sizes = [1, 4, 256], strides = [1, 1, 1]} : vector<2x4x256xf32> to vector<1x4x256xf32>
    %25 = vector.shape_cast %24 : vector<1x4x256xf32> to vector<4x256xf32>
    %26 = vector.extract_strided_slice %23 {offsets = [0, 0], sizes = [4, 1], strides = [1, 1]} : vector<4x2xf32> to vector<4x1xf32>
    %27 = vector.broadcast %26 : vector<4x1xf32> to vector<4x256xf32>
    %28 = arith.mulf %25, %27 : vector<4x256xf32>
    %29 = vector.extract_strided_slice %0 {offsets = [1, 0, 0], sizes = [1, 4, 256], strides = [1, 1, 1]} : vector<2x4x256xf32> to vector<1x4x256xf32>
    %30 = vector.shape_cast %29 : vector<1x4x256xf32> to vector<4x256xf32>
    %31 = vector.extract_strided_slice %23 {offsets = [0, 1], sizes = [4, 1], strides = [1, 1]} : vector<4x2xf32> to vector<4x1xf32>
    %32 = vector.broadcast %31 : vector<4x1xf32> to vector<4x256xf32>
    %33 = arith.mulf %30, %32 : vector<4x256xf32>
    %cst_11 = arith.constant dense<0.000000e+00> : vector<256xf32>
    %34 = vector.multi_reduction <add>, %28, %cst_11 [0] : vector<4x256xf32> to vector<256xf32>
    %35 = vector.shape_cast %34 : vector<256xf32> to vector<1x256xf32>
    %cst_12 = arith.constant 4.000000e+00 : f32
    %36 = vector.broadcast %cst_12 : f32 to vector<1x256xf32>
    %37 = arith.divf %35, %36 : vector<1x256xf32>
    %cst_13 = arith.constant dense<0.000000e+00> : vector<256xf32>
    %38 = vector.multi_reduction <add>, %33, %cst_13 [0] : vector<4x256xf32> to vector<256xf32>
    %39 = vector.shape_cast %38 : vector<256xf32> to vector<1x256xf32>
    %cst_14 = arith.constant 4.000000e+00 : f32
    %40 = vector.broadcast %cst_14 : f32 to vector<1x256xf32>
    %41 = arith.divf %39, %40 : vector<1x256xf32>
    %cst_15 = arith.constant dense<0xFF800000> : vector<256xf32>
    %42 = vector.multi_reduction <maximumf>, %28, %cst_15 [0] : vector<4x256xf32> to vector<256xf32>
    %43 = vector.shape_cast %42 : vector<256xf32> to vector<1x256xf32>
    %cst_16 = arith.constant dense<0xFF800000> : vector<256xf32>
    %44 = vector.multi_reduction <maximumf>, %33, %cst_16 [0] : vector<4x256xf32> to vector<256xf32>
    %45 = vector.shape_cast %44 : vector<256xf32> to vector<1x256xf32>
    %46 = tpu.concatenate %37, %41, %43, %45 in 0 : vector<1x256xf32>, vector<1x256xf32>, vector<1x256xf32>, vector<1x256xf32> -> vector<4x256xf32>
    %cst_17 = arith.constant 0.000000e+00 : f32
    %47 = vector.broadcast %cst_17 : f32 to vector<2x256xf32>
    %c51_i32 = arith.constant 51 : i32
    %48 = tpu.dynamic_rotate %46 by %c51_i32 dim 1 : vector<4x256xf32>, i32 -> vector<4x256xf32>
    %c0_18 = arith.constant 0 : index
    %c0_19 = arith.constant 0 : index
    %49 = memref.load %arg5[%c0_18, %c0_19] : memref<2x49xf32, #tpu.memory_space<smem>>
    %c1 = arith.constant 1 : index
    %c0_20 = arith.constant 0 : index
    %50 = memref.load %arg5[%c1, %c0_20] : memref<2x49xf32, #tpu.memory_space<smem>>
    %51 = vector.extract_strided_slice %48 {offsets = [0, 0], sizes = [2, 256], strides = [1, 1]} : vector<4x256xf32> to vector<2x256xf32>
    %52 = vector.broadcast %49 : f32 to vector<2x256xf32>
    %53 = arith.mulf %52, %51 : vector<2x256xf32>
    %54 = vector.extract_strided_slice %48 {offsets = [2, 0], sizes = [2, 256], strides = [1, 1]} : vector<4x256xf32> to vector<2x256xf32>
    %55 = vector.broadcast %50 : f32 to vector<2x256xf32>
    %56 = arith.mulf %55, %54 : vector<2x256xf32>
    %57 = arith.addf %53, %56 : vector<2x256xf32>
    %c0_21 = arith.constant 0 : index
    %c0_22 = arith.constant 0 : index
    %58 = vector.load %arg4[%c0_21, %c0_22] : memref<49x256xf32, #tpu.memory_space<vmem>>, vector<1x256xf32>
    %59 = vector.broadcast %58 : vector<1x256xf32> to vector<2x256xf32>
    %60 = arith.mulf %57, %59 : vector<2x256xf32>
    %61 = arith.addf %47, %60 : vector<2x256xf32>
    %c50_i32 = arith.constant 50 : i32
    %62 = tpu.dynamic_rotate %46 by %c50_i32 dim 1 : vector<4x256xf32>, i32 -> vector<4x256xf32>
    %c0_23 = arith.constant 0 : index
    %c1_24 = arith.constant 1 : index
    %63 = memref.load %arg5[%c0_23, %c1_24] : memref<2x49xf32, #tpu.memory_space<smem>>
    %c1_25 = arith.constant 1 : index
    %c1_26 = arith.constant 1 : index
    %64 = memref.load %arg5[%c1_25, %c1_26] : memref<2x49xf32, #tpu.memory_space<smem>>
    %65 = vector.extract_strided_slice %62 {offsets = [0, 0], sizes = [2, 256], strides = [1, 1]} : vector<4x256xf32> to vector<2x256xf32>
    %66 = vector.broadcast %63 : f32 to vector<2x256xf32>
    %67 = arith.mulf %66, %65 : vector<2x256xf32>
    %68 = vector.extract_strided_slice %62 {offsets = [2, 0], sizes = [2, 256], strides = [1, 1]} : vector<4x256xf32> to vector<2x256xf32>
    %69 = vector.broadcast %64 : f32 to vector<2x256xf32>
    %70 = arith.mulf %69, %68 : vector<2x256xf32>
    %71 = arith.addf %67, %70 : vector<2x256xf32>
    %c1_27 = arith.constant 1 : index
    %c0_28 = arith.constant 0 : index
    %72 = vector.load %arg4[%c1_27, %c0_28] : memref<49x256xf32, #tpu.memory_space<vmem>>, vector<1x256xf32>
    %73 = vector.broadcast %72 : vector<1x256xf32> to vector<2x256xf32>
    %74 = arith.mulf %71, %73 : vector<2x256xf32>
    %75 = arith.addf %61, %74 : vector<2x256xf32>
    %c49_i32 = arith.constant 49 : i32
    %76 = tpu.dynamic_rotate %46 by %c49_i32 dim 1 : vector<4x256xf32>, i32 -> vector<4x256xf32>
    %c0_29 = arith.constant 0 : index
    %c2 = arith.constant 2 : index
    %77 = memref.load %arg5[%c0_29, %c2] : memref<2x49xf32, #tpu.memory_space<smem>>
    %c1_30 = arith.constant 1 : index
    %c2_31 = arith.constant 2 : index
    %78 = memref.load %arg5[%c1_30, %c2_31] : memref<2x49xf32, #tpu.memory_space<smem>>
    %79 = vector.extract_strided_slice %76 {offsets = [0, 0], sizes = [2, 256], strides = [1, 1]} : vector<4x256xf32> to vector<2x256xf32>
    %80 = vector.broadcast %77 : f32 to vector<2x256xf32>
    %81 = arith.mulf %80, %79 : vector<2x256xf32>
    %82 = vector.extract_strided_slice %76 {offsets = [2, 0], sizes = [2, 256], strides = [1, 1]} : vector<4x256xf32> to vector<2x256xf32>
    %83 = vector.broadcast %78 : f32 to vector<2x256xf32>
    %84 = arith.mulf %83, %82 : vector<2x256xf32>
    %85 = arith.addf %81, %84 : vector<2x256xf32>
    %c2_32 = arith.constant 2 : index
    %c0_33 = arith.constant 0 : index
    %86 = vector.load %arg4[%c2_32, %c0_33] : memref<49x256xf32, #tpu.memory_space<vmem>>, vector<1x256xf32>
    %87 = vector.broadcast %86 : vector<1x256xf32> to vector<2x256xf32>
    %88 = arith.mulf %85, %87 : vector<2x256xf32>
    %89 = arith.addf %75, %88 : vector<2x256xf32>
    %c48_i32 = arith.constant 48 : i32
    %90 = tpu.dynamic_rotate %46 by %c48_i32 dim 1 : vector<4x256xf32>, i32 -> vector<4x256xf32>
    %c0_34 = arith.constant 0 : index
    %c3 = arith.constant 3 : index
    %91 = memref.load %arg5[%c0_34, %c3] : memref<2x49xf32, #tpu.memory_space<smem>>
    %c1_35 = arith.constant 1 : index
    %c3_36 = arith.constant 3 : index
    %92 = memref.load %arg5[%c1_35, %c3_36] : memref<2x49xf32, #tpu.memory_space<smem>>
    %93 = vector.extract_strided_slice %90 {offsets = [0, 0], sizes = [2, 256], strides = [1, 1]} : vector<4x256xf32> to vector<2x256xf32>
    %94 = vector.broadcast %91 : f32 to vector<2x256xf32>
    %95 = arith.mulf %94, %93 : vector<2x256xf32>
    %96 = vector.extract_strided_slice %90 {offsets = [2, 0], sizes = [2, 256], strides = [1, 1]} : vector<4x256xf32> to vector<2x256xf32>
    %97 = vector.broadcast %92 : f32 to vector<2x256xf32>
    %98 = arith.mulf %97, %96 : vector<2x256xf32>
    %99 = arith.addf %95, %98 : vector<2x256xf32>
    %c3_37 = arith.constant 3 : index
    %c0_38 = arith.constant 0 : index
    %100 = vector.load %arg4[%c3_37, %c0_38] : memref<49x256xf32, #tpu.memory_space<vmem>>, vector<1x256xf32>
    %101 = vector.broadcast %100 : vector<1x256xf32> to vector<2x256xf32>
    %102 = arith.mulf %99, %101 : vector<2x256xf32>
    %103 = arith.addf %89, %102 : vector<2x256xf32>
    %c47_i32 = arith.constant 47 : i32
    %104 = tpu.dynamic_rotate %46 by %c47_i32 dim 1 : vector<4x256xf32>, i32 -> vector<4x256xf32>
    %c0_39 = arith.constant 0 : index
    %c4 = arith.constant 4 : index
    %105 = memref.load %arg5[%c0_39, %c4] : memref<2x49xf32, #tpu.memory_space<smem>>
    %c1_40 = arith.constant 1 : index
    %c4_41 = arith.constant 4 : index
    %106 = memref.load %arg5[%c1_40, %c4_41] : memref<2x49xf32, #tpu.memory_space<smem>>
    %107 = vector.extract_strided_slice %104 {offsets = [0, 0], sizes = [2, 256], strides = [1, 1]} : vector<4x256xf32> to vector<2x256xf32>
    %108 = vector.broadcast %105 : f32 to vector<2x256xf32>
    %109 = arith.mulf %108, %107 : vector<2x256xf32>
    %110 = vector.extract_strided_slice %104 {offsets = [2, 0], sizes = [2, 256], strides = [1, 1]} : vector<4x256xf32> to vector<2x256xf32>
    %111 = vector.broadcast %106 : f32 to vector<2x256xf32>
    %112 = arith.mulf %111, %110 : vector<2x256xf32>
    %113 = arith.addf %109, %112 : vector<2x256xf32>
    %c4_42 = arith.constant 4 : index
    %c0_43 = arith.constant 0 : index
    %114 = vector.load %arg4[%c4_42, %c0_43] : memref<49x256xf32, #tpu.memory_space<vmem>>, vector<1x256xf32>
    %115 = vector.broadcast %114 : vector<1x256xf32> to vector<2x256xf32>
    %116 = arith.mulf %113, %115 : vector<2x256xf32>
    %117 = arith.addf %103, %116 : vector<2x256xf32>
    %c46_i32 = arith.constant 46 : i32
    %118 = tpu.dynamic_rotate %46 by %c46_i32 dim 1 : vector<4x256xf32>, i32 -> vector<4x256xf32>
    %c0_44 = arith.constant 0 : index
    %c5 = arith.constant 5 : index
    %119 = memref.load %arg5[%c0_44, %c5] : memref<2x49xf32, #tpu.memory_space<smem>>
    %c1_45 = arith.constant 1 : index
    %c5_46 = arith.constant 5 : index
    %120 = memref.load %arg5[%c1_45, %c5_46] : memref<2x49xf32, #tpu.memory_space<smem>>
    %121 = vector.extract_strided_slice %118 {offsets = [0, 0], sizes = [2, 256], strides = [1, 1]} : vector<4x256xf32> to vector<2x256xf32>
    %122 = vector.broadcast %119 : f32 to vector<2x256xf32>
    %123 = arith.mulf %122, %121 : vector<2x256xf32>
    %124 = vector.extract_strided_slice %118 {offsets = [2, 0], sizes = [2, 256], strides = [1, 1]} : vector<4x256xf32> to vector<2x256xf32>
    %125 = vector.broadcast %120 : f32 to vector<2x256xf32>
    %126 = arith.mulf %125, %124 : vector<2x256xf32>
    %127 = arith.addf %123, %126 : vector<2x256xf32>
    %c5_47 = arith.constant 5 : index
    %c0_48 = arith.constant 0 : index
    %128 = vector.load %arg4[%c5_47, %c0_48] : memref<49x256xf32, #tpu.memory_space<vmem>>, vector<1x256xf32>
    %129 = vector.broadcast %128 : vector<1x256xf32> to vector<2x256xf32>
    %130 = arith.mulf %127, %129 : vector<2x256xf32>
    %131 = arith.addf %117, %130 : vector<2x256xf32>
    %c45_i32 = arith.constant 45 : i32
    %132 = tpu.dynamic_rotate %46 by %c45_i32 dim 1 : vector<4x256xf32>, i32 -> vector<4x256xf32>
    %c0_49 = arith.constant 0 : index
    %c6 = arith.constant 6 : index
    %133 = memref.load %arg5[%c0_49, %c6] : memref<2x49xf32, #tpu.memory_space<smem>>
    %c1_50 = arith.constant 1 : index
    %c6_51 = arith.constant 6 : index
    %134 = memref.load %arg5[%c1_50, %c6_51] : memref<2x49xf32, #tpu.memory_space<smem>>
    %135 = vector.extract_strided_slice %132 {offsets = [0, 0], sizes = [2, 256], strides = [1, 1]} : vector<4x256xf32> to vector<2x256xf32>
    %136 = vector.broadcast %133 : f32 to vector<2x256xf32>
    %137 = arith.mulf %136, %135 : vector<2x256xf32>
    %138 = vector.extract_strided_slice %132 {offsets = [2, 0], sizes = [2, 256], strides = [1, 1]} : vector<4x256xf32> to vector<2x256xf32>
    %139 = vector.broadcast %134 : f32 to vector<2x256xf32>
    %140 = arith.mulf %139, %138 : vector<2x256xf32>
    %141 = arith.addf %137, %140 : vector<2x256xf32>
    %c6_52 = arith.constant 6 : index
    %c0_53 = arith.constant 0 : index
    %142 = vector.load %arg4[%c6_52, %c0_53] : memref<49x256xf32, #tpu.memory_space<vmem>>, vector<1x256xf32>
    %143 = vector.broadcast %142 : vector<1x256xf32> to vector<2x256xf32>
    %144 = arith.mulf %141, %143 : vector<2x256xf32>
    %145 = arith.addf %131, %144 : vector<2x256xf32>
    %c35_i32 = arith.constant 35 : i32
    %146 = tpu.dynamic_rotate %46 by %c35_i32 dim 1 : vector<4x256xf32>, i32 -> vector<4x256xf32>
    %c0_54 = arith.constant 0 : index
    %c7 = arith.constant 7 : index
    %147 = memref.load %arg5[%c0_54, %c7] : memref<2x49xf32, #tpu.memory_space<smem>>
    %c1_55 = arith.constant 1 : index
    %c7_56 = arith.constant 7 : index
    %148 = memref.load %arg5[%c1_55, %c7_56] : memref<2x49xf32, #tpu.memory_space<smem>>
    %149 = vector.extract_strided_slice %146 {offsets = [0, 0], sizes = [2, 256], strides = [1, 1]} : vector<4x256xf32> to vector<2x256xf32>
    %150 = vector.broadcast %147 : f32 to vector<2x256xf32>
    %151 = arith.mulf %150, %149 : vector<2x256xf32>
    %152 = vector.extract_strided_slice %146 {offsets = [2, 0], sizes = [2, 256], strides = [1, 1]} : vector<4x256xf32> to vector<2x256xf32>
    %153 = vector.broadcast %148 : f32 to vector<2x256xf32>
    %154 = arith.mulf %153, %152 : vector<2x256xf32>
    %155 = arith.addf %151, %154 : vector<2x256xf32>
    %c7_57 = arith.constant 7 : index
    %c0_58 = arith.constant 0 : index
    %156 = vector.load %arg4[%c7_57, %c0_58] : memref<49x256xf32, #tpu.memory_space<vmem>>, vector<1x256xf32>
    %157 = vector.broadcast %156 : vector<1x256xf32> to vector<2x256xf32>
    %158 = arith.mulf %155, %157 : vector<2x256xf32>
    %159 = arith.addf %145, %158 : vector<2x256xf32>
    %c34_i32 = arith.constant 34 : i32
    %160 = tpu.dynamic_rotate %46 by %c34_i32 dim 1 : vector<4x256xf32>, i32 -> vector<4x256xf32>
    %c0_59 = arith.constant 0 : index
    %c8 = arith.constant 8 : index
    %161 = memref.load %arg5[%c0_59, %c8] : memref<2x49xf32, #tpu.memory_space<smem>>
    %c1_60 = arith.constant 1 : index
    %c8_61 = arith.constant 8 : index
    %162 = memref.load %arg5[%c1_60, %c8_61] : memref<2x49xf32, #tpu.memory_space<smem>>
    %163 = vector.extract_strided_slice %160 {offsets = [0, 0], sizes = [2, 256], strides = [1, 1]} : vector<4x256xf32> to vector<2x256xf32>
    %164 = vector.broadcast %161 : f32 to vector<2x256xf32>
    %165 = arith.mulf %164, %163 : vector<2x256xf32>
    %166 = vector.extract_strided_slice %160 {offsets = [2, 0], sizes = [2, 256], strides = [1, 1]} : vector<4x256xf32> to vector<2x256xf32>
    %167 = vector.broadcast %162 : f32 to vector<2x256xf32>
    %168 = arith.mulf %167, %166 : vector<2x256xf32>
    %169 = arith.addf %165, %168 : vector<2x256xf32>
    %c8_62 = arith.constant 8 : index
    %c0_63 = arith.constant 0 : index
    %170 = vector.load %arg4[%c8_62, %c0_63] : memref<49x256xf32, #tpu.memory_space<vmem>>, vector<1x256xf32>
    %171 = vector.broadcast %170 : vector<1x256xf32> to vector<2x256xf32>
    %172 = arith.mulf %169, %171 : vector<2x256xf32>
    %173 = arith.addf %159, %172 : vector<2x256xf32>
    %c33_i32 = arith.constant 33 : i32
    %174 = tpu.dynamic_rotate %46 by %c33_i32 dim 1 : vector<4x256xf32>, i32 -> vector<4x256xf32>
    %c0_64 = arith.constant 0 : index
    %c9 = arith.constant 9 : index
    %175 = memref.load %arg5[%c0_64, %c9] : memref<2x49xf32, #tpu.memory_space<smem>>
    %c1_65 = arith.constant 1 : index
    %c9_66 = arith.constant 9 : index
    %176 = memref.load %arg5[%c1_65, %c9_66] : memref<2x49xf32, #tpu.memory_space<smem>>
    %177 = vector.extract_strided_slice %174 {offsets = [0, 0], sizes = [2, 256], strides = [1, 1]} : vector<4x256xf32> to vector<2x256xf32>
    %178 = vector.broadcast %175 : f32 to vector<2x256xf32>
    %179 = arith.mulf %178, %177 : vector<2x256xf32>
    %180 = vector.extract_strided_slice %174 {offsets = [2, 0], sizes = [2, 256], strides = [1, 1]} : vector<4x256xf32> to vector<2x256xf32>
    %181 = vector.broadcast %176 : f32 to vector<2x256xf32>
    %182 = arith.mulf %181, %180 : vector<2x256xf32>
    %183 = arith.addf %179, %182 : vector<2x256xf32>
    %c9_67 = arith.constant 9 : index
    %c0_68 = arith.constant 0 : index
    %184 = vector.load %arg4[%c9_67, %c0_68] : memref<49x256xf32, #tpu.memory_space<vmem>>, vector<1x256xf32>
    %185 = vector.broadcast %184 : vector<1x256xf32> to vector<2x256xf32>
    %186 = arith.mulf %183, %185 : vector<2x256xf32>
    %187 = arith.addf %173, %186 : vector<2x256xf32>
    %c32_i32 = arith.constant 32 : i32
    %188 = tpu.dynamic_rotate %46 by %c32_i32 dim 1 : vector<4x256xf32>, i32 -> vector<4x256xf32>
    %c0_69 = arith.constant 0 : index
    %c10 = arith.constant 10 : index
    %189 = memref.load %arg5[%c0_69, %c10] : memref<2x49xf32, #tpu.memory_space<smem>>
    %c1_70 = arith.constant 1 : index
    %c10_71 = arith.constant 10 : index
    %190 = memref.load %arg5[%c1_70, %c10_71] : memref<2x49xf32, #tpu.memory_space<smem>>
    %191 = vector.extract_strided_slice %188 {offsets = [0, 0], sizes = [2, 256], strides = [1, 1]} : vector<4x256xf32> to vector<2x256xf32>
    %192 = vector.broadcast %189 : f32 to vector<2x256xf32>
    %193 = arith.mulf %192, %191 : vector<2x256xf32>
    %194 = vector.extract_strided_slice %188 {offsets = [2, 0], sizes = [2, 256], strides = [1, 1]} : vector<4x256xf32> to vector<2x256xf32>
    %195 = vector.broadcast %190 : f32 to vector<2x256xf32>
    %196 = arith.mulf %195, %194 : vector<2x256xf32>
    %197 = arith.addf %193, %196 : vector<2x256xf32>
    %c10_72 = arith.constant 10 : index
    %c0_73 = arith.constant 0 : index
    %198 = vector.load %arg4[%c10_72, %c0_73] : memref<49x256xf32, #tpu.memory_space<vmem>>, vector<1x256xf32>
    %199 = vector.broadcast %198 : vector<1x256xf32> to vector<2x256xf32>
    %200 = arith.mulf %197, %199 : vector<2x256xf32>
    %201 = arith.addf %187, %200 : vector<2x256xf32>
    %c31_i32 = arith.constant 31 : i32
    %202 = tpu.dynamic_rotate %46 by %c31_i32 dim 1 : vector<4x256xf32>, i32 -> vector<4x256xf32>
    %c0_74 = arith.constant 0 : index
    %c11 = arith.constant 11 : index
    %203 = memref.load %arg5[%c0_74, %c11] : memref<2x49xf32, #tpu.memory_space<smem>>
    %c1_75 = arith.constant 1 : index
    %c11_76 = arith.constant 11 : index
    %204 = memref.load %arg5[%c1_75, %c11_76] : memref<2x49xf32, #tpu.memory_space<smem>>
    %205 = vector.extract_strided_slice %202 {offsets = [0, 0], sizes = [2, 256], strides = [1, 1]} : vector<4x256xf32> to vector<2x256xf32>
    %206 = vector.broadcast %203 : f32 to vector<2x256xf32>
    %207 = arith.mulf %206, %205 : vector<2x256xf32>
    %208 = vector.extract_strided_slice %202 {offsets = [2, 0], sizes = [2, 256], strides = [1, 1]} : vector<4x256xf32> to vector<2x256xf32>
    %209 = vector.broadcast %204 : f32 to vector<2x256xf32>
    %210 = arith.mulf %209, %208 : vector<2x256xf32>
    %211 = arith.addf %207, %210 : vector<2x256xf32>
    %c11_77 = arith.constant 11 : index
    %c0_78 = arith.constant 0 : index
    %212 = vector.load %arg4[%c11_77, %c0_78] : memref<49x256xf32, #tpu.memory_space<vmem>>, vector<1x256xf32>
    %213 = vector.broadcast %212 : vector<1x256xf32> to vector<2x256xf32>
    %214 = arith.mulf %211, %213 : vector<2x256xf32>
    %215 = arith.addf %201, %214 : vector<2x256xf32>
    %c30_i32 = arith.constant 30 : i32
    %216 = tpu.dynamic_rotate %46 by %c30_i32 dim 1 : vector<4x256xf32>, i32 -> vector<4x256xf32>
    %c0_79 = arith.constant 0 : index
    %c12 = arith.constant 12 : index
    %217 = memref.load %arg5[%c0_79, %c12] : memref<2x49xf32, #tpu.memory_space<smem>>
    %c1_80 = arith.constant 1 : index
    %c12_81 = arith.constant 12 : index
    %218 = memref.load %arg5[%c1_80, %c12_81] : memref<2x49xf32, #tpu.memory_space<smem>>
    %219 = vector.extract_strided_slice %216 {offsets = [0, 0], sizes = [2, 256], strides = [1, 1]} : vector<4x256xf32> to vector<2x256xf32>
    %220 = vector.broadcast %217 : f32 to vector<2x256xf32>
    %221 = arith.mulf %220, %219 : vector<2x256xf32>
    %222 = vector.extract_strided_slice %216 {offsets = [2, 0], sizes = [2, 256], strides = [1, 1]} : vector<4x256xf32> to vector<2x256xf32>
    %223 = vector.broadcast %218 : f32 to vector<2x256xf32>
    %224 = arith.mulf %223, %222 : vector<2x256xf32>
    %225 = arith.addf %221, %224 : vector<2x256xf32>
    %c12_82 = arith.constant 12 : index
    %c0_83 = arith.constant 0 : index
    %226 = vector.load %arg4[%c12_82, %c0_83] : memref<49x256xf32, #tpu.memory_space<vmem>>, vector<1x256xf32>
    %227 = vector.broadcast %226 : vector<1x256xf32> to vector<2x256xf32>
    %228 = arith.mulf %225, %227 : vector<2x256xf32>
    %229 = arith.addf %215, %228 : vector<2x256xf32>
    %c29_i32 = arith.constant 29 : i32
    %230 = tpu.dynamic_rotate %46 by %c29_i32 dim 1 : vector<4x256xf32>, i32 -> vector<4x256xf32>
    %c0_84 = arith.constant 0 : index
    %c13 = arith.constant 13 : index
    %231 = memref.load %arg5[%c0_84, %c13] : memref<2x49xf32, #tpu.memory_space<smem>>
    %c1_85 = arith.constant 1 : index
    %c13_86 = arith.constant 13 : index
    %232 = memref.load %arg5[%c1_85, %c13_86] : memref<2x49xf32, #tpu.memory_space<smem>>
    %233 = vector.extract_strided_slice %230 {offsets = [0, 0], sizes = [2, 256], strides = [1, 1]} : vector<4x256xf32> to vector<2x256xf32>
    %234 = vector.broadcast %231 : f32 to vector<2x256xf32>
    %235 = arith.mulf %234, %233 : vector<2x256xf32>
    %236 = vector.extract_strided_slice %230 {offsets = [2, 0], sizes = [2, 256], strides = [1, 1]} : vector<4x256xf32> to vector<2x256xf32>
    %237 = vector.broadcast %232 : f32 to vector<2x256xf32>
    %238 = arith.mulf %237, %236 : vector<2x256xf32>
    %239 = arith.addf %235, %238 : vector<2x256xf32>
    %c13_87 = arith.constant 13 : index
    %c0_88 = arith.constant 0 : index
    %240 = vector.load %arg4[%c13_87, %c0_88] : memref<49x256xf32, #tpu.memory_space<vmem>>, vector<1x256xf32>
    %241 = vector.broadcast %240 : vector<1x256xf32> to vector<2x256xf32>
    %242 = arith.mulf %239, %241 : vector<2x256xf32>
    %243 = arith.addf %229, %242 : vector<2x256xf32>
    %c19_i32 = arith.constant 19 : i32
    %244 = tpu.dynamic_rotate %46 by %c19_i32 dim 1 : vector<4x256xf32>, i32 -> vector<4x256xf32>
    %c0_89 = arith.constant 0 : index
    %c14 = arith.constant 14 : index
    %245 = memref.load %arg5[%c0_89, %c14] : memref<2x49xf32, #tpu.memory_space<smem>>
    %c1_90 = arith.constant 1 : index
    %c14_91 = arith.constant 14 : index
    %246 = memref.load %arg5[%c1_90, %c14_91] : memref<2x49xf32, #tpu.memory_space<smem>>
    %247 = vector.extract_strided_slice %244 {offsets = [0, 0], sizes = [2, 256], strides = [1, 1]} : vector<4x256xf32> to vector<2x256xf32>
    %248 = vector.broadcast %245 : f32 to vector<2x256xf32>
    %249 = arith.mulf %248, %247 : vector<2x256xf32>
    %250 = vector.extract_strided_slice %244 {offsets = [2, 0], sizes = [2, 256], strides = [1, 1]} : vector<4x256xf32> to vector<2x256xf32>
    %251 = vector.broadcast %246 : f32 to vector<2x256xf32>
    %252 = arith.mulf %251, %250 : vector<2x256xf32>
    %253 = arith.addf %249, %252 : vector<2x256xf32>
    %c14_92 = arith.constant 14 : index
    %c0_93 = arith.constant 0 : index
    %254 = vector.load %arg4[%c14_92, %c0_93] : memref<49x256xf32, #tpu.memory_space<vmem>>, vector<1x256xf32>
    %255 = vector.broadcast %254 : vector<1x256xf32> to vector<2x256xf32>
    %256 = arith.mulf %253, %255 : vector<2x256xf32>
    %257 = arith.addf %243, %256 : vector<2x256xf32>
    %c18_i32 = arith.constant 18 : i32
    %258 = tpu.dynamic_rotate %46 by %c18_i32 dim 1 : vector<4x256xf32>, i32 -> vector<4x256xf32>
    %c0_94 = arith.constant 0 : index
    %c15 = arith.constant 15 : index
    %259 = memref.load %arg5[%c0_94, %c15] : memref<2x49xf32, #tpu.memory_space<smem>>
    %c1_95 = arith.constant 1 : index
    %c15_96 = arith.constant 15 : index
    %260 = memref.load %arg5[%c1_95, %c15_96] : memref<2x49xf32, #tpu.memory_space<smem>>
    %261 = vector.extract_strided_slice %258 {offsets = [0, 0], sizes = [2, 256], strides = [1, 1]} : vector<4x256xf32> to vector<2x256xf32>
    %262 = vector.broadcast %259 : f32 to vector<2x256xf32>
    %263 = arith.mulf %262, %261 : vector<2x256xf32>
    %264 = vector.extract_strided_slice %258 {offsets = [2, 0], sizes = [2, 256], strides = [1, 1]} : vector<4x256xf32> to vector<2x256xf32>
    %265 = vector.broadcast %260 : f32 to vector<2x256xf32>
    %266 = arith.mulf %265, %264 : vector<2x256xf32>
    %267 = arith.addf %263, %266 : vector<2x256xf32>
    %c15_97 = arith.constant 15 : index
    %c0_98 = arith.constant 0 : index
    %268 = vector.load %arg4[%c15_97, %c0_98] : memref<49x256xf32, #tpu.memory_space<vmem>>, vector<1x256xf32>
    %269 = vector.broadcast %268 : vector<1x256xf32> to vector<2x256xf32>
    %270 = arith.mulf %267, %269 : vector<2x256xf32>
    %271 = arith.addf %257, %270 : vector<2x256xf32>
    %c17_i32 = arith.constant 17 : i32
    %272 = tpu.dynamic_rotate %46 by %c17_i32 dim 1 : vector<4x256xf32>, i32 -> vector<4x256xf32>
    %c0_99 = arith.constant 0 : index
    %c16 = arith.constant 16 : index
    %273 = memref.load %arg5[%c0_99, %c16] : memref<2x49xf32, #tpu.memory_space<smem>>
    %c1_100 = arith.constant 1 : index
    %c16_101 = arith.constant 16 : index
    %274 = memref.load %arg5[%c1_100, %c16_101] : memref<2x49xf32, #tpu.memory_space<smem>>
    %275 = vector.extract_strided_slice %272 {offsets = [0, 0], sizes = [2, 256], strides = [1, 1]} : vector<4x256xf32> to vector<2x256xf32>
    %276 = vector.broadcast %273 : f32 to vector<2x256xf32>
    %277 = arith.mulf %276, %275 : vector<2x256xf32>
    %278 = vector.extract_strided_slice %272 {offsets = [2, 0], sizes = [2, 256], strides = [1, 1]} : vector<4x256xf32> to vector<2x256xf32>
    %279 = vector.broadcast %274 : f32 to vector<2x256xf32>
    %280 = arith.mulf %279, %278 : vector<2x256xf32>
    %281 = arith.addf %277, %280 : vector<2x256xf32>
    %c16_102 = arith.constant 16 : index
    %c0_103 = arith.constant 0 : index
    %282 = vector.load %arg4[%c16_102, %c0_103] : memref<49x256xf32, #tpu.memory_space<vmem>>, vector<1x256xf32>
    %283 = vector.broadcast %282 : vector<1x256xf32> to vector<2x256xf32>
    %284 = arith.mulf %281, %283 : vector<2x256xf32>
    %285 = arith.addf %271, %284 : vector<2x256xf32>
    %c16_i32 = arith.constant 16 : i32
    %286 = tpu.dynamic_rotate %46 by %c16_i32 dim 1 : vector<4x256xf32>, i32 -> vector<4x256xf32>
    %c0_104 = arith.constant 0 : index
    %c17 = arith.constant 17 : index
    %287 = memref.load %arg5[%c0_104, %c17] : memref<2x49xf32, #tpu.memory_space<smem>>
    %c1_105 = arith.constant 1 : index
    %c17_106 = arith.constant 17 : index
    %288 = memref.load %arg5[%c1_105, %c17_106] : memref<2x49xf32, #tpu.memory_space<smem>>
    %289 = vector.extract_strided_slice %286 {offsets = [0, 0], sizes = [2, 256], strides = [1, 1]} : vector<4x256xf32> to vector<2x256xf32>
    %290 = vector.broadcast %287 : f32 to vector<2x256xf32>
    %291 = arith.mulf %290, %289 : vector<2x256xf32>
    %292 = vector.extract_strided_slice %286 {offsets = [2, 0], sizes = [2, 256], strides = [1, 1]} : vector<4x256xf32> to vector<2x256xf32>
    %293 = vector.broadcast %288 : f32 to vector<2x256xf32>
    %294 = arith.mulf %293, %292 : vector<2x256xf32>
    %295 = arith.addf %291, %294 : vector<2x256xf32>
    %c17_107 = arith.constant 17 : index
    %c0_108 = arith.constant 0 : index
    %296 = vector.load %arg4[%c17_107, %c0_108] : memref<49x256xf32, #tpu.memory_space<vmem>>, vector<1x256xf32>
    %297 = vector.broadcast %296 : vector<1x256xf32> to vector<2x256xf32>
    %298 = arith.mulf %295, %297 : vector<2x256xf32>
    %299 = arith.addf %285, %298 : vector<2x256xf32>
    %c15_i32 = arith.constant 15 : i32
    %300 = tpu.dynamic_rotate %46 by %c15_i32 dim 1 : vector<4x256xf32>, i32 -> vector<4x256xf32>
    %c0_109 = arith.constant 0 : index
    %c18 = arith.constant 18 : index
    %301 = memref.load %arg5[%c0_109, %c18] : memref<2x49xf32, #tpu.memory_space<smem>>
    %c1_110 = arith.constant 1 : index
    %c18_111 = arith.constant 18 : index
    %302 = memref.load %arg5[%c1_110, %c18_111] : memref<2x49xf32, #tpu.memory_space<smem>>
    %303 = vector.extract_strided_slice %300 {offsets = [0, 0], sizes = [2, 256], strides = [1, 1]} : vector<4x256xf32> to vector<2x256xf32>
    %304 = vector.broadcast %301 : f32 to vector<2x256xf32>
    %305 = arith.mulf %304, %303 : vector<2x256xf32>
    %306 = vector.extract_strided_slice %300 {offsets = [2, 0], sizes = [2, 256], strides = [1, 1]} : vector<4x256xf32> to vector<2x256xf32>
    %307 = vector.broadcast %302 : f32 to vector<2x256xf32>
    %308 = arith.mulf %307, %306 : vector<2x256xf32>
    %309 = arith.addf %305, %308 : vector<2x256xf32>
    %c18_112 = arith.constant 18 : index
    %c0_113 = arith.constant 0 : index
    %310 = vector.load %arg4[%c18_112, %c0_113] : memref<49x256xf32, #tpu.memory_space<vmem>>, vector<1x256xf32>
    %311 = vector.broadcast %310 : vector<1x256xf32> to vector<2x256xf32>
    %312 = arith.mulf %309, %311 : vector<2x256xf32>
    %313 = arith.addf %299, %312 : vector<2x256xf32>
    %c14_i32 = arith.constant 14 : i32
    %314 = tpu.dynamic_rotate %46 by %c14_i32 dim 1 : vector<4x256xf32>, i32 -> vector<4x256xf32>
    %c0_114 = arith.constant 0 : index
    %c19 = arith.constant 19 : index
    %315 = memref.load %arg5[%c0_114, %c19] : memref<2x49xf32, #tpu.memory_space<smem>>
    %c1_115 = arith.constant 1 : index
    %c19_116 = arith.constant 19 : index
    %316 = memref.load %arg5[%c1_115, %c19_116] : memref<2x49xf32, #tpu.memory_space<smem>>
    %317 = vector.extract_strided_slice %314 {offsets = [0, 0], sizes = [2, 256], strides = [1, 1]} : vector<4x256xf32> to vector<2x256xf32>
    %318 = vector.broadcast %315 : f32 to vector<2x256xf32>
    %319 = arith.mulf %318, %317 : vector<2x256xf32>
    %320 = vector.extract_strided_slice %314 {offsets = [2, 0], sizes = [2, 256], strides = [1, 1]} : vector<4x256xf32> to vector<2x256xf32>
    %321 = vector.broadcast %316 : f32 to vector<2x256xf32>
    %322 = arith.mulf %321, %320 : vector<2x256xf32>
    %323 = arith.addf %319, %322 : vector<2x256xf32>
    %c19_117 = arith.constant 19 : index
    %c0_118 = arith.constant 0 : index
    %324 = vector.load %arg4[%c19_117, %c0_118] : memref<49x256xf32, #tpu.memory_space<vmem>>, vector<1x256xf32>
    %325 = vector.broadcast %324 : vector<1x256xf32> to vector<2x256xf32>
    %326 = arith.mulf %323, %325 : vector<2x256xf32>
    %327 = arith.addf %313, %326 : vector<2x256xf32>
    %c13_i32 = arith.constant 13 : i32
    %328 = tpu.dynamic_rotate %46 by %c13_i32 dim 1 : vector<4x256xf32>, i32 -> vector<4x256xf32>
    %c0_119 = arith.constant 0 : index
    %c20 = arith.constant 20 : index
    %329 = memref.load %arg5[%c0_119, %c20] : memref<2x49xf32, #tpu.memory_space<smem>>
    %c1_120 = arith.constant 1 : index
    %c20_121 = arith.constant 20 : index
    %330 = memref.load %arg5[%c1_120, %c20_121] : memref<2x49xf32, #tpu.memory_space<smem>>
    %331 = vector.extract_strided_slice %328 {offsets = [0, 0], sizes = [2, 256], strides = [1, 1]} : vector<4x256xf32> to vector<2x256xf32>
    %332 = vector.broadcast %329 : f32 to vector<2x256xf32>
    %333 = arith.mulf %332, %331 : vector<2x256xf32>
    %334 = vector.extract_strided_slice %328 {offsets = [2, 0], sizes = [2, 256], strides = [1, 1]} : vector<4x256xf32> to vector<2x256xf32>
    %335 = vector.broadcast %330 : f32 to vector<2x256xf32>
    %336 = arith.mulf %335, %334 : vector<2x256xf32>
    %337 = arith.addf %333, %336 : vector<2x256xf32>
    %c20_122 = arith.constant 20 : index
    %c0_123 = arith.constant 0 : index
    %338 = vector.load %arg4[%c20_122, %c0_123] : memref<49x256xf32, #tpu.memory_space<vmem>>, vector<1x256xf32>
    %339 = vector.broadcast %338 : vector<1x256xf32> to vector<2x256xf32>
    %340 = arith.mulf %337, %339 : vector<2x256xf32>
    %341 = arith.addf %327, %340 : vector<2x256xf32>
    %c3_i32 = arith.constant 3 : i32
    %342 = tpu.dynamic_rotate %46 by %c3_i32 dim 1 : vector<4x256xf32>, i32 -> vector<4x256xf32>
    %c0_124 = arith.constant 0 : index
    %c21 = arith.constant 21 : index
    %343 = memref.load %arg5[%c0_124, %c21] : memref<2x49xf32, #tpu.memory_space<smem>>
    %c1_125 = arith.constant 1 : index
    %c21_126 = arith.constant 21 : index
    %344 = memref.load %arg5[%c1_125, %c21_126] : memref<2x49xf32, #tpu.memory_space<smem>>
    %345 = vector.extract_strided_slice %342 {offsets = [0, 0], sizes = [2, 256], strides = [1, 1]} : vector<4x256xf32> to vector<2x256xf32>
    %346 = vector.broadcast %343 : f32 to vector<2x256xf32>
    %347 = arith.mulf %346, %345 : vector<2x256xf32>
    %348 = vector.extract_strided_slice %342 {offsets = [2, 0], sizes = [2, 256], strides = [1, 1]} : vector<4x256xf32> to vector<2x256xf32>
    %349 = vector.broadcast %344 : f32 to vector<2x256xf32>
    %350 = arith.mulf %349, %348 : vector<2x256xf32>
    %351 = arith.addf %347, %350 : vector<2x256xf32>
    %c21_127 = arith.constant 21 : index
    %c0_128 = arith.constant 0 : index
    %352 = vector.load %arg4[%c21_127, %c0_128] : memref<49x256xf32, #tpu.memory_space<vmem>>, vector<1x256xf32>
    %353 = vector.broadcast %352 : vector<1x256xf32> to vector<2x256xf32>
    %354 = arith.mulf %351, %353 : vector<2x256xf32>
    %355 = arith.addf %341, %354 : vector<2x256xf32>
    %c2_i32 = arith.constant 2 : i32
    %356 = tpu.dynamic_rotate %46 by %c2_i32 dim 1 : vector<4x256xf32>, i32 -> vector<4x256xf32>
    %c0_129 = arith.constant 0 : index
    %c22 = arith.constant 22 : index
    %357 = memref.load %arg5[%c0_129, %c22] : memref<2x49xf32, #tpu.memory_space<smem>>
    %c1_130 = arith.constant 1 : index
    %c22_131 = arith.constant 22 : index
    %358 = memref.load %arg5[%c1_130, %c22_131] : memref<2x49xf32, #tpu.memory_space<smem>>
    %359 = vector.extract_strided_slice %356 {offsets = [0, 0], sizes = [2, 256], strides = [1, 1]} : vector<4x256xf32> to vector<2x256xf32>
    %360 = vector.broadcast %357 : f32 to vector<2x256xf32>
    %361 = arith.mulf %360, %359 : vector<2x256xf32>
    %362 = vector.extract_strided_slice %356 {offsets = [2, 0], sizes = [2, 256], strides = [1, 1]} : vector<4x256xf32> to vector<2x256xf32>
    %363 = vector.broadcast %358 : f32 to vector<2x256xf32>
    %364 = arith.mulf %363, %362 : vector<2x256xf32>
    %365 = arith.addf %361, %364 : vector<2x256xf32>
    %c22_132 = arith.constant 22 : index
    %c0_133 = arith.constant 0 : index
    %366 = vector.load %arg4[%c22_132, %c0_133] : memref<49x256xf32, #tpu.memory_space<vmem>>, vector<1x256xf32>
    %367 = vector.broadcast %366 : vector<1x256xf32> to vector<2x256xf32>
    %368 = arith.mulf %365, %367 : vector<2x256xf32>
    %369 = arith.addf %355, %368 : vector<2x256xf32>
    %c1_i32 = arith.constant 1 : i32
    %370 = tpu.dynamic_rotate %46 by %c1_i32 dim 1 : vector<4x256xf32>, i32 -> vector<4x256xf32>
    %c0_134 = arith.constant 0 : index
    %c23 = arith.constant 23 : index
    %371 = memref.load %arg5[%c0_134, %c23] : memref<2x49xf32, #tpu.memory_space<smem>>
    %c1_135 = arith.constant 1 : index
    %c23_136 = arith.constant 23 : index
    %372 = memref.load %arg5[%c1_135, %c23_136] : memref<2x49xf32, #tpu.memory_space<smem>>
    %373 = vector.extract_strided_slice %370 {offsets = [0, 0], sizes = [2, 256], strides = [1, 1]} : vector<4x256xf32> to vector<2x256xf32>
    %374 = vector.broadcast %371 : f32 to vector<2x256xf32>
    %375 = arith.mulf %374, %373 : vector<2x256xf32>
    %376 = vector.extract_strided_slice %370 {offsets = [2, 0], sizes = [2, 256], strides = [1, 1]} : vector<4x256xf32> to vector<2x256xf32>
    %377 = vector.broadcast %372 : f32 to vector<2x256xf32>
    %378 = arith.mulf %377, %376 : vector<2x256xf32>
    %379 = arith.addf %375, %378 : vector<2x256xf32>
    %c23_137 = arith.constant 23 : index
    %c0_138 = arith.constant 0 : index
    %380 = vector.load %arg4[%c23_137, %c0_138] : memref<49x256xf32, #tpu.memory_space<vmem>>, vector<1x256xf32>
    %381 = vector.broadcast %380 : vector<1x256xf32> to vector<2x256xf32>
    %382 = arith.mulf %379, %381 : vector<2x256xf32>
    %383 = arith.addf %369, %382 : vector<2x256xf32>
    %c0_139 = arith.constant 0 : index
    %c24 = arith.constant 24 : index
    %384 = memref.load %arg5[%c0_139, %c24] : memref<2x49xf32, #tpu.memory_space<smem>>
    %c1_140 = arith.constant 1 : index
    %c24_141 = arith.constant 24 : index
    %385 = memref.load %arg5[%c1_140, %c24_141] : memref<2x49xf32, #tpu.memory_space<smem>>
    %386 = vector.extract_strided_slice %46 {offsets = [0, 0], sizes = [2, 256], strides = [1, 1]} : vector<4x256xf32> to vector<2x256xf32>
    %387 = vector.broadcast %384 : f32 to vector<2x256xf32>
    %388 = arith.mulf %387, %386 : vector<2x256xf32>
    %389 = vector.extract_strided_slice %46 {offsets = [2, 0], sizes = [2, 256], strides = [1, 1]} : vector<4x256xf32> to vector<2x256xf32>
    %390 = vector.broadcast %385 : f32 to vector<2x256xf32>
    %391 = arith.mulf %390, %389 : vector<2x256xf32>
    %392 = arith.addf %388, %391 : vector<2x256xf32>
    %c24_142 = arith.constant 24 : index
    %c0_143 = arith.constant 0 : index
    %393 = vector.load %arg4[%c24_142, %c0_143] : memref<49x256xf32, #tpu.memory_space<vmem>>, vector<1x256xf32>
    %394 = vector.broadcast %393 : vector<1x256xf32> to vector<2x256xf32>
    %395 = arith.mulf %392, %394 : vector<2x256xf32>
    %396 = arith.addf %383, %395 : vector<2x256xf32>
    %c255_i32 = arith.constant 255 : i32
    %397 = tpu.dynamic_rotate %46 by %c255_i32 dim 1 : vector<4x256xf32>, i32 -> vector<4x256xf32>
    %c0_144 = arith.constant 0 : index
    %c25 = arith.constant 25 : index
    %398 = memref.load %arg5[%c0_144, %c25] : memref<2x49xf32, #tpu.memory_space<smem>>
    %c1_145 = arith.constant 1 : index
    %c25_146 = arith.constant 25 : index
    %399 = memref.load %arg5[%c1_145, %c25_146] : memref<2x49xf32, #tpu.memory_space<smem>>
    %400 = vector.extract_strided_slice %397 {offsets = [0, 0], sizes = [2, 256], strides = [1, 1]} : vector<4x256xf32> to vector<2x256xf32>
    %401 = vector.broadcast %398 : f32 to vector<2x256xf32>
    %402 = arith.mulf %401, %400 : vector<2x256xf32>
    %403 = vector.extract_strided_slice %397 {offsets = [2, 0], sizes = [2, 256], strides = [1, 1]} : vector<4x256xf32> to vector<2x256xf32>
    %404 = vector.broadcast %399 : f32 to vector<2x256xf32>
    %405 = arith.mulf %404, %403 : vector<2x256xf32>
    %406 = arith.addf %402, %405 : vector<2x256xf32>
    %c25_147 = arith.constant 25 : index
    %c0_148 = arith.constant 0 : index
    %407 = vector.load %arg4[%c25_147, %c0_148] : memref<49x256xf32, #tpu.memory_space<vmem>>, vector<1x256xf32>
    %408 = vector.broadcast %407 : vector<1x256xf32> to vector<2x256xf32>
    %409 = arith.mulf %406, %408 : vector<2x256xf32>
    %410 = arith.addf %396, %409 : vector<2x256xf32>
    %c254_i32 = arith.constant 254 : i32
    %411 = tpu.dynamic_rotate %46 by %c254_i32 dim 1 : vector<4x256xf32>, i32 -> vector<4x256xf32>
    %c0_149 = arith.constant 0 : index
    %c26 = arith.constant 26 : index
    %412 = memref.load %arg5[%c0_149, %c26] : memref<2x49xf32, #tpu.memory_space<smem>>
    %c1_150 = arith.constant 1 : index
    %c26_151 = arith.constant 26 : index
    %413 = memref.load %arg5[%c1_150, %c26_151] : memref<2x49xf32, #tpu.memory_space<smem>>
    %414 = vector.extract_strided_slice %411 {offsets = [0, 0], sizes = [2, 256], strides = [1, 1]} : vector<4x256xf32> to vector<2x256xf32>
    %415 = vector.broadcast %412 : f32 to vector<2x256xf32>
    %416 = arith.mulf %415, %414 : vector<2x256xf32>
    %417 = vector.extract_strided_slice %411 {offsets = [2, 0], sizes = [2, 256], strides = [1, 1]} : vector<4x256xf32> to vector<2x256xf32>
    %418 = vector.broadcast %413 : f32 to vector<2x256xf32>
    %419 = arith.mulf %418, %417 : vector<2x256xf32>
    %420 = arith.addf %416, %419 : vector<2x256xf32>
    %c26_152 = arith.constant 26 : index
    %c0_153 = arith.constant 0 : index
    %421 = vector.load %arg4[%c26_152, %c0_153] : memref<49x256xf32, #tpu.memory_space<vmem>>, vector<1x256xf32>
    %422 = vector.broadcast %421 : vector<1x256xf32> to vector<2x256xf32>
    %423 = arith.mulf %420, %422 : vector<2x256xf32>
    %424 = arith.addf %410, %423 : vector<2x256xf32>
    %c253_i32 = arith.constant 253 : i32
    %425 = tpu.dynamic_rotate %46 by %c253_i32 dim 1 : vector<4x256xf32>, i32 -> vector<4x256xf32>
    %c0_154 = arith.constant 0 : index
    %c27 = arith.constant 27 : index
    %426 = memref.load %arg5[%c0_154, %c27] : memref<2x49xf32, #tpu.memory_space<smem>>
    %c1_155 = arith.constant 1 : index
    %c27_156 = arith.constant 27 : index
    %427 = memref.load %arg5[%c1_155, %c27_156] : memref<2x49xf32, #tpu.memory_space<smem>>
    %428 = vector.extract_strided_slice %425 {offsets = [0, 0], sizes = [2, 256], strides = [1, 1]} : vector<4x256xf32> to vector<2x256xf32>
    %429 = vector.broadcast %426 : f32 to vector<2x256xf32>
    %430 = arith.mulf %429, %428 : vector<2x256xf32>
    %431 = vector.extract_strided_slice %425 {offsets = [2, 0], sizes = [2, 256], strides = [1, 1]} : vector<4x256xf32> to vector<2x256xf32>
    %432 = vector.broadcast %427 : f32 to vector<2x256xf32>
    %433 = arith.mulf %432, %431 : vector<2x256xf32>
    %434 = arith.addf %430, %433 : vector<2x256xf32>
    %c27_157 = arith.constant 27 : index
    %c0_158 = arith.constant 0 : index
    %435 = vector.load %arg4[%c27_157, %c0_158] : memref<49x256xf32, #tpu.memory_space<vmem>>, vector<1x256xf32>
    %436 = vector.broadcast %435 : vector<1x256xf32> to vector<2x256xf32>
    %437 = arith.mulf %434, %436 : vector<2x256xf32>
    %438 = arith.addf %424, %437 : vector<2x256xf32>
    %c243_i32 = arith.constant 243 : i32
    %439 = tpu.dynamic_rotate %46 by %c243_i32 dim 1 : vector<4x256xf32>, i32 -> vector<4x256xf32>
    %c0_159 = arith.constant 0 : index
    %c28 = arith.constant 28 : index
    %440 = memref.load %arg5[%c0_159, %c28] : memref<2x49xf32, #tpu.memory_space<smem>>
    %c1_160 = arith.constant 1 : index
    %c28_161 = arith.constant 28 : index
    %441 = memref.load %arg5[%c1_160, %c28_161] : memref<2x49xf32, #tpu.memory_space<smem>>
    %442 = vector.extract_strided_slice %439 {offsets = [0, 0], sizes = [2, 256], strides = [1, 1]} : vector<4x256xf32> to vector<2x256xf32>
    %443 = vector.broadcast %440 : f32 to vector<2x256xf32>
    %444 = arith.mulf %443, %442 : vector<2x256xf32>
    %445 = vector.extract_strided_slice %439 {offsets = [2, 0], sizes = [2, 256], strides = [1, 1]} : vector<4x256xf32> to vector<2x256xf32>
    %446 = vector.broadcast %441 : f32 to vector<2x256xf32>
    %447 = arith.mulf %446, %445 : vector<2x256xf32>
    %448 = arith.addf %444, %447 : vector<2x256xf32>
    %c28_162 = arith.constant 28 : index
    %c0_163 = arith.constant 0 : index
    %449 = vector.load %arg4[%c28_162, %c0_163] : memref<49x256xf32, #tpu.memory_space<vmem>>, vector<1x256xf32>
    %450 = vector.broadcast %449 : vector<1x256xf32> to vector<2x256xf32>
    %451 = arith.mulf %448, %450 : vector<2x256xf32>
    %452 = arith.addf %438, %451 : vector<2x256xf32>
    %c242_i32 = arith.constant 242 : i32
    %453 = tpu.dynamic_rotate %46 by %c242_i32 dim 1 : vector<4x256xf32>, i32 -> vector<4x256xf32>
    %c0_164 = arith.constant 0 : index
    %c29 = arith.constant 29 : index
    %454 = memref.load %arg5[%c0_164, %c29] : memref<2x49xf32, #tpu.memory_space<smem>>
    %c1_165 = arith.constant 1 : index
    %c29_166 = arith.constant 29 : index
    %455 = memref.load %arg5[%c1_165, %c29_166] : memref<2x49xf32, #tpu.memory_space<smem>>
    %456 = vector.extract_strided_slice %453 {offsets = [0, 0], sizes = [2, 256], strides = [1, 1]} : vector<4x256xf32> to vector<2x256xf32>
    %457 = vector.broadcast %454 : f32 to vector<2x256xf32>
    %458 = arith.mulf %457, %456 : vector<2x256xf32>
    %459 = vector.extract_strided_slice %453 {offsets = [2, 0], sizes = [2, 256], strides = [1, 1]} : vector<4x256xf32> to vector<2x256xf32>
    %460 = vector.broadcast %455 : f32 to vector<2x256xf32>
    %461 = arith.mulf %460, %459 : vector<2x256xf32>
    %462 = arith.addf %458, %461 : vector<2x256xf32>
    %c29_167 = arith.constant 29 : index
    %c0_168 = arith.constant 0 : index
    %463 = vector.load %arg4[%c29_167, %c0_168] : memref<49x256xf32, #tpu.memory_space<vmem>>, vector<1x256xf32>
    %464 = vector.broadcast %463 : vector<1x256xf32> to vector<2x256xf32>
    %465 = arith.mulf %462, %464 : vector<2x256xf32>
    %466 = arith.addf %452, %465 : vector<2x256xf32>
    %c241_i32 = arith.constant 241 : i32
    %467 = tpu.dynamic_rotate %46 by %c241_i32 dim 1 : vector<4x256xf32>, i32 -> vector<4x256xf32>
    %c0_169 = arith.constant 0 : index
    %c30 = arith.constant 30 : index
    %468 = memref.load %arg5[%c0_169, %c30] : memref<2x49xf32, #tpu.memory_space<smem>>
    %c1_170 = arith.constant 1 : index
    %c30_171 = arith.constant 30 : index
    %469 = memref.load %arg5[%c1_170, %c30_171] : memref<2x49xf32, #tpu.memory_space<smem>>
    %470 = vector.extract_strided_slice %467 {offsets = [0, 0], sizes = [2, 256], strides = [1, 1]} : vector<4x256xf32> to vector<2x256xf32>
    %471 = vector.broadcast %468 : f32 to vector<2x256xf32>
    %472 = arith.mulf %471, %470 : vector<2x256xf32>
    %473 = vector.extract_strided_slice %467 {offsets = [2, 0], sizes = [2, 256], strides = [1, 1]} : vector<4x256xf32> to vector<2x256xf32>
    %474 = vector.broadcast %469 : f32 to vector<2x256xf32>
    %475 = arith.mulf %474, %473 : vector<2x256xf32>
    %476 = arith.addf %472, %475 : vector<2x256xf32>
    %c30_172 = arith.constant 30 : index
    %c0_173 = arith.constant 0 : index
    %477 = vector.load %arg4[%c30_172, %c0_173] : memref<49x256xf32, #tpu.memory_space<vmem>>, vector<1x256xf32>
    %478 = vector.broadcast %477 : vector<1x256xf32> to vector<2x256xf32>
    %479 = arith.mulf %476, %478 : vector<2x256xf32>
    %480 = arith.addf %466, %479 : vector<2x256xf32>
    %c240_i32 = arith.constant 240 : i32
    %481 = tpu.dynamic_rotate %46 by %c240_i32 dim 1 : vector<4x256xf32>, i32 -> vector<4x256xf32>
    %c0_174 = arith.constant 0 : index
    %c31 = arith.constant 31 : index
    %482 = memref.load %arg5[%c0_174, %c31] : memref<2x49xf32, #tpu.memory_space<smem>>
    %c1_175 = arith.constant 1 : index
    %c31_176 = arith.constant 31 : index
    %483 = memref.load %arg5[%c1_175, %c31_176] : memref<2x49xf32, #tpu.memory_space<smem>>
    %484 = vector.extract_strided_slice %481 {offsets = [0, 0], sizes = [2, 256], strides = [1, 1]} : vector<4x256xf32> to vector<2x256xf32>
    %485 = vector.broadcast %482 : f32 to vector<2x256xf32>
    %486 = arith.mulf %485, %484 : vector<2x256xf32>
    %487 = vector.extract_strided_slice %481 {offsets = [2, 0], sizes = [2, 256], strides = [1, 1]} : vector<4x256xf32> to vector<2x256xf32>
    %488 = vector.broadcast %483 : f32 to vector<2x256xf32>
    %489 = arith.mulf %488, %487 : vector<2x256xf32>
    %490 = arith.addf %486, %489 : vector<2x256xf32>
    %c31_177 = arith.constant 31 : index
    %c0_178 = arith.constant 0 : index
    %491 = vector.load %arg4[%c31_177, %c0_178] : memref<49x256xf32, #tpu.memory_space<vmem>>, vector<1x256xf32>
    %492 = vector.broadcast %491 : vector<1x256xf32> to vector<2x256xf32>
    %493 = arith.mulf %490, %492 : vector<2x256xf32>
    %494 = arith.addf %480, %493 : vector<2x256xf32>
    %c239_i32 = arith.constant 239 : i32
    %495 = tpu.dynamic_rotate %46 by %c239_i32 dim 1 : vector<4x256xf32>, i32 -> vector<4x256xf32>
    %c0_179 = arith.constant 0 : index
    %c32 = arith.constant 32 : index
    %496 = memref.load %arg5[%c0_179, %c32] : memref<2x49xf32, #tpu.memory_space<smem>>
    %c1_180 = arith.constant 1 : index
    %c32_181 = arith.constant 32 : index
    %497 = memref.load %arg5[%c1_180, %c32_181] : memref<2x49xf32, #tpu.memory_space<smem>>
    %498 = vector.extract_strided_slice %495 {offsets = [0, 0], sizes = [2, 256], strides = [1, 1]} : vector<4x256xf32> to vector<2x256xf32>
    %499 = vector.broadcast %496 : f32 to vector<2x256xf32>
    %500 = arith.mulf %499, %498 : vector<2x256xf32>
    %501 = vector.extract_strided_slice %495 {offsets = [2, 0], sizes = [2, 256], strides = [1, 1]} : vector<4x256xf32> to vector<2x256xf32>
    %502 = vector.broadcast %497 : f32 to vector<2x256xf32>
    %503 = arith.mulf %502, %501 : vector<2x256xf32>
    %504 = arith.addf %500, %503 : vector<2x256xf32>
    %c32_182 = arith.constant 32 : index
    %c0_183 = arith.constant 0 : index
    %505 = vector.load %arg4[%c32_182, %c0_183] : memref<49x256xf32, #tpu.memory_space<vmem>>, vector<1x256xf32>
    %506 = vector.broadcast %505 : vector<1x256xf32> to vector<2x256xf32>
    %507 = arith.mulf %504, %506 : vector<2x256xf32>
    %508 = arith.addf %494, %507 : vector<2x256xf32>
    %c238_i32 = arith.constant 238 : i32
    %509 = tpu.dynamic_rotate %46 by %c238_i32 dim 1 : vector<4x256xf32>, i32 -> vector<4x256xf32>
    %c0_184 = arith.constant 0 : index
    %c33 = arith.constant 33 : index
    %510 = memref.load %arg5[%c0_184, %c33] : memref<2x49xf32, #tpu.memory_space<smem>>
    %c1_185 = arith.constant 1 : index
    %c33_186 = arith.constant 33 : index
    %511 = memref.load %arg5[%c1_185, %c33_186] : memref<2x49xf32, #tpu.memory_space<smem>>
    %512 = vector.extract_strided_slice %509 {offsets = [0, 0], sizes = [2, 256], strides = [1, 1]} : vector<4x256xf32> to vector<2x256xf32>
    %513 = vector.broadcast %510 : f32 to vector<2x256xf32>
    %514 = arith.mulf %513, %512 : vector<2x256xf32>
    %515 = vector.extract_strided_slice %509 {offsets = [2, 0], sizes = [2, 256], strides = [1, 1]} : vector<4x256xf32> to vector<2x256xf32>
    %516 = vector.broadcast %511 : f32 to vector<2x256xf32>
    %517 = arith.mulf %516, %515 : vector<2x256xf32>
    %518 = arith.addf %514, %517 : vector<2x256xf32>
    %c33_187 = arith.constant 33 : index
    %c0_188 = arith.constant 0 : index
    %519 = vector.load %arg4[%c33_187, %c0_188] : memref<49x256xf32, #tpu.memory_space<vmem>>, vector<1x256xf32>
    %520 = vector.broadcast %519 : vector<1x256xf32> to vector<2x256xf32>
    %521 = arith.mulf %518, %520 : vector<2x256xf32>
    %522 = arith.addf %508, %521 : vector<2x256xf32>
    %c237_i32 = arith.constant 237 : i32
    %523 = tpu.dynamic_rotate %46 by %c237_i32 dim 1 : vector<4x256xf32>, i32 -> vector<4x256xf32>
    %c0_189 = arith.constant 0 : index
    %c34 = arith.constant 34 : index
    %524 = memref.load %arg5[%c0_189, %c34] : memref<2x49xf32, #tpu.memory_space<smem>>
    %c1_190 = arith.constant 1 : index
    %c34_191 = arith.constant 34 : index
    %525 = memref.load %arg5[%c1_190, %c34_191] : memref<2x49xf32, #tpu.memory_space<smem>>
    %526 = vector.extract_strided_slice %523 {offsets = [0, 0], sizes = [2, 256], strides = [1, 1]} : vector<4x256xf32> to vector<2x256xf32>
    %527 = vector.broadcast %524 : f32 to vector<2x256xf32>
    %528 = arith.mulf %527, %526 : vector<2x256xf32>
    %529 = vector.extract_strided_slice %523 {offsets = [2, 0], sizes = [2, 256], strides = [1, 1]} : vector<4x256xf32> to vector<2x256xf32>
    %530 = vector.broadcast %525 : f32 to vector<2x256xf32>
    %531 = arith.mulf %530, %529 : vector<2x256xf32>
    %532 = arith.addf %528, %531 : vector<2x256xf32>
    %c34_192 = arith.constant 34 : index
    %c0_193 = arith.constant 0 : index
    %533 = vector.load %arg4[%c34_192, %c0_193] : memref<49x256xf32, #tpu.memory_space<vmem>>, vector<1x256xf32>
    %534 = vector.broadcast %533 : vector<1x256xf32> to vector<2x256xf32>
    %535 = arith.mulf %532, %534 : vector<2x256xf32>
    %536 = arith.addf %522, %535 : vector<2x256xf32>
    %c227_i32 = arith.constant 227 : i32
    %537 = tpu.dynamic_rotate %46 by %c227_i32 dim 1 : vector<4x256xf32>, i32 -> vector<4x256xf32>
    %c0_194 = arith.constant 0 : index
    %c35 = arith.constant 35 : index
    %538 = memref.load %arg5[%c0_194, %c35] : memref<2x49xf32, #tpu.memory_space<smem>>
    %c1_195 = arith.constant 1 : index
    %c35_196 = arith.constant 35 : index
    %539 = memref.load %arg5[%c1_195, %c35_196] : memref<2x49xf32, #tpu.memory_space<smem>>
    %540 = vector.extract_strided_slice %537 {offsets = [0, 0], sizes = [2, 256], strides = [1, 1]} : vector<4x256xf32> to vector<2x256xf32>
    %541 = vector.broadcast %538 : f32 to vector<2x256xf32>
    %542 = arith.mulf %541, %540 : vector<2x256xf32>
    %543 = vector.extract_strided_slice %537 {offsets = [2, 0], sizes = [2, 256], strides = [1, 1]} : vector<4x256xf32> to vector<2x256xf32>
    %544 = vector.broadcast %539 : f32 to vector<2x256xf32>
    %545 = arith.mulf %544, %543 : vector<2x256xf32>
    %546 = arith.addf %542, %545 : vector<2x256xf32>
    %c35_197 = arith.constant 35 : index
    %c0_198 = arith.constant 0 : index
    %547 = vector.load %arg4[%c35_197, %c0_198] : memref<49x256xf32, #tpu.memory_space<vmem>>, vector<1x256xf32>
    %548 = vector.broadcast %547 : vector<1x256xf32> to vector<2x256xf32>
    %549 = arith.mulf %546, %548 : vector<2x256xf32>
    %550 = arith.addf %536, %549 : vector<2x256xf32>
    %c226_i32 = arith.constant 226 : i32
    %551 = tpu.dynamic_rotate %46 by %c226_i32 dim 1 : vector<4x256xf32>, i32 -> vector<4x256xf32>
    %c0_199 = arith.constant 0 : index
    %c36 = arith.constant 36 : index
    %552 = memref.load %arg5[%c0_199, %c36] : memref<2x49xf32, #tpu.memory_space<smem>>
    %c1_200 = arith.constant 1 : index
    %c36_201 = arith.constant 36 : index
    %553 = memref.load %arg5[%c1_200, %c36_201] : memref<2x49xf32, #tpu.memory_space<smem>>
    %554 = vector.extract_strided_slice %551 {offsets = [0, 0], sizes = [2, 256], strides = [1, 1]} : vector<4x256xf32> to vector<2x256xf32>
    %555 = vector.broadcast %552 : f32 to vector<2x256xf32>
    %556 = arith.mulf %555, %554 : vector<2x256xf32>
    %557 = vector.extract_strided_slice %551 {offsets = [2, 0], sizes = [2, 256], strides = [1, 1]} : vector<4x256xf32> to vector<2x256xf32>
    %558 = vector.broadcast %553 : f32 to vector<2x256xf32>
    %559 = arith.mulf %558, %557 : vector<2x256xf32>
    %560 = arith.addf %556, %559 : vector<2x256xf32>
    %c36_202 = arith.constant 36 : index
    %c0_203 = arith.constant 0 : index
    %561 = vector.load %arg4[%c36_202, %c0_203] : memref<49x256xf32, #tpu.memory_space<vmem>>, vector<1x256xf32>
    %562 = vector.broadcast %561 : vector<1x256xf32> to vector<2x256xf32>
    %563 = arith.mulf %560, %562 : vector<2x256xf32>
    %564 = arith.addf %550, %563 : vector<2x256xf32>
    %c225_i32 = arith.constant 225 : i32
    %565 = tpu.dynamic_rotate %46 by %c225_i32 dim 1 : vector<4x256xf32>, i32 -> vector<4x256xf32>
    %c0_204 = arith.constant 0 : index
    %c37 = arith.constant 37 : index
    %566 = memref.load %arg5[%c0_204, %c37] : memref<2x49xf32, #tpu.memory_space<smem>>
    %c1_205 = arith.constant 1 : index
    %c37_206 = arith.constant 37 : index
    %567 = memref.load %arg5[%c1_205, %c37_206] : memref<2x49xf32, #tpu.memory_space<smem>>
    %568 = vector.extract_strided_slice %565 {offsets = [0, 0], sizes = [2, 256], strides = [1, 1]} : vector<4x256xf32> to vector<2x256xf32>
    %569 = vector.broadcast %566 : f32 to vector<2x256xf32>
    %570 = arith.mulf %569, %568 : vector<2x256xf32>
    %571 = vector.extract_strided_slice %565 {offsets = [2, 0], sizes = [2, 256], strides = [1, 1]} : vector<4x256xf32> to vector<2x256xf32>
    %572 = vector.broadcast %567 : f32 to vector<2x256xf32>
    %573 = arith.mulf %572, %571 : vector<2x256xf32>
    %574 = arith.addf %570, %573 : vector<2x256xf32>
    %c37_207 = arith.constant 37 : index
    %c0_208 = arith.constant 0 : index
    %575 = vector.load %arg4[%c37_207, %c0_208] : memref<49x256xf32, #tpu.memory_space<vmem>>, vector<1x256xf32>
    %576 = vector.broadcast %575 : vector<1x256xf32> to vector<2x256xf32>
    %577 = arith.mulf %574, %576 : vector<2x256xf32>
    %578 = arith.addf %564, %577 : vector<2x256xf32>
    %c224_i32 = arith.constant 224 : i32
    %579 = tpu.dynamic_rotate %46 by %c224_i32 dim 1 : vector<4x256xf32>, i32 -> vector<4x256xf32>
    %c0_209 = arith.constant 0 : index
    %c38 = arith.constant 38 : index
    %580 = memref.load %arg5[%c0_209, %c38] : memref<2x49xf32, #tpu.memory_space<smem>>
    %c1_210 = arith.constant 1 : index
    %c38_211 = arith.constant 38 : index
    %581 = memref.load %arg5[%c1_210, %c38_211] : memref<2x49xf32, #tpu.memory_space<smem>>
    %582 = vector.extract_strided_slice %579 {offsets = [0, 0], sizes = [2, 256], strides = [1, 1]} : vector<4x256xf32> to vector<2x256xf32>
    %583 = vector.broadcast %580 : f32 to vector<2x256xf32>
    %584 = arith.mulf %583, %582 : vector<2x256xf32>
    %585 = vector.extract_strided_slice %579 {offsets = [2, 0], sizes = [2, 256], strides = [1, 1]} : vector<4x256xf32> to vector<2x256xf32>
    %586 = vector.broadcast %581 : f32 to vector<2x256xf32>
    %587 = arith.mulf %586, %585 : vector<2x256xf32>
    %588 = arith.addf %584, %587 : vector<2x256xf32>
    %c38_212 = arith.constant 38 : index
    %c0_213 = arith.constant 0 : index
    %589 = vector.load %arg4[%c38_212, %c0_213] : memref<49x256xf32, #tpu.memory_space<vmem>>, vector<1x256xf32>
    %590 = vector.broadcast %589 : vector<1x256xf32> to vector<2x256xf32>
    %591 = arith.mulf %588, %590 : vector<2x256xf32>
    %592 = arith.addf %578, %591 : vector<2x256xf32>
    %c223_i32 = arith.constant 223 : i32
    %593 = tpu.dynamic_rotate %46 by %c223_i32 dim 1 : vector<4x256xf32>, i32 -> vector<4x256xf32>
    %c0_214 = arith.constant 0 : index
    %c39 = arith.constant 39 : index
    %594 = memref.load %arg5[%c0_214, %c39] : memref<2x49xf32, #tpu.memory_space<smem>>
    %c1_215 = arith.constant 1 : index
    %c39_216 = arith.constant 39 : index
    %595 = memref.load %arg5[%c1_215, %c39_216] : memref<2x49xf32, #tpu.memory_space<smem>>
    %596 = vector.extract_strided_slice %593 {offsets = [0, 0], sizes = [2, 256], strides = [1, 1]} : vector<4x256xf32> to vector<2x256xf32>
    %597 = vector.broadcast %594 : f32 to vector<2x256xf32>
    %598 = arith.mulf %597, %596 : vector<2x256xf32>
    %599 = vector.extract_strided_slice %593 {offsets = [2, 0], sizes = [2, 256], strides = [1, 1]} : vector<4x256xf32> to vector<2x256xf32>
    %600 = vector.broadcast %595 : f32 to vector<2x256xf32>
    %601 = arith.mulf %600, %599 : vector<2x256xf32>
    %602 = arith.addf %598, %601 : vector<2x256xf32>
    %c39_217 = arith.constant 39 : index
    %c0_218 = arith.constant 0 : index
    %603 = vector.load %arg4[%c39_217, %c0_218] : memref<49x256xf32, #tpu.memory_space<vmem>>, vector<1x256xf32>
    %604 = vector.broadcast %603 : vector<1x256xf32> to vector<2x256xf32>
    %605 = arith.mulf %602, %604 : vector<2x256xf32>
    %606 = arith.addf %592, %605 : vector<2x256xf32>
    %c222_i32 = arith.constant 222 : i32
    %607 = tpu.dynamic_rotate %46 by %c222_i32 dim 1 : vector<4x256xf32>, i32 -> vector<4x256xf32>
    %c0_219 = arith.constant 0 : index
    %c40 = arith.constant 40 : index
    %608 = memref.load %arg5[%c0_219, %c40] : memref<2x49xf32, #tpu.memory_space<smem>>
    %c1_220 = arith.constant 1 : index
    %c40_221 = arith.constant 40 : index
    %609 = memref.load %arg5[%c1_220, %c40_221] : memref<2x49xf32, #tpu.memory_space<smem>>
    %610 = vector.extract_strided_slice %607 {offsets = [0, 0], sizes = [2, 256], strides = [1, 1]} : vector<4x256xf32> to vector<2x256xf32>
    %611 = vector.broadcast %608 : f32 to vector<2x256xf32>
    %612 = arith.mulf %611, %610 : vector<2x256xf32>
    %613 = vector.extract_strided_slice %607 {offsets = [2, 0], sizes = [2, 256], strides = [1, 1]} : vector<4x256xf32> to vector<2x256xf32>
    %614 = vector.broadcast %609 : f32 to vector<2x256xf32>
    %615 = arith.mulf %614, %613 : vector<2x256xf32>
    %616 = arith.addf %612, %615 : vector<2x256xf32>
    %c40_222 = arith.constant 40 : index
    %c0_223 = arith.constant 0 : index
    %617 = vector.load %arg4[%c40_222, %c0_223] : memref<49x256xf32, #tpu.memory_space<vmem>>, vector<1x256xf32>
    %618 = vector.broadcast %617 : vector<1x256xf32> to vector<2x256xf32>
    %619 = arith.mulf %616, %618 : vector<2x256xf32>
    %620 = arith.addf %606, %619 : vector<2x256xf32>
    %c221_i32 = arith.constant 221 : i32
    %621 = tpu.dynamic_rotate %46 by %c221_i32 dim 1 : vector<4x256xf32>, i32 -> vector<4x256xf32>
    %c0_224 = arith.constant 0 : index
    %c41 = arith.constant 41 : index
    %622 = memref.load %arg5[%c0_224, %c41] : memref<2x49xf32, #tpu.memory_space<smem>>
    %c1_225 = arith.constant 1 : index
    %c41_226 = arith.constant 41 : index
    %623 = memref.load %arg5[%c1_225, %c41_226] : memref<2x49xf32, #tpu.memory_space<smem>>
    %624 = vector.extract_strided_slice %621 {offsets = [0, 0], sizes = [2, 256], strides = [1, 1]} : vector<4x256xf32> to vector<2x256xf32>
    %625 = vector.broadcast %622 : f32 to vector<2x256xf32>
    %626 = arith.mulf %625, %624 : vector<2x256xf32>
    %627 = vector.extract_strided_slice %621 {offsets = [2, 0], sizes = [2, 256], strides = [1, 1]} : vector<4x256xf32> to vector<2x256xf32>
    %628 = vector.broadcast %623 : f32 to vector<2x256xf32>
    %629 = arith.mulf %628, %627 : vector<2x256xf32>
    %630 = arith.addf %626, %629 : vector<2x256xf32>
    %c41_227 = arith.constant 41 : index
    %c0_228 = arith.constant 0 : index
    %631 = vector.load %arg4[%c41_227, %c0_228] : memref<49x256xf32, #tpu.memory_space<vmem>>, vector<1x256xf32>
    %632 = vector.broadcast %631 : vector<1x256xf32> to vector<2x256xf32>
    %633 = arith.mulf %630, %632 : vector<2x256xf32>
    %634 = arith.addf %620, %633 : vector<2x256xf32>
    %c211_i32 = arith.constant 211 : i32
    %635 = tpu.dynamic_rotate %46 by %c211_i32 dim 1 : vector<4x256xf32>, i32 -> vector<4x256xf32>
    %c0_229 = arith.constant 0 : index
    %c42 = arith.constant 42 : index
    %636 = memref.load %arg5[%c0_229, %c42] : memref<2x49xf32, #tpu.memory_space<smem>>
    %c1_230 = arith.constant 1 : index
    %c42_231 = arith.constant 42 : index
    %637 = memref.load %arg5[%c1_230, %c42_231] : memref<2x49xf32, #tpu.memory_space<smem>>
    %638 = vector.extract_strided_slice %635 {offsets = [0, 0], sizes = [2, 256], strides = [1, 1]} : vector<4x256xf32> to vector<2x256xf32>
    %639 = vector.broadcast %636 : f32 to vector<2x256xf32>
    %640 = arith.mulf %639, %638 : vector<2x256xf32>
    %641 = vector.extract_strided_slice %635 {offsets = [2, 0], sizes = [2, 256], strides = [1, 1]} : vector<4x256xf32> to vector<2x256xf32>
    %642 = vector.broadcast %637 : f32 to vector<2x256xf32>
    %643 = arith.mulf %642, %641 : vector<2x256xf32>
    %644 = arith.addf %640, %643 : vector<2x256xf32>
    %c42_232 = arith.constant 42 : index
    %c0_233 = arith.constant 0 : index
    %645 = vector.load %arg4[%c42_232, %c0_233] : memref<49x256xf32, #tpu.memory_space<vmem>>, vector<1x256xf32>
    %646 = vector.broadcast %645 : vector<1x256xf32> to vector<2x256xf32>
    %647 = arith.mulf %644, %646 : vector<2x256xf32>
    %648 = arith.addf %634, %647 : vector<2x256xf32>
    %c210_i32 = arith.constant 210 : i32
    %649 = tpu.dynamic_rotate %46 by %c210_i32 dim 1 : vector<4x256xf32>, i32 -> vector<4x256xf32>
    %c0_234 = arith.constant 0 : index
    %c43 = arith.constant 43 : index
    %650 = memref.load %arg5[%c0_234, %c43] : memref<2x49xf32, #tpu.memory_space<smem>>
    %c1_235 = arith.constant 1 : index
    %c43_236 = arith.constant 43 : index
    %651 = memref.load %arg5[%c1_235, %c43_236] : memref<2x49xf32, #tpu.memory_space<smem>>
    %652 = vector.extract_strided_slice %649 {offsets = [0, 0], sizes = [2, 256], strides = [1, 1]} : vector<4x256xf32> to vector<2x256xf32>
    %653 = vector.broadcast %650 : f32 to vector<2x256xf32>
    %654 = arith.mulf %653, %652 : vector<2x256xf32>
    %655 = vector.extract_strided_slice %649 {offsets = [2, 0], sizes = [2, 256], strides = [1, 1]} : vector<4x256xf32> to vector<2x256xf32>
    %656 = vector.broadcast %651 : f32 to vector<2x256xf32>
    %657 = arith.mulf %656, %655 : vector<2x256xf32>
    %658 = arith.addf %654, %657 : vector<2x256xf32>
    %c43_237 = arith.constant 43 : index
    %c0_238 = arith.constant 0 : index
    %659 = vector.load %arg4[%c43_237, %c0_238] : memref<49x256xf32, #tpu.memory_space<vmem>>, vector<1x256xf32>
    %660 = vector.broadcast %659 : vector<1x256xf32> to vector<2x256xf32>
    %661 = arith.mulf %658, %660 : vector<2x256xf32>
    %662 = arith.addf %648, %661 : vector<2x256xf32>
    %c209_i32 = arith.constant 209 : i32
    %663 = tpu.dynamic_rotate %46 by %c209_i32 dim 1 : vector<4x256xf32>, i32 -> vector<4x256xf32>
    %c0_239 = arith.constant 0 : index
    %c44 = arith.constant 44 : index
    %664 = memref.load %arg5[%c0_239, %c44] : memref<2x49xf32, #tpu.memory_space<smem>>
    %c1_240 = arith.constant 1 : index
    %c44_241 = arith.constant 44 : index
    %665 = memref.load %arg5[%c1_240, %c44_241] : memref<2x49xf32, #tpu.memory_space<smem>>
    %666 = vector.extract_strided_slice %663 {offsets = [0, 0], sizes = [2, 256], strides = [1, 1]} : vector<4x256xf32> to vector<2x256xf32>
    %667 = vector.broadcast %664 : f32 to vector<2x256xf32>
    %668 = arith.mulf %667, %666 : vector<2x256xf32>
    %669 = vector.extract_strided_slice %663 {offsets = [2, 0], sizes = [2, 256], strides = [1, 1]} : vector<4x256xf32> to vector<2x256xf32>
    %670 = vector.broadcast %665 : f32 to vector<2x256xf32>
    %671 = arith.mulf %670, %669 : vector<2x256xf32>
    %672 = arith.addf %668, %671 : vector<2x256xf32>
    %c44_242 = arith.constant 44 : index
    %c0_243 = arith.constant 0 : index
    %673 = vector.load %arg4[%c44_242, %c0_243] : memref<49x256xf32, #tpu.memory_space<vmem>>, vector<1x256xf32>
    %674 = vector.broadcast %673 : vector<1x256xf32> to vector<2x256xf32>
    %675 = arith.mulf %672, %674 : vector<2x256xf32>
    %676 = arith.addf %662, %675 : vector<2x256xf32>
    %c208_i32 = arith.constant 208 : i32
    %677 = tpu.dynamic_rotate %46 by %c208_i32 dim 1 : vector<4x256xf32>, i32 -> vector<4x256xf32>
    %c0_244 = arith.constant 0 : index
    %c45 = arith.constant 45 : index
    %678 = memref.load %arg5[%c0_244, %c45] : memref<2x49xf32, #tpu.memory_space<smem>>
    %c1_245 = arith.constant 1 : index
    %c45_246 = arith.constant 45 : index
    %679 = memref.load %arg5[%c1_245, %c45_246] : memref<2x49xf32, #tpu.memory_space<smem>>
    %680 = vector.extract_strided_slice %677 {offsets = [0, 0], sizes = [2, 256], strides = [1, 1]} : vector<4x256xf32> to vector<2x256xf32>
    %681 = vector.broadcast %678 : f32 to vector<2x256xf32>
    %682 = arith.mulf %681, %680 : vector<2x256xf32>
    %683 = vector.extract_strided_slice %677 {offsets = [2, 0], sizes = [2, 256], strides = [1, 1]} : vector<4x256xf32> to vector<2x256xf32>
    %684 = vector.broadcast %679 : f32 to vector<2x256xf32>
    %685 = arith.mulf %684, %683 : vector<2x256xf32>
    %686 = arith.addf %682, %685 : vector<2x256xf32>
    %c45_247 = arith.constant 45 : index
    %c0_248 = arith.constant 0 : index
    %687 = vector.load %arg4[%c45_247, %c0_248] : memref<49x256xf32, #tpu.memory_space<vmem>>, vector<1x256xf32>
    %688 = vector.broadcast %687 : vector<1x256xf32> to vector<2x256xf32>
    %689 = arith.mulf %686, %688 : vector<2x256xf32>
    %690 = arith.addf %676, %689 : vector<2x256xf32>
    %c207_i32 = arith.constant 207 : i32
    %691 = tpu.dynamic_rotate %46 by %c207_i32 dim 1 : vector<4x256xf32>, i32 -> vector<4x256xf32>
    %c0_249 = arith.constant 0 : index
    %c46 = arith.constant 46 : index
    %692 = memref.load %arg5[%c0_249, %c46] : memref<2x49xf32, #tpu.memory_space<smem>>
    %c1_250 = arith.constant 1 : index
    %c46_251 = arith.constant 46 : index
    %693 = memref.load %arg5[%c1_250, %c46_251] : memref<2x49xf32, #tpu.memory_space<smem>>
    %694 = vector.extract_strided_slice %691 {offsets = [0, 0], sizes = [2, 256], strides = [1, 1]} : vector<4x256xf32> to vector<2x256xf32>
    %695 = vector.broadcast %692 : f32 to vector<2x256xf32>
    %696 = arith.mulf %695, %694 : vector<2x256xf32>
    %697 = vector.extract_strided_slice %691 {offsets = [2, 0], sizes = [2, 256], strides = [1, 1]} : vector<4x256xf32> to vector<2x256xf32>
    %698 = vector.broadcast %693 : f32 to vector<2x256xf32>
    %699 = arith.mulf %698, %697 : vector<2x256xf32>
    %700 = arith.addf %696, %699 : vector<2x256xf32>
    %c46_252 = arith.constant 46 : index
    %c0_253 = arith.constant 0 : index
    %701 = vector.load %arg4[%c46_252, %c0_253] : memref<49x256xf32, #tpu.memory_space<vmem>>, vector<1x256xf32>
    %702 = vector.broadcast %701 : vector<1x256xf32> to vector<2x256xf32>
    %703 = arith.mulf %700, %702 : vector<2x256xf32>
    %704 = arith.addf %690, %703 : vector<2x256xf32>
    %c206_i32 = arith.constant 206 : i32
    %705 = tpu.dynamic_rotate %46 by %c206_i32 dim 1 : vector<4x256xf32>, i32 -> vector<4x256xf32>
    %c0_254 = arith.constant 0 : index
    %c47 = arith.constant 47 : index
    %706 = memref.load %arg5[%c0_254, %c47] : memref<2x49xf32, #tpu.memory_space<smem>>
    %c1_255 = arith.constant 1 : index
    %c47_256 = arith.constant 47 : index
    %707 = memref.load %arg5[%c1_255, %c47_256] : memref<2x49xf32, #tpu.memory_space<smem>>
    %708 = vector.extract_strided_slice %705 {offsets = [0, 0], sizes = [2, 256], strides = [1, 1]} : vector<4x256xf32> to vector<2x256xf32>
    %709 = vector.broadcast %706 : f32 to vector<2x256xf32>
    %710 = arith.mulf %709, %708 : vector<2x256xf32>
    %711 = vector.extract_strided_slice %705 {offsets = [2, 0], sizes = [2, 256], strides = [1, 1]} : vector<4x256xf32> to vector<2x256xf32>
    %712 = vector.broadcast %707 : f32 to vector<2x256xf32>
    %713 = arith.mulf %712, %711 : vector<2x256xf32>
    %714 = arith.addf %710, %713 : vector<2x256xf32>
    %c47_257 = arith.constant 47 : index
    %c0_258 = arith.constant 0 : index
    %715 = vector.load %arg4[%c47_257, %c0_258] : memref<49x256xf32, #tpu.memory_space<vmem>>, vector<1x256xf32>
    %716 = vector.broadcast %715 : vector<1x256xf32> to vector<2x256xf32>
    %717 = arith.mulf %714, %716 : vector<2x256xf32>
    %718 = arith.addf %704, %717 : vector<2x256xf32>
    %c205_i32 = arith.constant 205 : i32
    %719 = tpu.dynamic_rotate %46 by %c205_i32 dim 1 : vector<4x256xf32>, i32 -> vector<4x256xf32>
    %c0_259 = arith.constant 0 : index
    %c48 = arith.constant 48 : index
    %720 = memref.load %arg5[%c0_259, %c48] : memref<2x49xf32, #tpu.memory_space<smem>>
    %c1_260 = arith.constant 1 : index
    %c48_261 = arith.constant 48 : index
    %721 = memref.load %arg5[%c1_260, %c48_261] : memref<2x49xf32, #tpu.memory_space<smem>>
    %722 = vector.extract_strided_slice %719 {offsets = [0, 0], sizes = [2, 256], strides = [1, 1]} : vector<4x256xf32> to vector<2x256xf32>
    %723 = vector.broadcast %720 : f32 to vector<2x256xf32>
    %724 = arith.mulf %723, %722 : vector<2x256xf32>
    %725 = vector.extract_strided_slice %719 {offsets = [2, 0], sizes = [2, 256], strides = [1, 1]} : vector<4x256xf32> to vector<2x256xf32>
    %726 = vector.broadcast %721 : f32 to vector<2x256xf32>
    %727 = arith.mulf %726, %725 : vector<2x256xf32>
    %728 = arith.addf %724, %727 : vector<2x256xf32>
    %c48_262 = arith.constant 48 : index
    %c0_263 = arith.constant 0 : index
    %729 = vector.load %arg4[%c48_262, %c0_263] : memref<49x256xf32, #tpu.memory_space<vmem>>, vector<1x256xf32>
    %730 = vector.broadcast %729 : vector<1x256xf32> to vector<2x256xf32>
    %731 = arith.mulf %728, %730 : vector<2x256xf32>
    %732 = arith.addf %718, %731 : vector<2x256xf32>
    %733 = arith.negf %732 : vector<2x256xf32>
    %734 = math.exp %733 : vector<2x256xf32>
    %cst_264 = arith.constant 1.000000e+00 : f32
    %735 = vector.broadcast %cst_264 : f32 to vector<2x256xf32>
    %736 = arith.addf %735, %734 : vector<2x256xf32>
    %737 = arith.divf %735, %736 : vector<2x256xf32>
    %738 = vector.extract_strided_slice %737 {offsets = [0, 0], sizes = [1, 256], strides = [1, 1]} : vector<2x256xf32> to vector<1x256xf32>
    %739 = vector.broadcast %738 : vector<1x256xf32> to vector<4x256xf32>
    %740 = arith.mulf %28, %739 : vector<4x256xf32>
    %c0_265 = arith.constant 0 : index
    %c0_266 = arith.constant 0 : index
    %c0_267 = arith.constant 0 : index
    %741 = vector.load %arg6[%c0_265, %c0_266, %c0_267] : memref<2x4x256xf32, #tpu.memory_space<vmem>>, vector<1x4x256xf32>
    %742 = vector.shape_cast %741 : vector<1x4x256xf32> to vector<4x256xf32>
    %743 = vector.shape_cast %740 : vector<4x256xf32> to vector<1x4x256xf32>
    tpu.vector_store %arg6[%c0_265, %c0_266, %c0_267], %743 {strides = array<i32>} : memref<2x4x256xf32, #tpu.memory_space<vmem>>, vector<1x4x256xf32>,
    %744 = vector.extract_strided_slice %737 {offsets = [1, 0], sizes = [1, 256], strides = [1, 1]} : vector<2x256xf32> to vector<1x256xf32>
    %745 = vector.broadcast %744 : vector<1x256xf32> to vector<4x256xf32>
    %746 = arith.mulf %33, %745 : vector<4x256xf32>
    %c1_268 = arith.constant 1 : index
    %c0_269 = arith.constant 0 : index
    %c0_270 = arith.constant 0 : index
    %747 = vector.load %arg6[%c1_268, %c0_269, %c0_270] : memref<2x4x256xf32, #tpu.memory_space<vmem>>, vector<1x4x256xf32>
    %748 = vector.shape_cast %747 : vector<1x4x256xf32> to vector<4x256xf32>
    %749 = vector.shape_cast %746 : vector<4x256xf32> to vector<1x4x256xf32>
    tpu.vector_store %arg6[%c1_268, %c0_269, %c0_270], %749 {strides = array<i32>} : memref<2x4x256xf32, #tpu.memory_space<vmem>>, vector<1x4x256xf32>,
    return
  }
  func.func @transform_0(%arg0: i32) -> (i32, i32, i32) {
    %c0_i32 = arith.constant 0 : i32
    %c0_i32_0 = arith.constant 0 : i32
    %c0_i32_1 = arith.constant 0 : i32
    return %arg0, %c0_i32, %c0_i32_0 : i32, i32, i32
  }
  func.func @transform_1(%arg0: i32) -> (i32, i32) {
    %c0_i32 = arith.constant 0 : i32
    %c0_i32_0 = arith.constant 0 : i32
    %c0_i32_1 = arith.constant 0 : i32
    return %c0_i32, %c0_i32_0 : i32, i32
  }
  func.func @transform_2(%arg0: i32) -> (i32, i32) {
    %c0_i32 = arith.constant 0 : i32
    %c0_i32_0 = arith.constant 0 : i32
    %c0_i32_1 = arith.constant 0 : i32
    return %c0_i32, %c0_i32_0 : i32, i32
  }
  func.func @transform_3(%arg0: i32) -> (i32, i32) {
    %c0_i32 = arith.constant 0 : i32
    %c0_i32_0 = arith.constant 0 : i32
    %c0_i32_1 = arith.constant 0 : i32
    return %c0_i32, %c0_i32_0 : i32, i32
  }
  func.func @transform_4(%arg0: i32) -> (i32, i32) {
    %c0_i32 = arith.constant 0 : i32
    %c0_i32_0 = arith.constant 0 : i32
    %c0_i32_1 = arith.constant 0 : i32
    return %c0_i32, %c0_i32_0 : i32, i32
  }
  func.func @transform_5(%arg0: i32) -> (i32, i32, i32) {
    %c0_i32 = arith.constant 0 : i32
    %c0_i32_0 = arith.constant 0 : i32
    %c0_i32_1 = arith.constant 0 : i32
    return %arg0, %c0_i32, %c0_i32_0 : i32, i32, i32
  }
}

</mosaic_0001>

<llo_original>
// kernel: tpu_custom_call.1
$region0: #{tpu_custom_call.1}
  #allocation0 [shape = 'u32[]', space=smem, size = 0x4, offset = 0x4, fixed_abs, tag = 'smem constant byte address 0x4 - core index']
  #allocation1 [shape = 'u32[144,128]{1,0:T(1,128)}', space=vmem, size = 0x12000, scoped, tag = 'internal scratch']
  %s0 = inlined_call_operand.hbm [shape: f32[2,4,256], index: 0, kind: input, shape index: {}]
  %s1 = inlined_call_operand.vmem [shape: f32[4,4], index: 1, kind: input, shape index: {}]
  %s2 = inlined_call_operand.vmem [shape: f32[4,1], index: 2, kind: input, shape index: {}]
  %s3 = inlined_call_operand.hbm [shape: f32[49,256], index: 3, kind: input, shape index: {}]
  %s4 = inlined_call_operand.vmem [shape: f32[2,49], index: 4, kind: input, shape index: {}]
  %s5 = inlined_call_operand.hbm [shape: f32[2,4,256], index: 5, kind: output, shape index: {}]
  %s6 = sld [smem:[#allocation0]]
  $region42: #{tpu_custom_call.1} parent=0
    _
  %s8 = ssub.s32 1, %s6
  %s9 = scalar_select 0, %s8, %s6
  $region1: #{tpu_custom_call.1} parent=0
    #allocation2 [shape = 'u8[8192]{0}', space=vmem, size = 0x2000, scoped, tag = 'input window, operand 0, single buffered']
    #allocation3 [shape = 's32[1]{0}', space=sflag, size = 0x4, scoped, tag = 'scoped memory for tpu_custom_call.1']
    #allocation4 [shape = 's32[1]{0}', space=sflag, size = 0x4, scoped, tag = 'scoped memory for tpu_custom_call.1']
    #allocation5 [shape = 's32[1]{0}', space=sflag, size = 0x4, scoped, tag = 'scoped memory for tpu_custom_call.1']
    #allocation6 [shape = 'u8[57344]{0}', space=vmem, size = 0xe000, scoped, tag = 'input window, operand 3, single buffered']
    #allocation7 [shape = 's32[1]{0}', space=sflag, size = 0x4, scoped, tag = 'scoped memory for tpu_custom_call.1']
    #allocation8 [shape = 'u8[1024]{0}', space=smem, size = 0x400, scoped, tag = 'input window, operand 4, single buffered']
    #allocation9 [shape = 'u8[8192]{0}', space=vmem, size = 0x2000, scoped, tag = 'output window, operand 0, single buffered']
    %10 = vsyncpa [#allocation3], 0
    %11 = vsyncpa [#allocation7], 0
    %12 = vsyncpa [#allocation5], 0
    %13 = vsyncpa [#allocation4], 0
    // Predicated region
    $region2: #{tpu_custom_call.1} parent=1 // pred_check
      _
    $region3: #{tpu_custom_call.1} parent=1 // pred_check_branch
      %15 = sbr.rel (0) target = $region5
    $region4: #{tpu_custom_call.1} parent=1 // pred_region
      %s17 = ssub.s32 256, 256
      %18 = vsyncadd [#allocation3], %s17
      %s19 = sshll.u32 [#allocation2], 4
      %s20 = int_to_ptr.vmem [resolvable:$true] %s19
      %25 = dma.hbm_to_vmem [thread:$0]  %s0, 256, %s20, [#allocation3], 128, 128, 8
    $region5: #{tpu_custom_call.1} parent=1 // pred_fallthru
      _
    // Predicated region
    $region6: #{tpu_custom_call.1} parent=1 // pred_check
      _
    $region7: #{tpu_custom_call.1} parent=1 // pred_check_branch
      %27 = sbr.rel (0) target = $region9
    $region8: #{tpu_custom_call.1} parent=1 // pred_region
      _
    $region9: #{tpu_custom_call.1} parent=1 // pred_fallthru
      _
    // Predicated region
    $region10: #{tpu_custom_call.1} parent=1 // pred_check
      _
    $region11: #{tpu_custom_call.1} parent=1 // pred_check_branch
      %29 = sbr.rel (0) target = $region13
    $region12: #{tpu_custom_call.1} parent=1 // pred_region
      _
    $region13: #{tpu_custom_call.1} parent=1 // pred_fallthru
      _
    // Predicated region
    $region14: #{tpu_custom_call.1} parent=1 // pred_check
      _
    $region15: #{tpu_custom_call.1} parent=1 // pred_check_branch
      %31 = sbr.rel (0) target = $region17
    $region16: #{tpu_custom_call.1} parent=1 // pred_region
      %s33 = ssub.s32 1792, 1792
      %34 = vsyncadd [#allocation7], %s33
      %s35 = sshll.u32 [#allocation6], 4
      %s36 = int_to_ptr.vmem [resolvable:$true] %s35
      %41 = dma.hbm_to_vmem [thread:$0]  %s3, 1792, %s36, [#allocation7], 256, 256, 16
    $region17: #{tpu_custom_call.1} parent=1 // pred_fallthru
      _
    // Predicated region
    $region18: #{tpu_custom_call.1} parent=1 // pred_check
      _
    $region19: #{tpu_custom_call.1} parent=1 // pred_check_branch
      %43 = sbr.rel (0) target = $region21
    $region20: #{tpu_custom_call.1} parent=1 // pred_region
      %s45 = ssub.s32 32, 32
      %46 = vsyncadd [#allocation5], %s45
      %s48 = sshll.u32 %s4, 4
      %s49 = int_to_ptr.vmem [resolvable:$true] %s48
      %51 = dma.vmem_to_smem %s49, 32, [#allocation8], [#allocation5]
    $region21: #{tpu_custom_call.1} parent=1 // pred_fallthru
      _
    // Predicated region
    $region22: #{tpu_custom_call.1} parent=1 // pred_check
      _
    $region23: #{tpu_custom_call.1} parent=1 // pred_check_branch
      %53 = sbr.rel (0) target = $region25
    $region24: #{tpu_custom_call.1} parent=1 // pred_region
      %54 = dma.done [#allocation3], 256
    $region25: #{tpu_custom_call.1} parent=1 // pred_fallthru
      _
    // Predicated region
    $region26: #{tpu_custom_call.1} parent=1 // pred_check
      _
    $region27: #{tpu_custom_call.1} parent=1 // pred_check_branch
      %56 = sbr.rel (0) target = $region29
    $region28: #{tpu_custom_call.1} parent=1 // pred_region
      %57 = dma.done [#allocation7], 1792
    $region29: #{tpu_custom_call.1} parent=1 // pred_fallthru
      _
    // Predicated region
    $region30: #{tpu_custom_call.1} parent=1 // pred_check
      _
    $region31: #{tpu_custom_call.1} parent=1 // pred_check_branch
      %59 = sbr.rel (0) target = $region33
    $region32: #{tpu_custom_call.1} parent=1 // pred_region
      %60 = dma.done [#allocation5], 32
    $region33: #{tpu_custom_call.1} parent=1 // pred_fallthru
      _
    %61 = sfence
    %v62 = vld [vmem:[#allocation2] sm:$0xff]
    %v63 = vld [vmem:[#allocation2 + $0x8] sm:$0xff]
    %v65 = vcombine.high %v62, %v62
    %vm67 = vcmask 1043456
    %v68 = vsel %vm67, %v62, 0.0
    %v69 = vsel %vm67, %v65, 0.0
    %v70 = vadd.f32 %v68, %v69
    %71 = vadd.xlane.f32.xlu0 %v70
    %v72 = vpop.xlane.xlu0 %71
    %v73 = vrcp.pop 256.0
    %v74 = vmul.f32 %v72, %v73
    %v76 = vcombine.high %v63, %v63
    %v78 = vsel %vm67, %v63, 0.0
    %v79 = vsel %vm67, %v76, 0.0
    %v80 = vadd.f32 %v78, %v79
    %81 = vadd.xlane.f32.xlu0 %v80
    %v82 = vpop.xlane.xlu0 %81
    %v83 = vmul.f32 %v82, %v73
    %vm84 = vcmask 7168
    %v85 = vsel %vm84, %v74, %v83
    %v86 = vld [vmem:[%s1] sm:$0xf]
    %v87 = vld [vmem:[%s2] sm:$0xf]
    %89 = vset.pattern.permute.xlu0 0
    %90 = vperm.xlu0 %89, %v87
    %v91 = vpop.permute.xlu0 %90
    %vm93 = vcmask 31744
    %v95 = vsel %vm93, %v86, 0
    %v98 = vsel %vm67, %v85, 0
    %100 = vmatprep.subr.mxu0 0.0
    %101 = vmatpush1.msra.mxu0 %v98
    %102 = vmatprep.subr.mxu0 0.0
    %103 = vmatpush1.msra.mxu0 0.0
    %104 = vmatprep.subr.mxu0 0.0
    %105 = vmatpush1.msra.mxu0 0.0
    %106 = vmatprep.subr.mxu0 0.0
    %107 = vmatpush1.msra.mxu0 0.0
    %108 = vmatprep.subr.mxu0 0.0
    %109 = vmatpush1.msra.mxu0 0.0
    %110 = vmatprep.subr.mxu0 0.0
    %111 = vmatpush1.msra.mxu0 0.0
    %112 = vmatprep.subr.mxu0 0.0
    %113 = vmatpush1.msra.mxu0 0.0
    %114 = vmatprep.subr.mxu0 0.0
    %115 = vmatpush1.msra.mxu0 0.0
    %116 = vmatprep.subr.mxu0 0.0
    %117 = vmatpush1.msra.mxu0 0.0
    %118 = vmatprep.subr.mxu0 0.0
    %119 = vmatpush1.msra.mxu0 0.0
    %120 = vmatprep.subr.mxu0 0.0
    %121 = vmatpush1.msra.mxu0 0.0
    %122 = vmatprep.subr.mxu0 0.0
    %123 = vmatpush1.msra.mxu0 0.0
    %124 = vmatprep.subr.mxu0 0.0
    %125 = vmatpush1.msra.mxu0 0.0
    %126 = vmatprep.subr.mxu0 0.0
    %127 = vmatpush1.msra.mxu0 0.0
    %128 = vmatprep.subr.mxu0 0.0
    %129 = vmatpush1.msra.mxu0 0.0
    %130 = vmatprep.subr.mxu0 0.0
    %131 = vmatpush1.msra.mxu0 0.0
    %132 = vmatprep.subr.mxu0 0.0
    %133 = vmatpush1.msra.mxu0 0.0
    %134 = vmatprep.subr.mxu0 0.0
    %135 = vmatpush1.msra.mxu0 0.0
    %136 = vmatprep.subr.mxu0 0.0
    %137 = vmatpush1.msra.mxu0 0.0
    %138 = vmatprep.subr.mxu0 0.0
    %139 = vmatpush1.msra.mxu0 0.0
    %140 = vmatprep.subr.mxu0 0.0
    %141 = vmatpush1.msra.mxu0 0.0
    %142 = vmatprep.subr.mxu0 0.0
    %143 = vmatpush1.msra.mxu0 0.0
    %144 = vmatprep.subr.mxu0 0.0
    %145 = vmatpush1.msra.mxu0 0.0
    %146 = vmatprep.subr.mxu0 0.0
    %147 = vmatpush1.msra.mxu0 0.0
    %148 = vmatprep.subr.mxu0 0.0
    %149 = vmatpush1.msra.mxu0 0.0
    %150 = vmatprep.subr.mxu0 0.0
    %151 = vmatpush1.msra.mxu0 0.0
    %152 = vmatprep.subr.mxu0 0.0
    %153 = vmatpush1.msra.mxu0 0.0
    %154 = vmatprep.subr.mxu0 0.0
    %155 = vmatpush1.msra.mxu0 0.0
    %156 = vmatprep.subr.mxu0 0.0
    %157 = vmatpush1.msra.mxu0 0.0
    %158 = vmatprep.subr.mxu0 0.0
    %159 = vmatpush1.msra.mxu0 0.0
    %160 = vmatprep.subr.mxu0 0.0
    %161 = vmatpush1.msra.mxu0 0.0
    %162 = vmatprep.subr.mxu0 0.0
    %163 = vmatpush1.msra.mxu0 0.0
    %164 = vmatprep.mubr.f32.mxu0 0.0
    %165 = vmatmul.mubr.f32.gmra.mrb[0].mxu0 %v95
    %v166 = vpop.f32.mrb[0].mxu0
    %v167 = vadd.f32 %v91, %v166
    %v168 = vpop.f32.mrb[0].mxu0
    %169 = vdwg.mxu0
    %v170 = vxor.u32 %v167, 2147483648
    %v171 = vmul.f32 %v170, 1.442695
    %v172 = vpow.pop %v171
    %v173 = vadd.f32 %v172, 1.0
    %v174 = vrcp.pop %v173
    %v175 = vmul.f32 1.0, %v174
    %177 = vset.pattern.permute.xlu0 0
    %178 = vperm.xlu0 %177, %v175
    %v179 = vpop.permute.xlu0 %178
    %v181 = vunpack.c.l.s4 839922192
    %v182 = vunpack.c.0.s8 %v181
    %v183 = vlaneseq
    %v184 = vshrl.u32 %v183, 7
    %v185 = vsub.s32 %v182, %v184
    %v186 = vrot.slane %v179, %v185
    %v188 = vmul.f32 %v62, %v186
    %189 = vset.pattern.permute.xlu0 1
    %190 = vperm.xlu0 %189, %v175
    %v191 = vpop.permute.xlu0 %190
    %v193 = vunpack.c.l.s4 839922192
    %v194 = vunpack.c.0.s8 %v193
    %v195 = vlaneseq
    %v196 = vshrl.u32 %v195, 7
    %v197 = vsub.s32 %v194, %v196
    %v198 = vrot.slane %v191, %v197
    %v200 = vmul.f32 %v63, %v198
    %v202 = vcombine.high %v188, %v188
    %v204 = vsel %vm67, %v188, 0.0
    %v205 = vrot.slane %v204, 4
    %v206 = vadd.f32 %v204, %v205
    %v207 = vrot.slane %v206, 2
    %v208 = vadd.f32 %v206, %v207
    %v209 = vrot.slane %v208, 1
    %v210 = vadd.f32 %v208, %v209
    %v211 = vsel %vm67, %v202, 0.0
    %v212 = vrot.slane %v211, 4
    %v213 = vadd.f32 %v211, %v212
    %v214 = vrot.slane %v213, 2
    %v215 = vadd.f32 %v213, %v214
    %v216 = vrot.slane %v215, 1
    %v217 = vadd.f32 %v215, %v216
    %v218 = vrcp.pop 4.0
    %v219 = vmul.f32 %v210, %v218
    %v220 = vmul.f32 %v217, %v218
    %v222 = vcombine.high %v200, %v200
    %v224 = vsel %vm67, %v200, 0.0
    %v225 = vrot.slane %v224, 4
    %v226 = vadd.f32 %v224, %v225
    %v227 = vrot.slane %v226, 2
    %v228 = vadd.f32 %v226, %v227
    %v229 = vrot.slane %v228, 1
    %v230 = vadd.f32 %v228, %v229
    %v231 = vsel %vm67, %v222, 0.0
    %v232 = vrot.slane %v231, 4
    %v233 = vadd.f32 %v231, %v232
    %v234 = vrot.slane %v233, 2
    %v235 = vadd.f32 %v233, %v234
    %v236 = vrot.slane %v235, 1
    %v237 = vadd.f32 %v235, %v236
    %v238 = vmul.f32 %v230, %v218
    %v239 = vmul.f32 %v237, %v218
    %v240 = vsel %vm67, %v188, -inf
    %v241 = vrot.slane %v240, 4
    %v242 = vmax.f32 %v240, %v241
    %v243 = vrot.slane %v242, 2
    %v244 = vmax.f32 %v242, %v243
    %v245 = vrot.slane %v244, 1
    %v246 = vmax.f32 %v244, %v245
    %v247 = vsel %vm67, %v202, -inf
    %v248 = vrot.slane %v247, 4
    %v249 = vmax.f32 %v247, %v248
    %v250 = vrot.slane %v249, 2
    %v251 = vmax.f32 %v249, %v250
    %v252 = vrot.slane %v251, 1
    %v253 = vmax.f32 %v251, %v252
    %v254 = vsel %vm67, %v200, -inf
    %v255 = vrot.slane %v254, 4
    %v256 = vmax.f32 %v254, %v255
    %v257 = vrot.slane %v256, 2
    %v258 = vmax.f32 %v256, %v257
    %v259 = vrot.slane %v258, 1
    %v260 = vmax.f32 %v258, %v259
    %v261 = vsel %vm67, %v222, -inf
    %v262 = vrot.slane %v261, 4
    %v263 = vmax.f32 %v261, %v262
    %v264 = vrot.slane %v263, 2
    %v265 = vmax.f32 %v263, %v264
    %v266 = vrot.slane %v265, 1
    %v267 = vmax.f32 %v265, %v266
    %vm268 = vcmask 1040384
    %v269 = vsel %vm268, %v219, %v238
    %v270 = vsel %vm268, %v220, %v239
    %vm271 = vcmask 1041408
    %v272 = vsel %vm271, %v269, %v246
    %v273 = vsel %vm271, %v270, %v253
    %vm274 = vcmask 1042432
    %v275 = vsel %vm274, %v272, %v260
    %v276 = vsel %vm274, %v273, %v267
    %277 = vrot.lane.b32.xlu0 %v275, 51
    %v278 = vpop.permute.xlu0 %277
    %279 = vrot.lane.b32.xlu0 %v276, 51
    %v280 = vpop.permute.xlu0 %279
    %v281 = vlaneseq
    %v282 = vand.u32 %v281, 127
    %vm283 = vcmp.lt.s32.totalorder %v282, 51
    %v284 = vsel %vm283, %v278, %v280
    %v285 = vsel %vm283, %v280, %v278
    %s286 = sld [smem:[#allocation8]]
    %s287 = sld [smem:[#allocation8 + $0x80]]
    %v288 = vstv %s286
    %v289 = vmul.f32 %v288, %v285
    %v290 = vmul.f32 %v288, %v284
    %v291 = vstv %s287
    %v292 = vmul.f32 %v291, %v285
    %v293 = vmul.f32 %v291, %v284
    %v296 = vrot.slane %v292, 2
    %v297 = vrot.slane %v293, 2
    %v300 = vadd.f32 %v289, %v296
    %v301 = vadd.f32 %v290, %v297
    %v302 = vld [vmem:[#allocation6] ss:$8 sm:$0x3]
    %v304 = vlaneseq
    %v305 = vshrl.u32 %v304, 7
    %v306 = vsub.s32 0, %v305
    %v307 = vrot.slane %v302, %v306
    %v308 = vlaneseq
    %v309 = vshrl.u32 %v308, 7
    %v310 = vsub.s32 1, %v309
    %v311 = vrot.slane %v302, %v310
    %v314 = vmul.f32 %v300, %v307
    %v315 = vmul.f32 %v301, %v311
    %v316 = vadd.f32 %v314, 0.0
    %v317 = vadd.f32 %v315, 0.0
    %318 = vrot.lane.b32.xlu0 %v275, 50
    %v319 = vpop.permute.xlu0 %318
    %320 = vrot.lane.b32.xlu0 %v276, 50
    %v321 = vpop.permute.xlu0 %320
    %vm322 = vcmp.lt.s32.totalorder %v282, 50
    %v323 = vsel %vm322, %v319, %v321
    %v324 = vsel %vm322, %v321, %v319
    %s325 = sld [smem:[#allocation8 + $0x1]]
    %s326 = sld [smem:[#allocation8 + $0x81]]
    %v327 = vstv %s325
    %v328 = vmul.f32 %v327, %v324
    %v329 = vmul.f32 %v327, %v323
    %v330 = vstv %s326
    %v331 = vmul.f32 %v330, %v324
    %v332 = vmul.f32 %v330, %v323
    %v335 = vrot.slane %v331, 2
    %v336 = vrot.slane %v332, 2
    %v339 = vadd.f32 %v328, %v335
    %v340 = vadd.f32 %v329, %v336
    %s341 = scalar_lea.vmem [#allocation6], 1
    %v342 = vld [vmem:[%s341] ss:$8 sm:$0x3]
    %v344 = vlaneseq
    %v345 = vshrl.u32 %v344, 7
    %v346 = vsub.s32 0, %v345
    %v347 = vrot.slane %v342, %v346
    %v348 = vlaneseq
    %v349 = vshrl.u32 %v348, 7
    %v350 = vsub.s32 1, %v349
    %v351 = vrot.slane %v342, %v350
    %v354 = vmul.f32 %v339, %v347
    %v355 = vmul.f32 %v340, %v351
    %v356 = vadd.f32 %v316, %v354
    %v357 = vadd.f32 %v317, %v355
    %358 = vrot.lane.b32.xlu0 %v275, 49
    %v359 = vpop.permute.xlu0 %358
    %360 = vrot.lane.b32.xlu0 %v276, 49
    %v361 = vpop.permute.xlu0 %360
    %vm362 = vcmp.lt.s32.totalorder %v282, 49
    %v363 = vsel %vm362, %v359, %v361
    %v364 = vsel %vm362, %v361, %v359
    %s365 = sld [smem:[#allocation8 + $0x2]]
    %s366 = sld [smem:[#allocation8 + $0x82]]
    %v367 = vstv %s365
    %v368 = vmul.f32 %v367, %v364
    %v369 = vmul.f32 %v367, %v363
    %v370 = vstv %s366
    %v371 = vmul.f32 %v370, %v364
    %v372 = vmul.f32 %v370, %v363
    %v375 = vrot.slane %v371, 2
    %v376 = vrot.slane %v372, 2
    %v379 = vadd.f32 %v368, %v375
    %v380 = vadd.f32 %v369, %v376
    %s381 = scalar_lea.vmem [#allocation6], 2
    %v382 = vld [vmem:[%s381] ss:$8 sm:$0x3]
    %v384 = vlaneseq
    %v385 = vshrl.u32 %v384, 7
    %v386 = vsub.s32 0, %v385
    %v387 = vrot.slane %v382, %v386
    %v388 = vlaneseq
    %v389 = vshrl.u32 %v388, 7
    %v390 = vsub.s32 1, %v389
    %v391 = vrot.slane %v382, %v390
    %v394 = vmul.f32 %v379, %v387
    %v395 = vmul.f32 %v380, %v391
    %v396 = vadd.f32 %v356, %v394
    %v397 = vadd.f32 %v357, %v395
    %398 = vrot.lane.b32.xlu0 %v275, 48
    %v399 = vpop.permute.xlu0 %398
    %400 = vrot.lane.b32.xlu0 %v276, 48
    %v401 = vpop.permute.xlu0 %400
    %vm402 = vcmp.lt.s32.totalorder %v282, 48
    %v403 = vsel %vm402, %v399, %v401
    %v404 = vsel %vm402, %v401, %v399
    %s405 = sld [smem:[#allocation8 + $0x3]]
    %s406 = sld [smem:[#allocation8 + $0x83]]
    %v407 = vstv %s405
    %v408 = vmul.f32 %v407, %v404
    %v409 = vmul.f32 %v407, %v403
    %v410 = vstv %s406
    %v411 = vmul.f32 %v410, %v404
    %v412 = vmul.f32 %v410, %v403
    %v415 = vrot.slane %v411, 2
    %v416 = vrot.slane %v412, 2
    %v419 = vadd.f32 %v408, %v415
    %v420 = vadd.f32 %v409, %v416
    %s421 = scalar_lea.vmem [#allocation6], 3
    %v422 = vld [vmem:[%s421] ss:$8 sm:$0x3]
    %v424 = vlaneseq
    %v425 = vshrl.u32 %v424, 7
    %v426 = vsub.s32 0, %v425
    %v427 = vrot.slane %v422, %v426
    %v428 = vlaneseq
    %v429 = vshrl.u32 %v428, 7
    %v430 = vsub.s32 1, %v429
    %v431 = vrot.slane %v422, %v430
    %v434 = vmul.f32 %v419, %v427
    %v435 = vmul.f32 %v420, %v431
    %v436 = vadd.f32 %v396, %v434
    %v437 = vadd.f32 %v397, %v435
    %438 = vrot.lane.b32.xlu0 %v275, 47
    %v439 = vpop.permute.xlu0 %438
    %440 = vrot.lane.b32.xlu0 %v276, 47
    %v441 = vpop.permute.xlu0 %440
    %vm442 = vcmp.lt.s32.totalorder %v282, 47
    %v443 = vsel %vm442, %v439, %v441
    %v444 = vsel %vm442, %v441, %v439
    %s445 = sld [smem:[#allocation8 + $0x4]]
    %s446 = sld [smem:[#allocation8 + $0x84]]
    %v447 = vstv %s445
    %v448 = vmul.f32 %v447, %v444
    %v449 = vmul.f32 %v447, %v443
    %v450 = vstv %s446
    %v451 = vmul.f32 %v450, %v444
    %v452 = vmul.f32 %v450, %v443
    %v455 = vrot.slane %v451, 2
    %v456 = vrot.slane %v452, 2
    %v459 = vadd.f32 %v448, %v455
    %v460 = vadd.f32 %v449, %v456
    %s461 = scalar_lea.vmem [#allocation6], 4
    %v462 = vld [vmem:[%s461] ss:$8 sm:$0x3]
    %v464 = vlaneseq
    %v465 = vshrl.u32 %v464, 7
    %v466 = vsub.s32 0, %v465
    %v467 = vrot.slane %v462, %v466
    %v468 = vlaneseq
    %v469 = vshrl.u32 %v468, 7
    %v470 = vsub.s32 1, %v469
    %v471 = vrot.slane %v462, %v470
    %v474 = vmul.f32 %v459, %v467
    %v475 = vmul.f32 %v460, %v471
    %v476 = vadd.f32 %v436, %v474
    %v477 = vadd.f32 %v437, %v475
    %478 = vrot.lane.b32.xlu0 %v275, 46
    %v479 = vpop.permute.xlu0 %478
    %480 = vrot.lane.b32.xlu0 %v276, 46
    %v481 = vpop.permute.xlu0 %480
    %vm482 = vcmp.lt.s32.totalorder %v282, 46
    %v483 = vsel %vm482, %v479, %v481
    %v484 = vsel %vm482, %v481, %v479
    %s485 = sld [smem:[#allocation8 + $0x5]]
    %s486 = sld [smem:[#allocation8 + $0x85]]
    %v487 = vstv %s485
    %v488 = vmul.f32 %v487, %v484
    %v489 = vmul.f32 %v487, %v483
    %v490 = vstv %s486
    %v491 = vmul.f32 %v490, %v484
    %v492 = vmul.f32 %v490, %v483
    %v495 = vrot.slane %v491, 2
    %v496 = vrot.slane %v492, 2
    %v499 = vadd.f32 %v488, %v495
    %v500 = vadd.f32 %v489, %v496
    %s501 = scalar_lea.vmem [#allocation6], 5
    %v502 = vld [vmem:[%s501] ss:$8 sm:$0x3]
    %v504 = vlaneseq
    %v505 = vshrl.u32 %v504, 7
    %v506 = vsub.s32 0, %v505
    %v507 = vrot.slane %v502, %v506
    %v508 = vlaneseq
    %v509 = vshrl.u32 %v508, 7
    %v510 = vsub.s32 1, %v509
    %v511 = vrot.slane %v502, %v510
    %v514 = vmul.f32 %v499, %v507
    %v515 = vmul.f32 %v500, %v511
    %v516 = vadd.f32 %v476, %v514
    %v517 = vadd.f32 %v477, %v515
    %518 = vrot.lane.b32.xlu0 %v275, 45
    %v519 = vpop.permute.xlu0 %518
    %520 = vrot.lane.b32.xlu0 %v276, 45
    %v521 = vpop.permute.xlu0 %520
    %vm522 = vcmp.lt.s32.totalorder %v282, 45
    %v523 = vsel %vm522, %v519, %v521
    %v524 = vsel %vm522, %v521, %v519
    %s525 = sld [smem:[#allocation8 + $0x6]]
    %s526 = sld [smem:[#allocation8 + $0x86]]
    %v527 = vstv %s525
    %v528 = vmul.f32 %v527, %v524
    %v529 = vmul.f32 %v527, %v523
    %v530 = vstv %s526
    %v531 = vmul.f32 %v530, %v524
    %v532 = vmul.f32 %v530, %v523
    %v535 = vrot.slane %v531, 2
    %v536 = vrot.slane %v532, 2
    %v539 = vadd.f32 %v528, %v535
    %v540 = vadd.f32 %v529, %v536
    %s541 = scalar_lea.vmem [#allocation6], 6
    %v542 = vld [vmem:[%s541] ss:$8 sm:$0x3]
    %v544 = vlaneseq
    %v545 = vshrl.u32 %v544, 7
    %v546 = vsub.s32 0, %v545
    %v547 = vrot.slane %v542, %v546
    %v548 = vlaneseq
    %v549 = vshrl.u32 %v548, 7
    %v550 = vsub.s32 1, %v549
    %v551 = vrot.slane %v542, %v550
    %v554 = vmul.f32 %v539, %v547
    %v555 = vmul.f32 %v540, %v551
    %v556 = vadd.f32 %v516, %v554
    %v557 = vadd.f32 %v517, %v555
    %558 = vrot.lane.b32.xlu0 %v275, 35
    %v559 = vpop.permute.xlu0 %558
    %560 = vrot.lane.b32.xlu0 %v276, 35
    %v561 = vpop.permute.xlu0 %560
    %vm562 = vcmp.lt.s32.totalorder %v282, 35
    %v563 = vsel %vm562, %v559, %v561
    %v564 = vsel %vm562, %v561, %v559
    %s565 = sld [smem:[#allocation8 + $0x7]]
    %s566 = sld [smem:[#allocation8 + $0x87]]
    %v567 = vstv %s565
    %v568 = vmul.f32 %v567, %v564
    %v569 = vmul.f32 %v567, %v563
    %v570 = vstv %s566
    %v571 = vmul.f32 %v570, %v564
    %v572 = vmul.f32 %v570, %v563
    %v575 = vrot.slane %v571, 2
    %v576 = vrot.slane %v572, 2
    %v579 = vadd.f32 %v568, %v575
    %v580 = vadd.f32 %v569, %v576
    %s581 = scalar_lea.vmem [#allocation6], 7
    %v582 = vld [vmem:[%s581] ss:$8 sm:$0x3]
    %v584 = vlaneseq
    %v585 = vshrl.u32 %v584, 7
    %v586 = vsub.s32 0, %v585
    %v587 = vrot.slane %v582, %v586
    %v588 = vlaneseq
    %v589 = vshrl.u32 %v588, 7
    %v590 = vsub.s32 1, %v589
    %v591 = vrot.slane %v582, %v590
    %v594 = vmul.f32 %v579, %v587
    %v595 = vmul.f32 %v580, %v591
    %v596 = vadd.f32 %v556, %v594
    %v597 = vadd.f32 %v557, %v595
    %598 = vrot.lane.b32.xlu0 %v275, 34
    %v599 = vpop.permute.xlu0 %598
    %600 = vrot.lane.b32.xlu0 %v276, 34
    %v601 = vpop.permute.xlu0 %600
    %vm602 = vcmp.lt.s32.totalorder %v282, 34
    %v603 = vsel %vm602, %v599, %v601
    %v604 = vsel %vm602, %v601, %v599
    %s605 = sld [smem:[#allocation8 + $0x8]]
    %s606 = sld [smem:[#allocation8 + $0x88]]
    %v607 = vstv %s605
    %v608 = vmul.f32 %v607, %v604
    %v609 = vmul.f32 %v607, %v603
    %v610 = vstv %s606
    %v611 = vmul.f32 %v610, %v604
    %v612 = vmul.f32 %v610, %v603
    %v615 = vrot.slane %v611, 2
    %v616 = vrot.slane %v612, 2
    %v619 = vadd.f32 %v608, %v615
    %v620 = vadd.f32 %v609, %v616
    %s621 = scalar_lea.vmem [#allocation6], 16
    %v622 = vld [vmem:[%s621] ss:$8 sm:$0x3]
    %v624 = vlaneseq
    %v625 = vshrl.u32 %v624, 7
    %v626 = vsub.s32 0, %v625
    %v627 = vrot.slane %v622, %v626
    %v628 = vlaneseq
    %v629 = vshrl.u32 %v628, 7
    %v630 = vsub.s32 1, %v629
    %v631 = vrot.slane %v622, %v630
    %v634 = vmul.f32 %v619, %v627
    %v635 = vmul.f32 %v620, %v631
    %v636 = vadd.f32 %v596, %v634
    %v637 = vadd.f32 %v597, %v635
    %638 = vrot.lane.b32.xlu0 %v275, 33
    %v639 = vpop.permute.xlu0 %638
    %640 = vrot.lane.b32.xlu0 %v276, 33
    %v641 = vpop.permute.xlu0 %640
    %vm642 = vcmp.lt.s32.totalorder %v282, 33
    %v643 = vsel %vm642, %v639, %v641
    %v644 = vsel %vm642, %v641, %v639
    %s645 = sld [smem:[#allocation8 + $0x9]]
    %s646 = sld [smem:[#allocation8 + $0x89]]
    %v647 = vstv %s645
    %v648 = vmul.f32 %v647, %v644
    %v649 = vmul.f32 %v647, %v643
    %v650 = vstv %s646
    %v651 = vmul.f32 %v650, %v644
    %v652 = vmul.f32 %v650, %v643
    %v655 = vrot.slane %v651, 2
    %v656 = vrot.slane %v652, 2
    %v659 = vadd.f32 %v648, %v655
    %v660 = vadd.f32 %v649, %v656
    %s661 = scalar_lea.vmem [#allocation6], 17
    %v662 = vld [vmem:[%s661] ss:$8 sm:$0x3]
    %v664 = vlaneseq
    %v665 = vshrl.u32 %v664, 7
    %v666 = vsub.s32 0, %v665
    %v667 = vrot.slane %v662, %v666
    %v668 = vlaneseq
    %v669 = vshrl.u32 %v668, 7
    %v670 = vsub.s32 1, %v669
    %v671 = vrot.slane %v662, %v670
    %v674 = vmul.f32 %v659, %v667
    %v675 = vmul.f32 %v660, %v671
    %v676 = vadd.f32 %v636, %v674
    %v677 = vadd.f32 %v637, %v675
    %678 = vrot.lane.b32.xlu0 %v275, 32
    %v679 = vpop.permute.xlu0 %678
    %680 = vrot.lane.b32.xlu0 %v276, 32
    %v681 = vpop.permute.xlu0 %680
    %vm682 = vcmp.lt.s32.totalorder %v282, 32
    %v683 = vsel %vm682, %v679, %v681
    %v684 = vsel %vm682, %v681, %v679
    %s685 = sld [smem:[#allocation8 + $0xa]]
    %s686 = sld [smem:[#allocation8 + $0x8a]]
    %v687 = vstv %s685
    %v688 = vmul.f32 %v687, %v684
    %v689 = vmul.f32 %v687, %v683
    %v690 = vstv %s686
    %v691 = vmul.f32 %v690, %v684
    %v692 = vmul.f32 %v690, %v683
    %v695 = vrot.slane %v691, 2
    %v696 = vrot.slane %v692, 2
    %v699 = vadd.f32 %v688, %v695
    %v700 = vadd.f32 %v689, %v696
    %s701 = scalar_lea.vmem [#allocation6], 18
    %v702 = vld [vmem:[%s701] ss:$8 sm:$0x3]
    %v704 = vlaneseq
    %v705 = vshrl.u32 %v704, 7
    %v706 = vsub.s32 0, %v705
    %v707 = vrot.slane %v702, %v706
    %v708 = vlaneseq
    %v709 = vshrl.u32 %v708, 7
    %v710 = vsub.s32 1, %v709
    %v711 = vrot.slane %v702, %v710
    %v714 = vmul.f32 %v699, %v707
    %v715 = vmul.f32 %v700, %v711
    %v716 = vadd.f32 %v676, %v714
    %v717 = vadd.f32 %v677, %v715
    %718 = vrot.lane.b32.xlu0 %v275, 31
    %v719 = vpop.permute.xlu0 %718
    %720 = vrot.lane.b32.xlu0 %v276, 31
    %v721 = vpop.permute.xlu0 %720
    %vm722 = vcmp.lt.s32.totalorder %v282, 31
    %v723 = vsel %vm722, %v719, %v721
    %v724 = vsel %vm722, %v721, %v719
    %s725 = sld [smem:[#allocation8 + $0xb]]
    %s726 = sld [smem:[#allocation8 + $0x8b]]
    %v727 = vstv %s725
    %v728 = vmul.f32 %v727, %v724
    %v729 = vmul.f32 %v727, %v723
    %v730 = vstv %s726
    %v731 = vmul.f32 %v730, %v724
    %v732 = vmul.f32 %v730, %v723
    %v735 = vrot.slane %v731, 2
    %v736 = vrot.slane %v732, 2
    %v739 = vadd.f32 %v728, %v735
    %v740 = vadd.f32 %v729, %v736
    %s741 = scalar_lea.vmem [#allocation6], 19
    %v742 = vld [vmem:[%s741] ss:$8 sm:$0x3]
    %v744 = vlaneseq
    %v745 = vshrl.u32 %v744, 7
    %v746 = vsub.s32 0, %v745
    %v747 = vrot.slane %v742, %v746
    %v748 = vlaneseq
    %v749 = vshrl.u32 %v748, 7
    %v750 = vsub.s32 1, %v749
    %v751 = vrot.slane %v742, %v750
    %v754 = vmul.f32 %v739, %v747
    %v755 = vmul.f32 %v740, %v751
    %v756 = vadd.f32 %v716, %v754
    %v757 = vadd.f32 %v717, %v755
    %758 = vrot.lane.b32.xlu0 %v275, 30
    %v759 = vpop.permute.xlu0 %758
    %760 = vrot.lane.b32.xlu0 %v276, 30
    %v761 = vpop.permute.xlu0 %760
    %vm762 = vcmp.lt.s32.totalorder %v282, 30
    %v763 = vsel %vm762, %v759, %v761
    %v764 = vsel %vm762, %v761, %v759
    %s765 = sld [smem:[#allocation8 + $0xc]]
    %s766 = sld [smem:[#allocation8 + $0x8c]]
    %v767 = vstv %s765
    %v768 = vmul.f32 %v767, %v764
    %v769 = vmul.f32 %v767, %v763
    %v770 = vstv %s766
    %v771 = vmul.f32 %v770, %v764
    %v772 = vmul.f32 %v770, %v763
    %v775 = vrot.slane %v771, 2
    %v776 = vrot.slane %v772, 2
    %v779 = vadd.f32 %v768, %v775
    %v780 = vadd.f32 %v769, %v776
    %s781 = scalar_lea.vmem [#allocation6], 20
    %v782 = vld [vmem:[%s781] ss:$8 sm:$0x3]
    %v784 = vlaneseq
    %v785 = vshrl.u32 %v784, 7
    %v786 = vsub.s32 0, %v785
    %v787 = vrot.slane %v782, %v786
    %v788 = vlaneseq
    %v789 = vshrl.u32 %v788, 7
    %v790 = vsub.s32 1, %v789
    %v791 = vrot.slane %v782, %v790
    %v794 = vmul.f32 %v779, %v787
    %v795 = vmul.f32 %v780, %v791
    %v796 = vadd.f32 %v756, %v794
    %v797 = vadd.f32 %v757, %v795
    %798 = vrot.lane.b32.xlu0 %v275, 29
    %v799 = vpop.permute.xlu0 %798
    %800 = vrot.lane.b32.xlu0 %v276, 29
    %v801 = vpop.permute.xlu0 %800
    %vm802 = vcmp.lt.s32.totalorder %v282, 29
    %v803 = vsel %vm802, %v799, %v801
    %v804 = vsel %vm802, %v801, %v799
    %s805 = sld [smem:[#allocation8 + $0xd]]
    %s806 = sld [smem:[#allocation8 + $0x8d]]
    %v807 = vstv %s805
    %v808 = vmul.f32 %v807, %v804
    %v809 = vmul.f32 %v807, %v803
    %v810 = vstv %s806
    %v811 = vmul.f32 %v810, %v804
    %v812 = vmul.f32 %v810, %v803
    %v815 = vrot.slane %v811, 2
    %v816 = vrot.slane %v812, 2
    %v819 = vadd.f32 %v808, %v815
    %v820 = vadd.f32 %v809, %v816
    %s821 = scalar_lea.vmem [#allocation6], 21
    %v822 = vld [vmem:[%s821] ss:$8 sm:$0x3]
    %v824 = vlaneseq
    %v825 = vshrl.u32 %v824, 7
    %v826 = vsub.s32 0, %v825
    %v827 = vrot.slane %v822, %v826
    %v828 = vlaneseq
    %v829 = vshrl.u32 %v828, 7
    %v830 = vsub.s32 1, %v829
    %v831 = vrot.slane %v822, %v830
    %v834 = vmul.f32 %v819, %v827
    %v835 = vmul.f32 %v820, %v831
    %v836 = vadd.f32 %v796, %v834
    %v837 = vadd.f32 %v797, %v835
    %838 = vrot.lane.b32.xlu0 %v275, 19
    %v839 = vpop.permute.xlu0 %838
    %840 = vrot.lane.b32.xlu0 %v276, 19
    %v841 = vpop.permute.xlu0 %840
    %vm842 = vcmp.lt.s32.totalorder %v282, 19
    %v843 = vsel %vm842, %v839, %v841
    %v844 = vsel %vm842, %v841, %v839
    %s845 = sld [smem:[#allocation8 + $0xe]]
    %s846 = sld [smem:[#allocation8 + $0x8e]]
    %v847 = vstv %s845
    %v848 = vmul.f32 %v847, %v844
    %v849 = vmul.f32 %v847, %v843
    %v850 = vstv %s846
    %v851 = vmul.f32 %v850, %v844
    %v852 = vmul.f32 %v850, %v843
    %v855 = vrot.slane %v851, 2
    %v856 = vrot.slane %v852, 2
    %v859 = vadd.f32 %v848, %v855
    %v860 = vadd.f32 %v849, %v856
    %s861 = scalar_lea.vmem [#allocation6], 22
    %v862 = vld [vmem:[%s861] ss:$8 sm:$0x3]
    %v864 = vlaneseq
    %v865 = vshrl.u32 %v864, 7
    %v866 = vsub.s32 0, %v865
    %v867 = vrot.slane %v862, %v866
    %v868 = vlaneseq
    %v869 = vshrl.u32 %v868, 7
    %v870 = vsub.s32 1, %v869
    %v871 = vrot.slane %v862, %v870
    %v874 = vmul.f32 %v859, %v867
    %v875 = vmul.f32 %v860, %v871
    %v876 = vadd.f32 %v836, %v874
    %v877 = vadd.f32 %v837, %v875
    %878 = vrot.lane.b32.xlu0 %v275, 18
    %v879 = vpop.permute.xlu0 %878
    %880 = vrot.lane.b32.xlu0 %v276, 18
    %v881 = vpop.permute.xlu0 %880
    %vm882 = vcmp.lt.s32.totalorder %v282, 18
    %v883 = vsel %vm882, %v879, %v881
    %v884 = vsel %vm882, %v881, %v879
    %s885 = sld [smem:[#allocation8 + $0xf]]
    %s886 = sld [smem:[#allocation8 + $0x8f]]
    %v887 = vstv %s885
    %v888 = vmul.f32 %v887, %v884
    %v889 = vmul.f32 %v887, %v883
    %v890 = vstv %s886
    %v891 = vmul.f32 %v890, %v884
    %v892 = vmul.f32 %v890, %v883
    %v895 = vrot.slane %v891, 2
    %v896 = vrot.slane %v892, 2
    %v899 = vadd.f32 %v888, %v895
    %v900 = vadd.f32 %v889, %v896
    %s901 = scalar_lea.vmem [#allocation6], 23
    %v902 = vld [vmem:[%s901] ss:$8 sm:$0x3]
    %v904 = vlaneseq
    %v905 = vshrl.u32 %v904, 7
    %v906 = vsub.s32 0, %v905
    %v907 = vrot.slane %v902, %v906
    %v908 = vlaneseq
    %v909 = vshrl.u32 %v908, 7
    %v910 = vsub.s32 1, %v909
    %v911 = vrot.slane %v902, %v910
    %v914 = vmul.f32 %v899, %v907
    %v915 = vmul.f32 %v900, %v911
    %v916 = vadd.f32 %v876, %v914
    %v917 = vadd.f32 %v877, %v915
    %918 = vrot.lane.b32.xlu0 %v275, 17
    %v919 = vpop.permute.xlu0 %918
    %920 = vrot.lane.b32.xlu0 %v276, 17
    %v921 = vpop.permute.xlu0 %920
    %vm922 = vcmp.lt.s32.totalorder %v282, 17
    %v923 = vsel %vm922, %v919, %v921
    %v924 = vsel %vm922, %v921, %v919
    %s925 = sld [smem:[#allocation8 + $0x10]]
    %s926 = sld [smem:[#allocation8 + $0x90]]
    %v927 = vstv %s925
    %v928 = vmul.f32 %v927, %v924
    %v929 = vmul.f32 %v927, %v923
    %v930 = vstv %s926
    %v931 = vmul.f32 %v930, %v924
    %v932 = vmul.f32 %v930, %v923
    %v935 = vrot.slane %v931, 2
    %v936 = vrot.slane %v932, 2
    %v939 = vadd.f32 %v928, %v935
    %v940 = vadd.f32 %v929, %v936
    %s941 = scalar_lea.vmem [#allocation6], 32
    %v942 = vld [vmem:[%s941] ss:$8 sm:$0x3]
    %v944 = vlaneseq
    %v945 = vshrl.u32 %v944, 7
    %v946 = vsub.s32 0, %v945
    %v947 = vrot.slane %v942, %v946
    %v948 = vlaneseq
    %v949 = vshrl.u32 %v948, 7
    %v950 = vsub.s32 1, %v949
    %v951 = vrot.slane %v942, %v950
    %v954 = vmul.f32 %v939, %v947
    %v955 = vmul.f32 %v940, %v951
    %v956 = vadd.f32 %v916, %v954
    %v957 = vadd.f32 %v917, %v955
    %958 = vrot.lane.b32.xlu0 %v275, 16
    %v959 = vpop.permute.xlu0 %958
    %960 = vrot.lane.b32.xlu0 %v276, 16
    %v961 = vpop.permute.xlu0 %960
    %vm962 = vcmp.lt.s32.totalorder %v282, 16
    %v963 = vsel %vm962, %v959, %v961
    %v964 = vsel %vm962, %v961, %v959
    %s965 = sld [smem:[#allocation8 + $0x11]]
    %s966 = sld [smem:[#allocation8 + $0x91]]
    %v967 = vstv %s965
    %v968 = vmul.f32 %v967, %v964
    %v969 = vmul.f32 %v967, %v963
    %v970 = vstv %s966
    %v971 = vmul.f32 %v970, %v964
    %v972 = vmul.f32 %v970, %v963
    %v975 = vrot.slane %v971, 2
    %v976 = vrot.slane %v972, 2
    %v979 = vadd.f32 %v968, %v975
    %v980 = vadd.f32 %v969, %v976
    %s981 = scalar_lea.vmem [#allocation6], 33
    %v982 = vld [vmem:[%s981] ss:$8 sm:$0x3]
    %v984 = vlaneseq
    %v985 = vshrl.u32 %v984, 7
    %v986 = vsub.s32 0, %v985
    %v987 = vrot.slane %v982, %v986
    %v988 = vlaneseq
    %v989 = vshrl.u32 %v988, 7
    %v990 = vsub.s32 1, %v989
    %v991 = vrot.slane %v982, %v990
    %v994 = vmul.f32 %v979, %v987
    %v995 = vmul.f32 %v980, %v991
    %v996 = vadd.f32 %v956, %v994
    %v997 = vadd.f32 %v957, %v995
    %998 = vrot.lane.b32.xlu0 %v275, 15
    %v999 = vpop.permute.xlu0 %998
    %1000 = vrot.lane.b32.xlu0 %v276, 15
    %v1001 = vpop.permute.xlu0 %1000
    %vm1002 = vcmp.lt.s32.totalorder %v282, 15
    %v1003 = vsel %vm1002, %v999, %v1001
    %v1004 = vsel %vm1002, %v1001, %v999
    %s1005 = sld [smem:[#allocation8 + $0x12]]
    %s1006 = sld [smem:[#allocation8 + $0x92]]
    %v1007 = vstv %s1005
    %v1008 = vmul.f32 %v1007, %v1004
    %v1009 = vmul.f32 %v1007, %v1003
    %v1010 = vstv %s1006
    %v1011 = vmul.f32 %v1010, %v1004
    %v1012 = vmul.f32 %v1010, %v1003
    %v1015 = vrot.slane %v1011, 2
    %v1016 = vrot.slane %v1012, 2
    %v1019 = vadd.f32 %v1008, %v1015
    %v1020 = vadd.f32 %v1009, %v1016
    %s1021 = scalar_lea.vmem [#allocation6], 34
    %v1022 = vld [vmem:[%s1021] ss:$8 sm:$0x3]
    %v1024 = vlaneseq
    %v1025 = vshrl.u32 %v1024, 7
    %v1026 = vsub.s32 0, %v1025
    %v1027 = vrot.slane %v1022, %v1026
    %v1028 = vlaneseq
    %v1029 = vshrl.u32 %v1028, 7
    %v1030 = vsub.s32 1, %v1029
    %v1031 = vrot.slane %v1022, %v1030
    %v1034 = vmul.f32 %v1019, %v1027
    %v1035 = vmul.f32 %v1020, %v1031
    %v1036 = vadd.f32 %v996, %v1034
    %v1037 = vadd.f32 %v997, %v1035
    %1038 = vrot.lane.b32.xlu0 %v275, 14
    %v1039 = vpop.permute.xlu0 %1038
    %1040 = vrot.lane.b32.xlu0 %v276, 14
    %v1041 = vpop.permute.xlu0 %1040
    %vm1042 = vcmp.lt.s32.totalorder %v282, 14
    %v1043 = vsel %vm1042, %v1039, %v1041
    %v1044 = vsel %vm1042, %v1041, %v1039
    %s1045 = sld [smem:[#allocation8 + $0x13]]
    %s1046 = sld [smem:[#allocation8 + $0x93]]
    %v1047 = vstv %s1045
    %v1048 = vmul.f32 %v1047, %v1044
    %v1049 = vmul.f32 %v1047, %v1043
    %v1050 = vstv %s1046
    %v1051 = vmul.f32 %v1050, %v1044
    %v1052 = vmul.f32 %v1050, %v1043
    %v1055 = vrot.slane %v1051, 2
    %v1056 = vrot.slane %v1052, 2
    %v1059 = vadd.f32 %v1048, %v1055
    %v1060 = vadd.f32 %v1049, %v1056
    %s1061 = scalar_lea.vmem [#allocation6], 35
    %v1062 = vld [vmem:[%s1061] ss:$8 sm:$0x3]
    %v1064 = vlaneseq
    %v1065 = vshrl.u32 %v1064, 7
    %v1066 = vsub.s32 0, %v1065
    %v1067 = vrot.slane %v1062, %v1066
    %v1068 = vlaneseq
    %v1069 = vshrl.u32 %v1068, 7
    %v1070 = vsub.s32 1, %v1069
    %v1071 = vrot.slane %v1062, %v1070
    %v1074 = vmul.f32 %v1059, %v1067
    %v1075 = vmul.f32 %v1060, %v1071
    %v1076 = vadd.f32 %v1036, %v1074
    %v1077 = vadd.f32 %v1037, %v1075
    %1078 = vrot.lane.b32.xlu0 %v275, 13
    %v1079 = vpop.permute.xlu0 %1078
    %1080 = vrot.lane.b32.xlu0 %v276, 13
    %v1081 = vpop.permute.xlu0 %1080
    %vm1082 = vcmp.lt.s32.totalorder %v282, 13
    %v1083 = vsel %vm1082, %v1079, %v1081
    %v1084 = vsel %vm1082, %v1081, %v1079
    %s1085 = sld [smem:[#allocation8 + $0x14]]
    %s1086 = sld [smem:[#allocation8 + $0x94]]
    %v1087 = vstv %s1085
    %v1088 = vmul.f32 %v1087, %v1084
    %v1089 = vmul.f32 %v1087, %v1083
    %v1090 = vstv %s1086
    %v1091 = vmul.f32 %v1090, %v1084
    %v1092 = vmul.f32 %v1090, %v1083
    %v1095 = vrot.slane %v1091, 2
    %v1096 = vrot.slane %v1092, 2
    %v1099 = vadd.f32 %v1088, %v1095
    %v1100 = vadd.f32 %v1089, %v1096
    %s1101 = scalar_lea.vmem [#allocation6], 36
    %v1102 = vld [vmem:[%s1101] ss:$8 sm:$0x3]
    %v1104 = vlaneseq
    %v1105 = vshrl.u32 %v1104, 7
    %v1106 = vsub.s32 0, %v1105
    %v1107 = vrot.slane %v1102, %v1106
    %v1108 = vlaneseq
    %v1109 = vshrl.u32 %v1108, 7
    %v1110 = vsub.s32 1, %v1109
    %v1111 = vrot.slane %v1102, %v1110
    %v1114 = vmul.f32 %v1099, %v1107
    %v1115 = vmul.f32 %v1100, %v1111
    %v1116 = vadd.f32 %v1076, %v1114
    %v1117 = vadd.f32 %v1077, %v1115
    %1118 = vrot.lane.b32.xlu0 %v275, 3
    %v1119 = vpop.permute.xlu0 %1118
    %1120 = vrot.lane.b32.xlu0 %v276, 3
    %v1121 = vpop.permute.xlu0 %1120
    %vm1122 = vcmp.lt.s32.totalorder %v282, 3
    %v1123 = vsel %vm1122, %v1119, %v1121
    %v1124 = vsel %vm1122, %v1121, %v1119
    %s1125 = sld [smem:[#allocation8 + $0x15]]
    %s1126 = sld [smem:[#allocation8 + $0x95]]
    %v1127 = vstv %s1125
    %v1128 = vmul.f32 %v1127, %v1124
    %v1129 = vmul.f32 %v1127, %v1123
    %v1130 = vstv %s1126
    %v1131 = vmul.f32 %v1130, %v1124
    %v1132 = vmul.f32 %v1130, %v1123
    %v1135 = vrot.slane %v1131, 2
    %v1136 = vrot.slane %v1132, 2
    %v1139 = vadd.f32 %v1128, %v1135
    %v1140 = vadd.f32 %v1129, %v1136
    %s1141 = scalar_lea.vmem [#allocation6], 37
    %v1142 = vld [vmem:[%s1141] ss:$8 sm:$0x3]
    %v1144 = vlaneseq
    %v1145 = vshrl.u32 %v1144, 7
    %v1146 = vsub.s32 0, %v1145
    %v1147 = vrot.slane %v1142, %v1146
    %v1148 = vlaneseq
    %v1149 = vshrl.u32 %v1148, 7
    %v1150 = vsub.s32 1, %v1149
    %v1151 = vrot.slane %v1142, %v1150
    %v1154 = vmul.f32 %v1139, %v1147
    %v1155 = vmul.f32 %v1140, %v1151
    %v1156 = vadd.f32 %v1116, %v1154
    %v1157 = vadd.f32 %v1117, %v1155
    %1158 = vrot.lane.b32.xlu0 %v275, 2
    %v1159 = vpop.permute.xlu0 %1158
    %1160 = vrot.lane.b32.xlu0 %v276, 2
    %v1161 = vpop.permute.xlu0 %1160
    %vm1162 = vcmp.lt.s32.totalorder %v282, 2
    %v1163 = vsel %vm1162, %v1159, %v1161
    %v1164 = vsel %vm1162, %v1161, %v1159
    %s1165 = sld [smem:[#allocation8 + $0x16]]
    %s1166 = sld [smem:[#allocation8 + $0x96]]
    %v1167 = vstv %s1165
    %v1168 = vmul.f32 %v1167, %v1164
    %v1169 = vmul.f32 %v1167, %v1163
    %v1170 = vstv %s1166
    %v1171 = vmul.f32 %v1170, %v1164
    %v1172 = vmul.f32 %v1170, %v1163
    %v1175 = vrot.slane %v1171, 2
    %v1176 = vrot.slane %v1172, 2
    %v1179 = vadd.f32 %v1168, %v1175
    %v1180 = vadd.f32 %v1169, %v1176
    %s1181 = scalar_lea.vmem [#allocation6], 38
    %v1182 = vld [vmem:[%s1181] ss:$8 sm:$0x3]
    %v1184 = vlaneseq
    %v1185 = vshrl.u32 %v1184, 7
    %v1186 = vsub.s32 0, %v1185
    %v1187 = vrot.slane %v1182, %v1186
    %v1188 = vlaneseq
    %v1189 = vshrl.u32 %v1188, 7
    %v1190 = vsub.s32 1, %v1189
    %v1191 = vrot.slane %v1182, %v1190
    %v1194 = vmul.f32 %v1179, %v1187
    %v1195 = vmul.f32 %v1180, %v1191
    %v1196 = vadd.f32 %v1156, %v1194
    %v1197 = vadd.f32 %v1157, %v1195
    %1198 = vrot.lane.b32.xlu0 %v275, 1
    %v1199 = vpop.permute.xlu0 %1198
    %1200 = vrot.lane.b32.xlu0 %v276, 1
    %v1201 = vpop.permute.xlu0 %1200
    %vm1202 = vcmp.lt.s32.totalorder %v282, 1
    %v1203 = vsel %vm1202, %v1199, %v1201
    %v1204 = vsel %vm1202, %v1201, %v1199
    %s1205 = sld [smem:[#allocation8 + $0x17]]
    %s1206 = sld [smem:[#allocation8 + $0x97]]
    %v1207 = vstv %s1205
    %v1208 = vmul.f32 %v1207, %v1204
    %v1209 = vmul.f32 %v1207, %v1203
    %v1210 = vstv %s1206
    %v1211 = vmul.f32 %v1210, %v1204
    %v1212 = vmul.f32 %v1210, %v1203
    %v1215 = vrot.slane %v1211, 2
    %v1216 = vrot.slane %v1212, 2
    %v1219 = vadd.f32 %v1208, %v1215
    %v1220 = vadd.f32 %v1209, %v1216
    %s1221 = scalar_lea.vmem [#allocation6], 39
    %v1222 = vld [vmem:[%s1221] ss:$8 sm:$0x3]
    %v1224 = vlaneseq
    %v1225 = vshrl.u32 %v1224, 7
    %v1226 = vsub.s32 0, %v1225
    %v1227 = vrot.slane %v1222, %v1226
    %v1228 = vlaneseq
    %v1229 = vshrl.u32 %v1228, 7
    %v1230 = vsub.s32 1, %v1229
    %v1231 = vrot.slane %v1222, %v1230
    %v1234 = vmul.f32 %v1219, %v1227
    %v1235 = vmul.f32 %v1220, %v1231
    %v1236 = vadd.f32 %v1196, %v1234
    %v1237 = vadd.f32 %v1197, %v1235
    %s1238 = sld [smem:[#allocation8 + $0x18]]
    %s1239 = sld [smem:[#allocation8 + $0x98]]
    %v1240 = vstv %s1238
    %v1241 = vmul.f32 %v1240, %v275
    %v1242 = vmul.f32 %v1240, %v276
    %v1243 = vstv %s1239
    %v1244 = vmul.f32 %v1243, %v275
    %v1245 = vmul.f32 %v1243, %v276
    %v1248 = vrot.slane %v1244, 2
    %v1249 = vrot.slane %v1245, 2
    %v1252 = vadd.f32 %v1241, %v1248
    %v1253 = vadd.f32 %v1242, %v1249
    %s1254 = scalar_lea.vmem [#allocation6], 48
    %v1255 = vld [vmem:[%s1254] ss:$8 sm:$0x3]
    %v1257 = vlaneseq
    %v1258 = vshrl.u32 %v1257, 7
    %v1259 = vsub.s32 0, %v1258
    %v1260 = vrot.slane %v1255, %v1259
    %v1261 = vlaneseq
    %v1262 = vshrl.u32 %v1261, 7
    %v1263 = vsub.s32 1, %v1262
    %v1264 = vrot.slane %v1255, %v1263
    %v1267 = vmul.f32 %v1252, %v1260
    %v1268 = vmul.f32 %v1253, %v1264
    %v1269 = vadd.f32 %v1236, %v1267
    %v1270 = vadd.f32 %v1237, %v1268
    %1271 = vrot.lane.b32.xlu0 %v275, 127
    %v1272 = vpop.permute.xlu0 %1271
    %1273 = vrot.lane.b32.xlu0 %v276, 127
    %v1274 = vpop.permute.xlu0 %1273
    %vm1275 = vcmp.lt.s32.totalorder %v282, 127
    %v1276 = vsel %vm1275, %v1272, %v1274
    %v1277 = vsel %vm1275, %v1274, %v1272
    %s1278 = sld [smem:[#allocation8 + $0x19]]
    %s1279 = sld [smem:[#allocation8 + $0x99]]
    %v1280 = vstv %s1278
    %v1281 = vmul.f32 %v1280, %v1276
    %v1282 = vmul.f32 %v1280, %v1277
    %v1283 = vstv %s1279
    %v1284 = vmul.f32 %v1283, %v1276
    %v1285 = vmul.f32 %v1283, %v1277
    %v1288 = vrot.slane %v1284, 2
    %v1289 = vrot.slane %v1285, 2
    %v1292 = vadd.f32 %v1281, %v1288
    %v1293 = vadd.f32 %v1282, %v1289
    %s1294 = scalar_lea.vmem [#allocation6], 49
    %v1295 = vld [vmem:[%s1294] ss:$8 sm:$0x3]
    %v1297 = vlaneseq
    %v1298 = vshrl.u32 %v1297, 7
    %v1299 = vsub.s32 0, %v1298
    %v1300 = vrot.slane %v1295, %v1299
    %v1301 = vlaneseq
    %v1302 = vshrl.u32 %v1301, 7
    %v1303 = vsub.s32 1, %v1302
    %v1304 = vrot.slane %v1295, %v1303
    %v1307 = vmul.f32 %v1292, %v1300
    %v1308 = vmul.f32 %v1293, %v1304
    %v1309 = vadd.f32 %v1269, %v1307
    %v1310 = vadd.f32 %v1270, %v1308
    %1311 = vrot.lane.b32.xlu0 %v275, 126
    %v1312 = vpop.permute.xlu0 %1311
    %1313 = vrot.lane.b32.xlu0 %v276, 126
    %v1314 = vpop.permute.xlu0 %1313
    %vm1315 = vcmp.lt.s32.totalorder %v282, 126
    %v1316 = vsel %vm1315, %v1312, %v1314
    %v1317 = vsel %vm1315, %v1314, %v1312
    %s1318 = sld [smem:[#allocation8 + $0x1a]]
    %s1319 = sld [smem:[#allocation8 + $0x9a]]
    %v1320 = vstv %s1318
    %v1321 = vmul.f32 %v1320, %v1316
    %v1322 = vmul.f32 %v1320, %v1317
    %v1323 = vstv %s1319
    %v1324 = vmul.f32 %v1323, %v1316
    %v1325 = vmul.f32 %v1323, %v1317
    %v1328 = vrot.slane %v1324, 2
    %v1329 = vrot.slane %v1325, 2
    %v1332 = vadd.f32 %v1321, %v1328
    %v1333 = vadd.f32 %v1322, %v1329
    %s1334 = scalar_lea.vmem [#allocation6], 50
    %v1335 = vld [vmem:[%s1334] ss:$8 sm:$0x3]
    %v1337 = vlaneseq
    %v1338 = vshrl.u32 %v1337, 7
    %v1339 = vsub.s32 0, %v1338
    %v1340 = vrot.slane %v1335, %v1339
    %v1341 = vlaneseq
    %v1342 = vshrl.u32 %v1341, 7
    %v1343 = vsub.s32 1, %v1342
    %v1344 = vrot.slane %v1335, %v1343
    %v1347 = vmul.f32 %v1332, %v1340
    %v1348 = vmul.f32 %v1333, %v1344
    %v1349 = vadd.f32 %v1309, %v1347
    %v1350 = vadd.f32 %v1310, %v1348
    %1351 = vrot.lane.b32.xlu0 %v275, 125
    %v1352 = vpop.permute.xlu0 %1351
    %1353 = vrot.lane.b32.xlu0 %v276, 125
    %v1354 = vpop.permute.xlu0 %1353
    %vm1355 = vcmp.lt.s32.totalorder %v282, 125
    %v1356 = vsel %vm1355, %v1352, %v1354
    %v1357 = vsel %vm1355, %v1354, %v1352
    %s1358 = sld [smem:[#allocation8 + $0x1b]]
    %s1359 = sld [smem:[#allocation8 + $0x9b]]
    %v1360 = vstv %s1358
    %v1361 = vmul.f32 %v1360, %v1356
    %v1362 = vmul.f32 %v1360, %v1357
    %v1363 = vstv %s1359
    %v1364 = vmul.f32 %v1363, %v1356
    %v1365 = vmul.f32 %v1363, %v1357
    %v1368 = vrot.slane %v1364, 2
    %v1369 = vrot.slane %v1365, 2
    %v1372 = vadd.f32 %v1361, %v1368
    %v1373 = vadd.f32 %v1362, %v1369
    %s1374 = scalar_lea.vmem [#allocation6], 51
    %v1375 = vld [vmem:[%s1374] ss:$8 sm:$0x3]
    %v1377 = vlaneseq
    %v1378 = vshrl.u32 %v1377, 7
    %v1379 = vsub.s32 0, %v1378
    %v1380 = vrot.slane %v1375, %v1379
    %v1381 = vlaneseq
    %v1382 = vshrl.u32 %v1381, 7
    %v1383 = vsub.s32 1, %v1382
    %v1384 = vrot.slane %v1375, %v1383
    %v1387 = vmul.f32 %v1372, %v1380
    %v1388 = vmul.f32 %v1373, %v1384
    %v1389 = vadd.f32 %v1349, %v1387
    %v1390 = vadd.f32 %v1350, %v1388
    %1391 = vrot.lane.b32.xlu0 %v275, 115
    %v1392 = vpop.permute.xlu0 %1391
    %1393 = vrot.lane.b32.xlu0 %v276, 115
    %v1394 = vpop.permute.xlu0 %1393
    %vm1395 = vcmp.lt.s32.totalorder %v282, 115
    %v1396 = vsel %vm1395, %v1392, %v1394
    %v1397 = vsel %vm1395, %v1394, %v1392
    %s1398 = sld [smem:[#allocation8 + $0x1c]]
    %s1399 = sld [smem:[#allocation8 + $0x9c]]
    %v1400 = vstv %s1398
    %v1401 = vmul.f32 %v1400, %v1396
    %v1402 = vmul.f32 %v1400, %v1397
    %v1403 = vstv %s1399
    %v1404 = vmul.f32 %v1403, %v1396
    %v1405 = vmul.f32 %v1403, %v1397
    %v1408 = vrot.slane %v1404, 2
    %v1409 = vrot.slane %v1405, 2
    %v1412 = vadd.f32 %v1401, %v1408
    %v1413 = vadd.f32 %v1402, %v1409
    %s1414 = scalar_lea.vmem [#allocation6], 52
    %v1415 = vld [vmem:[%s1414] ss:$8 sm:$0x3]
    %v1417 = vlaneseq
    %v1418 = vshrl.u32 %v1417, 7
    %v1419 = vsub.s32 0, %v1418
    %v1420 = vrot.slane %v1415, %v1419
    %v1421 = vlaneseq
    %v1422 = vshrl.u32 %v1421, 7
    %v1423 = vsub.s32 1, %v1422
    %v1424 = vrot.slane %v1415, %v1423
    %v1427 = vmul.f32 %v1412, %v1420
    %v1428 = vmul.f32 %v1413, %v1424
    %v1429 = vadd.f32 %v1389, %v1427
    %v1430 = vadd.f32 %v1390, %v1428
    %1431 = vrot.lane.b32.xlu0 %v275, 114
    %v1432 = vpop.permute.xlu0 %1431
    %1433 = vrot.lane.b32.xlu0 %v276, 114
    %v1434 = vpop.permute.xlu0 %1433
    %vm1435 = vcmp.lt.s32.totalorder %v282, 114
    %v1436 = vsel %vm1435, %v1432, %v1434
    %v1437 = vsel %vm1435, %v1434, %v1432
    %s1438 = sld [smem:[#allocation8 + $0x1d]]
    %s1439 = sld [smem:[#allocation8 + $0x9d]]
    %v1440 = vstv %s1438
    %v1441 = vmul.f32 %v1440, %v1436
    %v1442 = vmul.f32 %v1440, %v1437
    %v1443 = vstv %s1439
    %v1444 = vmul.f32 %v1443, %v1436
    %v1445 = vmul.f32 %v1443, %v1437
    %v1448 = vrot.slane %v1444, 2
    %v1449 = vrot.slane %v1445, 2
    %v1452 = vadd.f32 %v1441, %v1448
    %v1453 = vadd.f32 %v1442, %v1449
    %s1454 = scalar_lea.vmem [#allocation6], 53
    %v1455 = vld [vmem:[%s1454] ss:$8 sm:$0x3]
    %v1457 = vlaneseq
    %v1458 = vshrl.u32 %v1457, 7
    %v1459 = vsub.s32 0, %v1458
    %v1460 = vrot.slane %v1455, %v1459
    %v1461 = vlaneseq
    %v1462 = vshrl.u32 %v1461, 7
    %v1463 = vsub.s32 1, %v1462
    %v1464 = vrot.slane %v1455, %v1463
    %v1467 = vmul.f32 %v1452, %v1460
    %v1468 = vmul.f32 %v1453, %v1464
    %v1469 = vadd.f32 %v1429, %v1467
    %v1470 = vadd.f32 %v1430, %v1468
    %1471 = vrot.lane.b32.xlu0 %v275, 113
    %v1472 = vpop.permute.xlu0 %1471
    %1473 = vrot.lane.b32.xlu0 %v276, 113
    %v1474 = vpop.permute.xlu0 %1473
    %vm1475 = vcmp.lt.s32.totalorder %v282, 113
    %v1476 = vsel %vm1475, %v1472, %v1474
    %v1477 = vsel %vm1475, %v1474, %v1472
    %s1478 = sld [smem:[#allocation8 + $0x1e]]
    %s1479 = sld [smem:[#allocation8 + $0x9e]]
    %v1480 = vstv %s1478
    %v1481 = vmul.f32 %v1480, %v1476
    %v1482 = vmul.f32 %v1480, %v1477
    %v1483 = vstv %s1479
    %v1484 = vmul.f32 %v1483, %v1476
    %v1485 = vmul.f32 %v1483, %v1477
    %v1488 = vrot.slane %v1484, 2
    %v1489 = vrot.slane %v1485, 2
    %v1492 = vadd.f32 %v1481, %v1488
    %v1493 = vadd.f32 %v1482, %v1489
    %s1494 = scalar_lea.vmem [#allocation6], 54
    %v1495 = vld [vmem:[%s1494] ss:$8 sm:$0x3]
    %v1497 = vlaneseq
    %v1498 = vshrl.u32 %v1497, 7
    %v1499 = vsub.s32 0, %v1498
    %v1500 = vrot.slane %v1495, %v1499
    %v1501 = vlaneseq
    %v1502 = vshrl.u32 %v1501, 7
    %v1503 = vsub.s32 1, %v1502
    %v1504 = vrot.slane %v1495, %v1503
    %v1507 = vmul.f32 %v1492, %v1500
    %v1508 = vmul.f32 %v1493, %v1504
    %v1509 = vadd.f32 %v1469, %v1507
    %v1510 = vadd.f32 %v1470, %v1508
    %1511 = vrot.lane.b32.xlu0 %v275, 112
    %v1512 = vpop.permute.xlu0 %1511
    %1513 = vrot.lane.b32.xlu0 %v276, 112
    %v1514 = vpop.permute.xlu0 %1513
    %vm1515 = vcmp.lt.s32.totalorder %v282, 112
    %v1516 = vsel %vm1515, %v1512, %v1514
    %v1517 = vsel %vm1515, %v1514, %v1512
    %s1518 = sld [smem:[#allocation8 + $0x1f]]
    %s1519 = sld [smem:[#allocation8 + $0x9f]]
    %v1520 = vstv %s1518
    %v1521 = vmul.f32 %v1520, %v1516
    %v1522 = vmul.f32 %v1520, %v1517
    %v1523 = vstv %s1519
    %v1524 = vmul.f32 %v1523, %v1516
    %v1525 = vmul.f32 %v1523, %v1517
    %v1528 = vrot.slane %v1524, 2
    %v1529 = vrot.slane %v1525, 2
    %v1532 = vadd.f32 %v1521, %v1528
    %v1533 = vadd.f32 %v1522, %v1529
    %s1534 = scalar_lea.vmem [#allocation6], 55
    %v1535 = vld [vmem:[%s1534] ss:$8 sm:$0x3]
    %v1537 = vlaneseq
    %v1538 = vshrl.u32 %v1537, 7
    %v1539 = vsub.s32 0, %v1538
    %v1540 = vrot.slane %v1535, %v1539
    %v1541 = vlaneseq
    %v1542 = vshrl.u32 %v1541, 7
    %v1543 = vsub.s32 1, %v1542
    %v1544 = vrot.slane %v1535, %v1543
    %v1547 = vmul.f32 %v1532, %v1540
    %v1548 = vmul.f32 %v1533, %v1544
    %v1549 = vadd.f32 %v1509, %v1547
    %v1550 = vadd.f32 %v1510, %v1548
    %1551 = vrot.lane.b32.xlu0 %v275, 111
    %v1552 = vpop.permute.xlu0 %1551
    %1553 = vrot.lane.b32.xlu0 %v276, 111
    %v1554 = vpop.permute.xlu0 %1553
    %vm1555 = vcmp.lt.s32.totalorder %v282, 111
    %v1556 = vsel %vm1555, %v1552, %v1554
    %v1557 = vsel %vm1555, %v1554, %v1552
    %s1558 = sld [smem:[#allocation8 + $0x20]]
    %s1559 = sld [smem:[#allocation8 + $0xa0]]
    %v1560 = vstv %s1558
    %v1561 = vmul.f32 %v1560, %v1556
    %v1562 = vmul.f32 %v1560, %v1557
    %v1563 = vstv %s1559
    %v1564 = vmul.f32 %v1563, %v1556
    %v1565 = vmul.f32 %v1563, %v1557
    %v1568 = vrot.slane %v1564, 2
    %v1569 = vrot.slane %v1565, 2
    %v1572 = vadd.f32 %v1561, %v1568
    %v1573 = vadd.f32 %v1562, %v1569
    %s1574 = scalar_lea.vmem [#allocation6], 64
    %v1575 = vld [vmem:[%s1574] ss:$8 sm:$0x3]
    %v1577 = vlaneseq
    %v1578 = vshrl.u32 %v1577, 7
    %v1579 = vsub.s32 0, %v1578
    %v1580 = vrot.slane %v1575, %v1579
    %v1581 = vlaneseq
    %v1582 = vshrl.u32 %v1581, 7
    %v1583 = vsub.s32 1, %v1582
    %v1584 = vrot.slane %v1575, %v1583
    %v1587 = vmul.f32 %v1572, %v1580
    %v1588 = vmul.f32 %v1573, %v1584
    %v1589 = vadd.f32 %v1549, %v1587
    %v1590 = vadd.f32 %v1550, %v1588
    %1591 = vrot.lane.b32.xlu0 %v275, 110
    %v1592 = vpop.permute.xlu0 %1591
    %1593 = vrot.lane.b32.xlu0 %v276, 110
    %v1594 = vpop.permute.xlu0 %1593
    %vm1595 = vcmp.lt.s32.totalorder %v282, 110
    %v1596 = vsel %vm1595, %v1592, %v1594
    %v1597 = vsel %vm1595, %v1594, %v1592
    %s1598 = sld [smem:[#allocation8 + $0x21]]
    %s1599 = sld [smem:[#allocation8 + $0xa1]]
    %v1600 = vstv %s1598
    %v1601 = vmul.f32 %v1600, %v1596
    %v1602 = vmul.f32 %v1600, %v1597
    %v1603 = vstv %s1599
    %v1604 = vmul.f32 %v1603, %v1596
    %v1605 = vmul.f32 %v1603, %v1597
    %v1608 = vrot.slane %v1604, 2
    %v1609 = vrot.slane %v1605, 2
    %v1612 = vadd.f32 %v1601, %v1608
    %v1613 = vadd.f32 %v1602, %v1609
    %s1614 = scalar_lea.vmem [#allocation6], 65
    %v1615 = vld [vmem:[%s1614] ss:$8 sm:$0x3]
    %v1617 = vlaneseq
    %v1618 = vshrl.u32 %v1617, 7
    %v1619 = vsub.s32 0, %v1618
    %v1620 = vrot.slane %v1615, %v1619
    %v1621 = vlaneseq
    %v1622 = vshrl.u32 %v1621, 7
    %v1623 = vsub.s32 1, %v1622
    %v1624 = vrot.slane %v1615, %v1623
    %v1627 = vmul.f32 %v1612, %v1620
    %v1628 = vmul.f32 %v1613, %v1624
    %v1629 = vadd.f32 %v1589, %v1627
    %v1630 = vadd.f32 %v1590, %v1628
    %1631 = vrot.lane.b32.xlu0 %v275, 109
    %v1632 = vpop.permute.xlu0 %1631
    %1633 = vrot.lane.b32.xlu0 %v276, 109
    %v1634 = vpop.permute.xlu0 %1633
    %vm1635 = vcmp.lt.s32.totalorder %v282, 109
    %v1636 = vsel %vm1635, %v1632, %v1634
    %v1637 = vsel %vm1635, %v1634, %v1632
    %s1638 = sld [smem:[#allocation8 + $0x22]]
    %s1639 = sld [smem:[#allocation8 + $0xa2]]
    %v1640 = vstv %s1638
    %v1641 = vmul.f32 %v1640, %v1636
    %v1642 = vmul.f32 %v1640, %v1637
    %v1643 = vstv %s1639
    %v1644 = vmul.f32 %v1643, %v1636
    %v1645 = vmul.f32 %v1643, %v1637
    %v1648 = vrot.slane %v1644, 2
    %v1649 = vrot.slane %v1645, 2
    %v1652 = vadd.f32 %v1641, %v1648
    %v1653 = vadd.f32 %v1642, %v1649
    %s1654 = scalar_lea.vmem [#allocation6], 66
    %v1655 = vld [vmem:[%s1654] ss:$8 sm:$0x3]
    %v1657 = vlaneseq
    %v1658 = vshrl.u32 %v1657, 7
    %v1659 = vsub.s32 0, %v1658
    %v1660 = vrot.slane %v1655, %v1659
    %v1661 = vlaneseq
    %v1662 = vshrl.u32 %v1661, 7
    %v1663 = vsub.s32 1, %v1662
    %v1664 = vrot.slane %v1655, %v1663
    %v1667 = vmul.f32 %v1652, %v1660
    %v1668 = vmul.f32 %v1653, %v1664
    %v1669 = vadd.f32 %v1629, %v1667
    %v1670 = vadd.f32 %v1630, %v1668
    %1671 = vrot.lane.b32.xlu0 %v275, 99
    %v1672 = vpop.permute.xlu0 %1671
    %1673 = vrot.lane.b32.xlu0 %v276, 99
    %v1674 = vpop.permute.xlu0 %1673
    %vm1675 = vcmp.lt.s32.totalorder %v282, 99
    %v1676 = vsel %vm1675, %v1672, %v1674
    %v1677 = vsel %vm1675, %v1674, %v1672
    %s1678 = sld [smem:[#allocation8 + $0x23]]
    %s1679 = sld [smem:[#allocation8 + $0xa3]]
    %v1680 = vstv %s1678
    %v1681 = vmul.f32 %v1680, %v1676
    %v1682 = vmul.f32 %v1680, %v1677
    %v1683 = vstv %s1679
    %v1684 = vmul.f32 %v1683, %v1676
    %v1685 = vmul.f32 %v1683, %v1677
    %v1688 = vrot.slane %v1684, 2
    %v1689 = vrot.slane %v1685, 2
    %v1692 = vadd.f32 %v1681, %v1688
    %v1693 = vadd.f32 %v1682, %v1689
    %s1694 = scalar_lea.vmem [#allocation6], 67
    %v1695 = vld [vmem:[%s1694] ss:$8 sm:$0x3]
    %v1697 = vlaneseq
    %v1698 = vshrl.u32 %v1697, 7
    %v1699 = vsub.s32 0, %v1698
    %v1700 = vrot.slane %v1695, %v1699
    %v1701 = vlaneseq
    %v1702 = vshrl.u32 %v1701, 7
    %v1703 = vsub.s32 1, %v1702
    %v1704 = vrot.slane %v1695, %v1703
    %v1707 = vmul.f32 %v1692, %v1700
    %v1708 = vmul.f32 %v1693, %v1704
    %v1709 = vadd.f32 %v1669, %v1707
    %v1710 = vadd.f32 %v1670, %v1708
    %1711 = vrot.lane.b32.xlu0 %v275, 98
    %v1712 = vpop.permute.xlu0 %1711
    %1713 = vrot.lane.b32.xlu0 %v276, 98
    %v1714 = vpop.permute.xlu0 %1713
    %vm1715 = vcmp.lt.s32.totalorder %v282, 98
    %v1716 = vsel %vm1715, %v1712, %v1714
    %v1717 = vsel %vm1715, %v1714, %v1712
    %s1718 = sld [smem:[#allocation8 + $0x24]]
    %s1719 = sld [smem:[#allocation8 + $0xa4]]
    %v1720 = vstv %s1718
    %v1721 = vmul.f32 %v1720, %v1716
    %v1722 = vmul.f32 %v1720, %v1717
    %v1723 = vstv %s1719
    %v1724 = vmul.f32 %v1723, %v1716
    %v1725 = vmul.f32 %v1723, %v1717
    %v1728 = vrot.slane %v1724, 2
    %v1729 = vrot.slane %v1725, 2
    %v1732 = vadd.f32 %v1721, %v1728
    %v1733 = vadd.f32 %v1722, %v1729
    %s1734 = scalar_lea.vmem [#allocation6], 68
    %v1735 = vld [vmem:[%s1734] ss:$8 sm:$0x3]
    %v1737 = vlaneseq
    %v1738 = vshrl.u32 %v1737, 7
    %v1739 = vsub.s32 0, %v1738
    %v1740 = vrot.slane %v1735, %v1739
    %v1741 = vlaneseq
    %v1742 = vshrl.u32 %v1741, 7
    %v1743 = vsub.s32 1, %v1742
    %v1744 = vrot.slane %v1735, %v1743
    %v1747 = vmul.f32 %v1732, %v1740
    %v1748 = vmul.f32 %v1733, %v1744
    %v1749 = vadd.f32 %v1709, %v1747
    %v1750 = vadd.f32 %v1710, %v1748
    %1751 = vrot.lane.b32.xlu0 %v275, 97
    %v1752 = vpop.permute.xlu0 %1751
    %1753 = vrot.lane.b32.xlu0 %v276, 97
    %v1754 = vpop.permute.xlu0 %1753
    %vm1755 = vcmp.lt.s32.totalorder %v282, 97
    %v1756 = vsel %vm1755, %v1752, %v1754
    %v1757 = vsel %vm1755, %v1754, %v1752
    %s1758 = sld [smem:[#allocation8 + $0x25]]
    %s1759 = sld [smem:[#allocation8 + $0xa5]]
    %v1760 = vstv %s1758
    %v1761 = vmul.f32 %v1760, %v1756
    %v1762 = vmul.f32 %v1760, %v1757
    %v1763 = vstv %s1759
    %v1764 = vmul.f32 %v1763, %v1756
    %v1765 = vmul.f32 %v1763, %v1757
    %v1768 = vrot.slane %v1764, 2
    %v1769 = vrot.slane %v1765, 2
    %v1772 = vadd.f32 %v1761, %v1768
    %v1773 = vadd.f32 %v1762, %v1769
    %s1774 = scalar_lea.vmem [#allocation6], 69
    %v1775 = vld [vmem:[%s1774] ss:$8 sm:$0x3]
    %v1777 = vlaneseq
    %v1778 = vshrl.u32 %v1777, 7
    %v1779 = vsub.s32 0, %v1778
    %v1780 = vrot.slane %v1775, %v1779
    %v1781 = vlaneseq
    %v1782 = vshrl.u32 %v1781, 7
    %v1783 = vsub.s32 1, %v1782
    %v1784 = vrot.slane %v1775, %v1783
    %v1787 = vmul.f32 %v1772, %v1780
    %v1788 = vmul.f32 %v1773, %v1784
    %v1789 = vadd.f32 %v1749, %v1787
    %v1790 = vadd.f32 %v1750, %v1788
    %1791 = vrot.lane.b32.xlu0 %v275, 96
    %v1792 = vpop.permute.xlu0 %1791
    %1793 = vrot.lane.b32.xlu0 %v276, 96
    %v1794 = vpop.permute.xlu0 %1793
    %vm1795 = vcmp.lt.s32.totalorder %v282, 96
    %v1796 = vsel %vm1795, %v1792, %v1794
    %v1797 = vsel %vm1795, %v1794, %v1792
    %s1798 = sld [smem:[#allocation8 + $0x26]]
    %s1799 = sld [smem:[#allocation8 + $0xa6]]
    %v1800 = vstv %s1798
    %v1801 = vmul.f32 %v1800, %v1796
    %v1802 = vmul.f32 %v1800, %v1797
    %v1803 = vstv %s1799
    %v1804 = vmul.f32 %v1803, %v1796
    %v1805 = vmul.f32 %v1803, %v1797
    %v1808 = vrot.slane %v1804, 2
    %v1809 = vrot.slane %v1805, 2
    %v1812 = vadd.f32 %v1801, %v1808
    %v1813 = vadd.f32 %v1802, %v1809
    %s1814 = scalar_lea.vmem [#allocation6], 70
    %v1815 = vld [vmem:[%s1814] ss:$8 sm:$0x3]
    %v1817 = vlaneseq
    %v1818 = vshrl.u32 %v1817, 7
    %v1819 = vsub.s32 0, %v1818
    %v1820 = vrot.slane %v1815, %v1819
    %v1821 = vlaneseq
    %v1822 = vshrl.u32 %v1821, 7
    %v1823 = vsub.s32 1, %v1822
    %v1824 = vrot.slane %v1815, %v1823
    %v1827 = vmul.f32 %v1812, %v1820
    %v1828 = vmul.f32 %v1813, %v1824
    %v1829 = vadd.f32 %v1789, %v1827
    %v1830 = vadd.f32 %v1790, %v1828
    %1831 = vrot.lane.b32.xlu0 %v275, 95
    %v1832 = vpop.permute.xlu0 %1831
    %1833 = vrot.lane.b32.xlu0 %v276, 95
    %v1834 = vpop.permute.xlu0 %1833
    %vm1835 = vcmp.lt.s32.totalorder %v282, 95
    %v1836 = vsel %vm1835, %v1832, %v1834
    %v1837 = vsel %vm1835, %v1834, %v1832
    %s1838 = sld [smem:[#allocation8 + $0x27]]
    %s1839 = sld [smem:[#allocation8 + $0xa7]]
    %v1840 = vstv %s1838
    %v1841 = vmul.f32 %v1840, %v1836
    %v1842 = vmul.f32 %v1840, %v1837
    %v1843 = vstv %s1839
    %v1844 = vmul.f32 %v1843, %v1836
    %v1845 = vmul.f32 %v1843, %v1837
    %v1848 = vrot.slane %v1844, 2
    %v1849 = vrot.slane %v1845, 2
    %v1852 = vadd.f32 %v1841, %v1848
    %v1853 = vadd.f32 %v1842, %v1849
    %s1854 = scalar_lea.vmem [#allocation6], 71
    %v1855 = vld [vmem:[%s1854] ss:$8 sm:$0x3]
    %v1857 = vlaneseq
    %v1858 = vshrl.u32 %v1857, 7
    %v1859 = vsub.s32 0, %v1858
    %v1860 = vrot.slane %v1855, %v1859
    %v1861 = vlaneseq
    %v1862 = vshrl.u32 %v1861, 7
    %v1863 = vsub.s32 1, %v1862
    %v1864 = vrot.slane %v1855, %v1863
    %v1867 = vmul.f32 %v1852, %v1860
    %v1868 = vmul.f32 %v1853, %v1864
    %v1869 = vadd.f32 %v1829, %v1867
    %v1870 = vadd.f32 %v1830, %v1868
    %1871 = vrot.lane.b32.xlu0 %v275, 94
    %v1872 = vpop.permute.xlu0 %1871
    %1873 = vrot.lane.b32.xlu0 %v276, 94
    %v1874 = vpop.permute.xlu0 %1873
    %vm1875 = vcmp.lt.s32.totalorder %v282, 94
    %v1876 = vsel %vm1875, %v1872, %v1874
    %v1877 = vsel %vm1875, %v1874, %v1872
    %s1878 = sld [smem:[#allocation8 + $0x28]]
    %s1879 = sld [smem:[#allocation8 + $0xa8]]
    %v1880 = vstv %s1878
    %v1881 = vmul.f32 %v1880, %v1876
    %v1882 = vmul.f32 %v1880, %v1877
    %v1883 = vstv %s1879
    %v1884 = vmul.f32 %v1883, %v1876
    %v1885 = vmul.f32 %v1883, %v1877
    %v1888 = vrot.slane %v1884, 2
    %v1889 = vrot.slane %v1885, 2
    %v1892 = vadd.f32 %v1881, %v1888
    %v1893 = vadd.f32 %v1882, %v1889
    %s1894 = scalar_lea.vmem [#allocation6], 80
    %v1895 = vld [vmem:[%s1894] ss:$8 sm:$0x3]
    %v1897 = vlaneseq
    %v1898 = vshrl.u32 %v1897, 7
    %v1899 = vsub.s32 0, %v1898
    %v1900 = vrot.slane %v1895, %v1899
    %v1901 = vlaneseq
    %v1902 = vshrl.u32 %v1901, 7
    %v1903 = vsub.s32 1, %v1902
    %v1904 = vrot.slane %v1895, %v1903
    %v1907 = vmul.f32 %v1892, %v1900
    %v1908 = vmul.f32 %v1893, %v1904
    %v1909 = vadd.f32 %v1869, %v1907
    %v1910 = vadd.f32 %v1870, %v1908
    %1911 = vrot.lane.b32.xlu0 %v275, 93
    %v1912 = vpop.permute.xlu0 %1911
    %1913 = vrot.lane.b32.xlu0 %v276, 93
    %v1914 = vpop.permute.xlu0 %1913
    %vm1915 = vcmp.lt.s32.totalorder %v282, 93
    %v1916 = vsel %vm1915, %v1912, %v1914
    %v1917 = vsel %vm1915, %v1914, %v1912
    %s1918 = sld [smem:[#allocation8 + $0x29]]
    %s1919 = sld [smem:[#allocation8 + $0xa9]]
    %v1920 = vstv %s1918
    %v1921 = vmul.f32 %v1920, %v1916
    %v1922 = vmul.f32 %v1920, %v1917
    %v1923 = vstv %s1919
    %v1924 = vmul.f32 %v1923, %v1916
    %v1925 = vmul.f32 %v1923, %v1917
    %v1928 = vrot.slane %v1924, 2
    %v1929 = vrot.slane %v1925, 2
    %v1932 = vadd.f32 %v1921, %v1928
    %v1933 = vadd.f32 %v1922, %v1929
    %s1934 = scalar_lea.vmem [#allocation6], 81
    %v1935 = vld [vmem:[%s1934] ss:$8 sm:$0x3]
    %v1937 = vlaneseq
    %v1938 = vshrl.u32 %v1937, 7
    %v1939 = vsub.s32 0, %v1938
    %v1940 = vrot.slane %v1935, %v1939
    %v1941 = vlaneseq
    %v1942 = vshrl.u32 %v1941, 7
    %v1943 = vsub.s32 1, %v1942
    %v1944 = vrot.slane %v1935, %v1943
    %v1947 = vmul.f32 %v1932, %v1940
    %v1948 = vmul.f32 %v1933, %v1944
    %v1949 = vadd.f32 %v1909, %v1947
    %v1950 = vadd.f32 %v1910, %v1948
    %1951 = vrot.lane.b32.xlu0 %v275, 83
    %v1952 = vpop.permute.xlu0 %1951
    %1953 = vrot.lane.b32.xlu0 %v276, 83
    %v1954 = vpop.permute.xlu0 %1953
    %vm1955 = vcmp.lt.s32.totalorder %v282, 83
    %v1956 = vsel %vm1955, %v1952, %v1954
    %v1957 = vsel %vm1955, %v1954, %v1952
    %s1958 = sld [smem:[#allocation8 + $0x2a]]
    %s1959 = sld [smem:[#allocation8 + $0xaa]]
    %v1960 = vstv %s1958
    %v1961 = vmul.f32 %v1960, %v1956
    %v1962 = vmul.f32 %v1960, %v1957
    %v1963 = vstv %s1959
    %v1964 = vmul.f32 %v1963, %v1956
    %v1965 = vmul.f32 %v1963, %v1957
    %v1968 = vrot.slane %v1964, 2
    %v1969 = vrot.slane %v1965, 2
    %v1972 = vadd.f32 %v1961, %v1968
    %v1973 = vadd.f32 %v1962, %v1969
    %s1974 = scalar_lea.vmem [#allocation6], 82
    %v1975 = vld [vmem:[%s1974] ss:$8 sm:$0x3]
    %v1977 = vlaneseq
    %v1978 = vshrl.u32 %v1977, 7
    %v1979 = vsub.s32 0, %v1978
    %v1980 = vrot.slane %v1975, %v1979
    %v1981 = vlaneseq
    %v1982 = vshrl.u32 %v1981, 7
    %v1983 = vsub.s32 1, %v1982
    %v1984 = vrot.slane %v1975, %v1983
    %v1987 = vmul.f32 %v1972, %v1980
    %v1988 = vmul.f32 %v1973, %v1984
    %v1989 = vadd.f32 %v1949, %v1987
    %v1990 = vadd.f32 %v1950, %v1988
    %1991 = vrot.lane.b32.xlu0 %v275, 82
    %v1992 = vpop.permute.xlu0 %1991
    %1993 = vrot.lane.b32.xlu0 %v276, 82
    %v1994 = vpop.permute.xlu0 %1993
    %vm1995 = vcmp.lt.s32.totalorder %v282, 82
    %v1996 = vsel %vm1995, %v1992, %v1994
    %v1997 = vsel %vm1995, %v1994, %v1992
    %s1998 = sld [smem:[#allocation8 + $0x2b]]
    %s1999 = sld [smem:[#allocation8 + $0xab]]
    %v2000 = vstv %s1998
    %v2001 = vmul.f32 %v2000, %v1996
    %v2002 = vmul.f32 %v2000, %v1997
    %v2003 = vstv %s1999
    %v2004 = vmul.f32 %v2003, %v1996
    %v2005 = vmul.f32 %v2003, %v1997
    %v2008 = vrot.slane %v2004, 2
    %v2009 = vrot.slane %v2005, 2
    %v2012 = vadd.f32 %v2001, %v2008
    %v2013 = vadd.f32 %v2002, %v2009
    %s2014 = scalar_lea.vmem [#allocation6], 83
    %v2015 = vld [vmem:[%s2014] ss:$8 sm:$0x3]
    %v2017 = vlaneseq
    %v2018 = vshrl.u32 %v2017, 7
    %v2019 = vsub.s32 0, %v2018
    %v2020 = vrot.slane %v2015, %v2019
    %v2021 = vlaneseq
    %v2022 = vshrl.u32 %v2021, 7
    %v2023 = vsub.s32 1, %v2022
    %v2024 = vrot.slane %v2015, %v2023
    %v2027 = vmul.f32 %v2012, %v2020
    %v2028 = vmul.f32 %v2013, %v2024
    %v2029 = vadd.f32 %v1989, %v2027
    %v2030 = vadd.f32 %v1990, %v2028
    %2031 = vrot.lane.b32.xlu0 %v275, 81
    %v2032 = vpop.permute.xlu0 %2031
    %2033 = vrot.lane.b32.xlu0 %v276, 81
    %v2034 = vpop.permute.xlu0 %2033
    %vm2035 = vcmp.lt.s32.totalorder %v282, 81
    %v2036 = vsel %vm2035, %v2032, %v2034
    %v2037 = vsel %vm2035, %v2034, %v2032
    %s2038 = sld [smem:[#allocation8 + $0x2c]]
    %s2039 = sld [smem:[#allocation8 + $0xac]]
    %v2040 = vstv %s2038
    %v2041 = vmul.f32 %v2040, %v2036
    %v2042 = vmul.f32 %v2040, %v2037
    %v2043 = vstv %s2039
    %v2044 = vmul.f32 %v2043, %v2036
    %v2045 = vmul.f32 %v2043, %v2037
    %v2048 = vrot.slane %v2044, 2
    %v2049 = vrot.slane %v2045, 2
    %v2052 = vadd.f32 %v2041, %v2048
    %v2053 = vadd.f32 %v2042, %v2049
    %s2054 = scalar_lea.vmem [#allocation6], 84
    %v2055 = vld [vmem:[%s2054] ss:$8 sm:$0x3]
    %v2057 = vlaneseq
    %v2058 = vshrl.u32 %v2057, 7
    %v2059 = vsub.s32 0, %v2058
    %v2060 = vrot.slane %v2055, %v2059
    %v2061 = vlaneseq
    %v2062 = vshrl.u32 %v2061, 7
    %v2063 = vsub.s32 1, %v2062
    %v2064 = vrot.slane %v2055, %v2063
    %v2067 = vmul.f32 %v2052, %v2060
    %v2068 = vmul.f32 %v2053, %v2064
    %v2069 = vadd.f32 %v2029, %v2067
    %v2070 = vadd.f32 %v2030, %v2068
    %2071 = vrot.lane.b32.xlu0 %v275, 80
    %v2072 = vpop.permute.xlu0 %2071
    %2073 = vrot.lane.b32.xlu0 %v276, 80
    %v2074 = vpop.permute.xlu0 %2073
    %vm2075 = vcmp.lt.s32.totalorder %v282, 80
    %v2076 = vsel %vm2075, %v2072, %v2074
    %v2077 = vsel %vm2075, %v2074, %v2072
    %s2078 = sld [smem:[#allocation8 + $0x2d]]
    %s2079 = sld [smem:[#allocation8 + $0xad]]
    %v2080 = vstv %s2078
    %v2081 = vmul.f32 %v2080, %v2076
    %v2082 = vmul.f32 %v2080, %v2077
    %v2083 = vstv %s2079
    %v2084 = vmul.f32 %v2083, %v2076
    %v2085 = vmul.f32 %v2083, %v2077
    %v2088 = vrot.slane %v2084, 2
    %v2089 = vrot.slane %v2085, 2
    %v2092 = vadd.f32 %v2081, %v2088
    %v2093 = vadd.f32 %v2082, %v2089
    %s2094 = scalar_lea.vmem [#allocation6], 85
    %v2095 = vld [vmem:[%s2094] ss:$8 sm:$0x3]
    %v2097 = vlaneseq
    %v2098 = vshrl.u32 %v2097, 7
    %v2099 = vsub.s32 0, %v2098
    %v2100 = vrot.slane %v2095, %v2099
    %v2101 = vlaneseq
    %v2102 = vshrl.u32 %v2101, 7
    %v2103 = vsub.s32 1, %v2102
    %v2104 = vrot.slane %v2095, %v2103
    %v2107 = vmul.f32 %v2092, %v2100
    %v2108 = vmul.f32 %v2093, %v2104
    %v2109 = vadd.f32 %v2069, %v2107
    %v2110 = vadd.f32 %v2070, %v2108
    %2111 = vrot.lane.b32.xlu0 %v275, 79
    %v2112 = vpop.permute.xlu0 %2111
    %2113 = vrot.lane.b32.xlu0 %v276, 79
    %v2114 = vpop.permute.xlu0 %2113
    %vm2115 = vcmp.lt.s32.totalorder %v282, 79
    %v2116 = vsel %vm2115, %v2112, %v2114
    %v2117 = vsel %vm2115, %v2114, %v2112
    %s2118 = sld [smem:[#allocation8 + $0x2e]]
    %s2119 = sld [smem:[#allocation8 + $0xae]]
    %v2120 = vstv %s2118
    %v2121 = vmul.f32 %v2120, %v2116
    %v2122 = vmul.f32 %v2120, %v2117
    %v2123 = vstv %s2119
    %v2124 = vmul.f32 %v2123, %v2116
    %v2125 = vmul.f32 %v2123, %v2117
    %v2128 = vrot.slane %v2124, 2
    %v2129 = vrot.slane %v2125, 2
    %v2132 = vadd.f32 %v2121, %v2128
    %v2133 = vadd.f32 %v2122, %v2129
    %s2134 = scalar_lea.vmem [#allocation6], 86
    %v2135 = vld [vmem:[%s2134] ss:$8 sm:$0x3]
    %v2137 = vlaneseq
    %v2138 = vshrl.u32 %v2137, 7
    %v2139 = vsub.s32 0, %v2138
    %v2140 = vrot.slane %v2135, %v2139
    %v2141 = vlaneseq
    %v2142 = vshrl.u32 %v2141, 7
    %v2143 = vsub.s32 1, %v2142
    %v2144 = vrot.slane %v2135, %v2143
    %v2147 = vmul.f32 %v2132, %v2140
    %v2148 = vmul.f32 %v2133, %v2144
    %v2149 = vadd.f32 %v2109, %v2147
    %v2150 = vadd.f32 %v2110, %v2148
    %2151 = vrot.lane.b32.xlu0 %v275, 78
    %v2152 = vpop.permute.xlu0 %2151
    %2153 = vrot.lane.b32.xlu0 %v276, 78
    %v2154 = vpop.permute.xlu0 %2153
    %vm2155 = vcmp.lt.s32.totalorder %v282, 78
    %v2156 = vsel %vm2155, %v2152, %v2154
    %v2157 = vsel %vm2155, %v2154, %v2152
    %s2158 = sld [smem:[#allocation8 + $0x2f]]
    %s2159 = sld [smem:[#allocation8 + $0xaf]]
    %v2160 = vstv %s2158
    %v2161 = vmul.f32 %v2160, %v2156
    %v2162 = vmul.f32 %v2160, %v2157
    %v2163 = vstv %s2159
    %v2164 = vmul.f32 %v2163, %v2156
    %v2165 = vmul.f32 %v2163, %v2157
    %v2168 = vrot.slane %v2164, 2
    %v2169 = vrot.slane %v2165, 2
    %v2172 = vadd.f32 %v2161, %v2168
    %v2173 = vadd.f32 %v2162, %v2169
    %s2174 = scalar_lea.vmem [#allocation6], 87
    %v2175 = vld [vmem:[%s2174] ss:$8 sm:$0x3]
    %v2177 = vlaneseq
    %v2178 = vshrl.u32 %v2177, 7
    %v2179 = vsub.s32 0, %v2178
    %v2180 = vrot.slane %v2175, %v2179
    %v2181 = vlaneseq
    %v2182 = vshrl.u32 %v2181, 7
    %v2183 = vsub.s32 1, %v2182
    %v2184 = vrot.slane %v2175, %v2183
    %v2187 = vmul.f32 %v2172, %v2180
    %v2188 = vmul.f32 %v2173, %v2184
    %v2189 = vadd.f32 %v2149, %v2187
    %v2190 = vadd.f32 %v2150, %v2188
    %2191 = vrot.lane.b32.xlu0 %v275, 77
    %v2192 = vpop.permute.xlu0 %2191
    %2193 = vrot.lane.b32.xlu0 %v276, 77
    %v2194 = vpop.permute.xlu0 %2193
    %vm2195 = vcmp.lt.s32.totalorder %v282, 77
    %v2196 = vsel %vm2195, %v2192, %v2194
    %v2197 = vsel %vm2195, %v2194, %v2192
    %s2198 = sld [smem:[#allocation8 + $0x30]]
    %s2199 = sld [smem:[#allocation8 + $0xb0]]
    %v2200 = vstv %s2198
    %v2201 = vmul.f32 %v2200, %v2196
    %v2202 = vmul.f32 %v2200, %v2197
    %v2203 = vstv %s2199
    %v2204 = vmul.f32 %v2203, %v2196
    %v2205 = vmul.f32 %v2203, %v2197
    %v2208 = vrot.slane %v2204, 2
    %v2209 = vrot.slane %v2205, 2
    %v2212 = vadd.f32 %v2201, %v2208
    %v2213 = vadd.f32 %v2202, %v2209
    %s2214 = scalar_lea.vmem [#allocation6], 96
    %v2215 = vld [vmem:[%s2214] ss:$8 sm:$0x3]
    %v2217 = vlaneseq
    %v2218 = vshrl.u32 %v2217, 7
    %v2219 = vsub.s32 0, %v2218
    %v2220 = vrot.slane %v2215, %v2219
    %v2221 = vlaneseq
    %v2222 = vshrl.u32 %v2221, 7
    %v2223 = vsub.s32 1, %v2222
    %v2224 = vrot.slane %v2215, %v2223
    %v2227 = vmul.f32 %v2212, %v2220
    %v2228 = vmul.f32 %v2213, %v2224
    %v2229 = vadd.f32 %v2189, %v2227
    %v2230 = vadd.f32 %v2190, %v2228
    %v2231 = vxor.u32 %v2229, 2147483648
    %v2232 = vxor.u32 %v2230, 2147483648
    %v2233 = vmul.f32 %v2231, 1.442695
    %v2234 = vpow.pop %v2233
    %v2235 = vmul.f32 %v2232, 1.442695
    %v2236 = vpow.pop %v2235
    %v2237 = vadd.f32 %v2234, 1.0
    %v2238 = vadd.f32 %v2236, 1.0
    %v2239 = vrcp.pop %v2237
    %v2240 = vmul.f32 1.0, %v2239
    %v2241 = vrcp.pop %v2238
    %v2242 = vmul.f32 1.0, %v2241
    %v2243 = vlaneseq
    %v2244 = vshrl.u32 %v2243, 7
    %v2245 = vsub.s32 0, %v2244
    %v2246 = vrot.slane %v2240, %v2245
    %v2247 = vlaneseq
    %v2248 = vshrl.u32 %v2247, 7
    %v2249 = vsub.s32 0, %v2248
    %v2250 = vrot.slane %v2242, %v2249
    %v2253 = vcombine.low %v2246, %v2250
    %v2255 = vmul.f32 %v188, %v2253
    %2256 = vst [vmem:[#allocation9] sm:$0xff] %v2255
    %v2257 = vlaneseq
    %v2258 = vshrl.u32 %v2257, 7
    %v2259 = vsub.s32 1, %v2258
    %v2260 = vrot.slane %v2240, %v2259
    %v2261 = vlaneseq
    %v2262 = vshrl.u32 %v2261, 7
    %v2263 = vsub.s32 1, %v2262
    %v2264 = vrot.slane %v2242, %v2263
    %v2267 = vcombine.low %v2260, %v2264
    %v2269 = vmul.f32 %v200, %v2267
    %s2270 = scalar_lea.vmem [#allocation9], 8
    %2271 = vst [vmem:[%s2270] sm:$0xff] %v2269
    // Predicated region
    $region34: #{tpu_custom_call.1} parent=1 // pred_check
      _
    $region35: #{tpu_custom_call.1} parent=1 // pred_check_branch
      %2273 = sbr.rel (0) target = $region37
    $region36: #{tpu_custom_call.1} parent=1 // pred_region
      %s2275 = ssub.s32 256, 256
      %2276 = vsyncadd [#allocation4], %s2275
      %s2277 = sshll.u32 [#allocation9], 4
      %s2278 = int_to_ptr.vmem [resolvable:$true] %s2277
      %2283 = dma.vmem_to_hbm [thread:$0]  %s2278, 256, %s5, [#allocation4], 128, 128, 8
    $region37: #{tpu_custom_call.1} parent=1 // pred_fallthru
      _
    // Predicated region
    $region38: #{tpu_custom_call.1} parent=1 // pred_check
      _
    $region39: #{tpu_custom_call.1} parent=1 // pred_check_branch
      %2285 = sbr.rel (0) target = $region41
    $region40: #{tpu_custom_call.1} parent=1 // pred_region
      %2286 = dma.done [#allocation4], 256
    $region41: #{tpu_custom_call.1} parent=1 // pred_fallthru
      _
    %2287 = vsyncpa [#allocation3], 1
    %2288 = vsyncpa [#allocation7], 1
    %2289 = vsyncpa [#allocation4], 1
    %2290 = vsyncpa [#allocation5], 1

</llo_original>
